<compile_context>
chip_gen: v7x
topology: tpu7x:2x2x1
jax: 0.10.0
libtpu: 0.0.40
codegen_flags: <defaults>
</compile_context>

<pallas_src>
import functools

import jax
import jax.numpy as jnp
from jax.experimental import pallas as pl
from jax.experimental.pallas import tpu as pltpu


# ---------------------------------------------------------------------------
# fused lin0 + message-passing stack:
#   grid = (n_jumps, n_tiles), both "arbitrary"
#   edge-net -> per-edge message (edges on lanes) -> scatter mean -> GRU -> LN
#   node state outᵀ / hᵀ and the scatter accumulator live in VMEM scratch
# ---------------------------------------------------------------------------

def mpnn_kernel(x0T_ref, w0T_ref, b0T_ref,
                srcoh_ref, dstoh_ref, eaT_ref, deginvT_ref,
                we1T_ref, be1T_ref, we2T_ref, be2T_ref,
                rootT_ref, convbT_ref,
                gwiT_ref, gwhT_ref, gbiT_ref, gbhT_ref,
                lngT_ref, lnbT_ref,
                outT_ref,
                outT_sc, hT_sc, accT_sc,
                *, dim, eps):
    j = pl.program_id(0)            # message-passing jump
    t = pl.program_id(1)            # edge tile
    n_jumps = pl.num_programs(0)
    n_tiles = pl.num_programs(1)

    # ---- very first grid step: lin0 + ReLU, init node / hidden state (dim, N) ----
    @pl.when((j == 0) & (t == 0))
    def _():
        x0 = jnp.dot(w0T_ref[...], x0T_ref[...],
                     preferred_element_type=jnp.float32) + b0T_ref[...]
        x0 = jnp.maximum(x0, 0.0)
        outT_sc[...] = x0
        hT_sc[...] = x0

    @pl.when(t == 0)
    def _():
        accT_sc[...] = jnp.zeros_like(accT_sc)

    # ---- edge network (edges on lanes): ReLU(W1ᵀ eaᵀ + b1ᵀ) -> W2ᵀ · + b2ᵀ ----
    ehT = jnp.dot(we1T_ref[...], eaT_ref[...],
                  preferred_element_type=jnp.float32) + be1T_ref[...]      # (128, TE)
    ehT = jnp.maximum(ehT, 0.0)
    ewT = jnp.dot(we2T_ref[...], ehT.astype(jnp.bfloat16),
                  preferred_element_type=jnp.float32) + be2T_ref[...]      # (dim*dim, TE)

    # ---- in-kernel gather of source-node features for this edge tile: (dim, TE) ----
    xsrcT = jnp.dot(outT_sc[...].astype(jnp.bfloat16), srcoh_ref[...],
                    preferred_element_type=jnp.float32)                    # (dim, TE)

    # ---- per-edge message, edges on lanes, 4 partial accumulators (tree add) ----
    # msgᵀ[o, e] = sum_d xsrcᵀ[d, e] * ewᵀ[d*dim + o, e]
    parts = [xsrcT[d:d + 1, :] * ewT[d * dim:(d + 1) * dim, :] for d in range(4)]
    for d in range(4, dim):
        parts[d % 4] = parts[d % 4] + xsrcT[d:d + 1, :] * ewT[d * dim:(d + 1) * dim, :]
    msgT = (parts[0] + parts[1]) + (parts[2] + parts[3])                   # (dim, TE)

    # ---- scatter-add into (dim, N) accumulator: contract TE against dst one-hot ----
    accT_sc[...] += jax.lax.dot_general(
        msgT.astype(jnp.bfloat16), dstoh_ref[...],
        (((1,), (1,)), ((), ())), preferred_element_type=jnp.float32)      # (dim, N)

    # ---- last edge tile of this jump: NNConv epilogue + fused GRU + LayerNorm ----
    @pl.when(t == n_tiles - 1)
    def _():
        xT = outT_sc[...]
        hT = hT_sc[...]
        aggT = accT_sc[...] * deginvT_ref[...]                             # mean aggregation
        mT = aggT + jnp.dot(rootT_ref[...], xT.astype(jnp.bfloat16),
                            preferred_element_type=jnp.float32) + convbT_ref[...]
        mT = jnp.maximum(mT, 0.0)                                          # ReLU(conv out)

        # GRU cell, gates stacked on sublanes [r | z | n] -> (3*dim, N)
        giT = jnp.dot(gwiT_ref[...], mT.astype(jnp.bfloat16),
                      preferred_element_type=jnp.float32) + gbiT_ref[...]
        ghT = jnp.dot(gwhT_ref[...], hT.astype(jnp.bfloat16),
                      preferred_element_type=jnp.float32) + ghT_bias(gbhT_ref)
        rzT = jax.nn.sigmoid(giT[0:2 * dim, :] + ghT[0:2 * dim, :])        # one-shot r|z
        rT = rzT[0:dim, :]
        zT = rzT[dim:2 * dim, :]
        nT = jnp.tanh(giT[2 * dim:3 * dim, :] + rT * ghT[2 * dim:3 * dim, :])
        h_newT = (1.0 - zT) * nT + zT * hT
        hT_sc[...] = h_newT

        # fused LayerNorm over the feature (sublane) axis
        mu = jnp.mean(h_newT, axis=0, keepdims=True)                       # (1, N)
        var = jnp.mean((h_newT - mu) ** 2, axis=0, keepdims=True)
        outT_sc[...] = ((h_newT - mu) * jax.lax.rsqrt(var + eps)
                        * lngT_ref[...] + lnbT_ref[...])

    @pl.when((j == n_jumps - 1) & (t == n_tiles - 1))
    def _():
        outT_ref[...] = outT_sc[...]


def ghT_bias(gbhT_ref):
    return gbhT_ref[...]


def make_mpnn_call(N, dim, n_node_feat, n_edge_feat, edge_tile, n_tiles, n_jumps):
    TE = edge_tile
    DD = dim * dim
    D3 = 3 * dim

    def full(shape):
        return pl.BlockSpec(shape, lambda j, t: (0, 0))

    def per_tile(rows):
        return pl.BlockSpec((rows, TE), lambda j, t: (0, t))

    in_specs = [
        full((n_node_feat, N)),                       # x0ᵀ
        full((dim, n_node_feat)), full((dim, 1)),     # lin0 Wᵀ, bᵀ
        per_tile(N),                                  # src one-hot tile (N, TE) bf16
        per_tile(N),                                  # dst one-hot tile (N, TE) bf16
        per_tile(n_edge_feat),                        # edge_attrᵀ tile (Fe, TE) bf16
        full((1, N)),                                 # 1 / in-degree (1, N)
        full((128, n_edge_feat)), full((128, 1)),     # edge-net layer 1 (transposed)
        full((DD, 128)), full((DD, 1)),               # edge-net layer 2 (transposed)
        full((dim, dim)), full((dim, 1)),             # NNConv rootᵀ, biasᵀ
        full((D3, dim)), full((D3, dim)),             # GRU W_iᵀ, W_hᵀ (gates on sublanes)
        full((D3, 1)), full((D3, 1)),                 # GRU b_iᵀ, b_hᵀ
        full((dim, 1)), full((dim, 1)),               # LayerNorm gammaᵀ, betaᵀ
    ]
    # TODO(synk): mark grid-invariant weight specs with pipeline_mode=pl.Buffered(1) if
    # VMEM headroom gets tight on v7x at larger N / edge_tile.
    # TODO(synk): on v7x, add a leading "parallel" node-split grid axis (per-core partial
    # accumulators + final reduce) to use both TensorCores for large graphs.
    return pl.pallas_call(
        functools.partial(mpnn_kernel, dim=dim, eps=1e-5),
        grid=(n_jumps, n_tiles),
        in_specs=in_specs,
        out_specs=full((dim, N)),
        out_shape=jax.ShapeDtypeStruct((dim, N), jnp.float32),
        scratch_shapes=[pltpu.VMEM((dim, N), jnp.float32),   # outᵀ state
                        pltpu.VMEM((dim, N), jnp.float32),   # hᵀ state
                        pltpu.VMEM((dim, N), jnp.float32)],  # scatter accumulator
        compiler_params=pltpu.CompilerParams(
            dimension_semantics=("arbitrary", "arbitrary"),
            vmem_limit_bytes=16 * 1024 * 1024),
    )


# ---------------------------------------------------------------------------
# Set2Set readout + graph-level features + MLP head, all in ONE pallas_call
#   grid = (set2set_steps,)  ("arbitrary": recurrence carried in VMEM scratch)
# ---------------------------------------------------------------------------

def set2set_head_kernel(xT_ref, bmask_ref, lwi_ref, lwh_ref, lb_ref,
                        gattr_ref, w1a_ref, w1b_ref, b1_ref, w2_ref, b2_ref,
                        y_ref, h_sc, c_sc, q_sc, *, dim):
    s = pl.program_id(0)

    @pl.when(s == 0)
    def _():
        h_sc[...] = jnp.zeros_like(h_sc)
        c_sc[...] = jnp.zeros_like(c_sc)
        q_sc[...] = jnp.zeros_like(q_sc)

    q_star = q_sc[...]
    h = h_sc[...]
    c = c_sc[...]

    # LSTM cell on q_star; gates concatenated [i | f | g | o]
    g = (jnp.dot(q_star.astype(jnp.bfloat16), lwi_ref[...],
                 preferred_element_type=jnp.float32)
         + jnp.dot(h.astype(jnp.bfloat16), lwh_ref[...],
                   preferred_element_type=jnp.float32)
         + lb_ref[...])
    i_f = jax.nn.sigmoid(g[:, 0:2 * dim])            # i|f in one 2*dim-wide sigmoid
    i = i_f[:, 0:dim]
    f = i_f[:, dim:2 * dim]
    gg = jnp.tanh(g[:, 2 * dim:3 * dim])
    o = jax.nn.sigmoid(g[:, 3 * dim:4 * dim])
    c_new = f * c + i * gg
    h_new = o * jnp.tanh(c_new)

    # segment-softmax attention + readout against xᵀ (dim, N)
    xT = xT_ref[...].astype(jnp.bfloat16)
    mask = bmask_ref[...]                                               # (B, N) in {0,1}
    scores = jnp.dot(h_new.astype(jnp.bfloat16), xT,
                     preferred_element_type=jnp.float32)                # (B, N)
    masked = jnp.where(mask > 0.0, scores, jnp.float32(-1e30))
    mmax = jnp.max(masked, axis=1, keepdims=True)
    ex = jnp.exp(masked - mmax) * mask
    denom = jnp.maximum(jnp.sum(ex, axis=1, keepdims=True), jnp.float32(1e-16))
    a = ex / denom
    r = jax.lax.dot_general(a.astype(jnp.bfloat16), xT,
                            (((1,), (1,)), ((), ())),
                            preferred_element_type=jnp.float32)         # (B, dim)

    h_sc[...] = h_new
    c_sc[...] = c_new
    q_sc[:, 0:dim] = h_new
    q_sc[:, dim:2 * dim] = r

    # last processing step: fused graph-feature "concat" (split matmul) + MLP head
    @pl.when(s == pl.num_programs(0) - 1)
    def _():
        q_new = q_sc[...]
        y1 = (jnp.dot(q_new.astype(jnp.bfloat16), w1a_ref[...],
                      preferred_element_type=jnp.float32)
              + jnp.dot(gattr_ref[...], w1b_ref[...],
                        preferred_element_type=jnp.float32)
              + b1_ref[...])
        y1 = jnp.maximum(y1, 0.0)
        y_ref[...] = (jnp.dot(y1.astype(jnp.bfloat16), w2_ref[...],
                              preferred_element_type=jnp.float32) + b2_ref[...])


def make_set2set_head_call(N, B, dim, n_graph_feat, steps):
    def full(shape):
        return pl.BlockSpec(shape, lambda s: (0, 0))

    return pl.pallas_call(
        functools.partial(set2set_head_kernel, dim=dim),
        grid=(steps,),
        in_specs=[full((dim, N)), full((B, N)),
                  full((2 * dim, 4 * dim)), full((dim, 4 * dim)), full((1, 4 * dim)),
                  full((B, n_graph_feat)),
                  full((2 * dim, dim)), full((n_graph_feat, dim)), full((1, dim)),
                  full((dim, 1)), full((1, 1))],
        out_specs=full((B, 1)),
        out_shape=jax.ShapeDtypeStruct((B, 1), jnp.float32),
        scratch_shapes=[pltpu.VMEM((B, dim), jnp.float32),
                        pltpu.VMEM((B, dim), jnp.float32),
                        pltpu.VMEM((B, 2 * dim), jnp.float32)],
        compiler_params=pltpu.CompilerParams(
            dimension_semantics=("arbitrary",)),
    )


# ---------------------------------------------------------------------------
# full forward pass
# ---------------------------------------------------------------------------

def gilmer_forward(params, x, edge_src, edge_dst, edge_attr, batch, graph_attr,
                   *, n_graphs, dim, n_atom_jumps, set2set_steps, edge_tile=256):
    N, Fn = x.shape
    E = edge_src.shape[0]
    Fe = edge_attr.shape[1]
    B = n_graphs
    gattr = graph_attr.reshape(B, -1)
    Fg = gattr.shape[1]
    E_pad = ((E + edge_tile - 1) // edge_tile) * edge_tile
    n_tiles = E_pad // edge_tile
    pad_e = E_pad - E

    # ---- graph-structure glue (built once, bf16, (N, E) orientation directly) ----
    # TODO(synk): for very large graphs replace the bf16 one-hot gather/scatter matrices
    # with a scalar-prefetched index gather/scatter (PrefetchScalarGridSpec) to avoid
    # O(N*E) one-hot traffic.
    node_ids = jnp.arange(N, dtype=jnp.int32)
    src_oh = (node_ids[:, None] == edge_src[None, :]).astype(jnp.bfloat16)   # (N, E)
    dst_oh = (node_ids[:, None] == edge_dst[None, :]).astype(jnp.bfloat16)   # (N, E)
    deg = jnp.bincount(edge_dst, length=N).astype(jnp.float32)
    deg_invT = jnp.where(deg > 0, 1.0 / jnp.maximum(deg, 1.0), 0.0)[None, :]  # (1, N)
    # padded edge columns are all-zero: they gather the zero vector and scatter nowhere
    src_oh = jnp.pad(src_oh, ((0, 0), (0, pad_e)))
    dst_oh = jnp.pad(dst_oh, ((0, 0), (0, pad_e)))
    eaT = jnp.pad(edge_attr.T, ((0, 0), (0, pad_e))).astype(jnp.bfloat16)    # (Fe, E_pad)
    x0T = x.T.astype(jnp.bfloat16)                                           # (Fn, N)
    batch_mask = (jnp.arange(B, dtype=jnp.int32)[:, None]
                  == batch[None, :]).astype(jnp.float32)                     # (B, N)

    # ---- lin0 + all message-passing jumps: one fused pallas_call ----
    outT = make_mpnn_call(N, dim, Fn, Fe, edge_tile, n_tiles, n_atom_jumps)(
        x0T, params['w0T'], params['b0T'],
        src_oh, dst_oh, eaT, deg_invT,
        params['we1T'], params['be1T'], params['we2T'], params['be2T'],
        params['rootT'], params['convbT'],
        params['gwiT'], params['gwhT'], params['gbiT'], params['gbhT'],
        params['lngT'], params['lnbT'])

    # ---- Set2Set readout + graph features + MLP head: one fused pallas_call ----
    y = make_set2set_head_call(N, B, dim, Fg, set2set_steps)(
        outT, batch_mask,
        params['lstm_wi'], params['lstm_wh'], params['lstm_b'],
        gattr.astype(jnp.bfloat16),
        params['w1a'], params['w1b'], params['b1'], params['w2'], params['b2'])
    return y.reshape(-1)


# ---------------------------------------------------------------------------
# params + main
# ---------------------------------------------------------------------------

def make_params(key, n_node_features, n_edge_features, n_graph_features, dim):
    ks = iter(jax.random.split(key, 32))
    bf = jnp.bfloat16

    def rnd(shape, scale=0.1, dtype=jnp.float32):
        return (scale * jax.random.normal(next(ks), shape, dtype=jnp.float32)).astype(dtype)

    return {
        # lin0, stored transposed: (dim, Fn) @ xᵀ
        'w0T': rnd((dim, n_node_features), dtype=bf), 'b0T': rnd((dim, 1)),
        # edge network: Linear(Fe,128) -> ReLU -> Linear(128, dim*dim), transposed
        'we1T': rnd((128, n_edge_features), dtype=bf), 'be1T': rnd((128, 1)),
        'we2T': rnd((dim * dim, 128), scale=0.02, dtype=bf),
        'be2T': rnd((dim * dim, 1), scale=0.02),
        # NNConv root weight + bias (transposed)
        'rootT': rnd((dim, dim), dtype=bf), 'convbT': rnd((dim, 1)),
        # GRU (gates stacked [r | z | n] on rows, acting on (dim, N) state)
        'gwiT': rnd((3 * dim, dim), dtype=bf), 'gwhT': rnd((3 * dim, dim), dtype=bf),
        'gbiT': rnd((3 * dim, 1)), 'gbhT': rnd((3 * dim, 1)),
        # LayerNorm
        'lngT': jnp.ones((dim, 1), jnp.float32), 'lnbT': jnp.zeros((dim, 1), jnp.float32),
        # Set2Set LSTM (gates concatenated [i | f | g | o]; b = b_ih + b_hh)
        'lstm_wi': rnd((2 * dim, 4 * dim), dtype=bf), 'lstm_wh': rnd((dim, 4 * dim), dtype=bf),
        'lstm_b': rnd((1, 4 * dim)),
        # MLP head: lin1 split into the q_star part and the graph-feature part
        'w1a': rnd((2 * dim, dim), dtype=bf), 'w1b': rnd((n_graph_features, dim), dtype=bf),
        'b1': rnd((1, dim)),
        'w2': rnd((dim, 1), dtype=bf), 'b2': rnd((1, 1)),
    }


if __name__ == "__main__":
    n_node_features = 6
    n_edge_features = 4
    n_graph_features = 3
    dim = 32
    n_atom_jumps = 3
    set2set_steps = 3
    edge_tile = 256          # demo E_pad = 256 -> whole edge loop is one grid step/jump

    n_graphs = 3
    nodes_per_graph = 16
    N = n_graphs * nodes_per_graph            # 48 nodes
    edges_per_graph = 60
    E = n_graphs * edges_per_graph            # 180 edges -> padded to 256

    key = jax.random.PRNGKey(0)
    k_x, k_ea, k_ga, k_src, k_dst, k_params = jax.random.split(key, 6)

    x = jax.random.normal(k_x, (N, n_node_features), dtype=jnp.float32)
    edge_attr = jax.random.normal(k_ea, (E, n_edge_features), dtype=jnp.float32)
    graph_attr = jax.random.normal(k_ga, (n_graphs, n_graph_features), dtype=jnp.float32)

    # edges stay within each graph's node block
    local_src = jax.random.randint(k_src, (n_graphs, edges_per_graph), 0, nodes_per_graph)
    local_dst = jax.random.randint(k_dst, (n_graphs, edges_per_graph), 0, nodes_per_graph)
    offsets = (jnp.arange(n_graphs) * nodes_per_graph)[:, None]
    edge_src = (local_src + offsets).reshape(-1).astype(jnp.int32)
    edge_dst = (local_dst + offsets).reshape(-1).astype(jnp.int32)
    batch = jnp.repeat(jnp.arange(n_graphs, dtype=jnp.int32), nodes_per_graph)

    params = make_params(k_params, n_node_features, n_edge_features,
                         n_graph_features, dim)

    fwd = jax.jit(functools.partial(
        gilmer_forward, n_graphs=n_graphs, dim=dim,
        n_atom_jumps=n_atom_jumps, set2set_steps=set2set_steps,
        edge_tile=edge_tile))
    out = fwd(params, x, edge_src, edge_dst, edge_attr, batch, graph_attr)
    out = jax.block_until_ready(out)
    assert out.shape == (n_graphs,)
    assert bool(jnp.all(jnp.isfinite(out)))
    print("KERNEL_OK")
</pallas_src>

<mosaic_0001>
module attributes {stable_mosaic.version = 11 : i64} {
  func.func @mpnn_kernel(%arg0: i32, %arg1: i32, %arg2: memref<6x48xbf16, #tpu.memory_space<vmem>>, %arg3: memref<32x6xbf16, #tpu.memory_space<vmem>>, %arg4: memref<32x1xf32, #tpu.memory_space<vmem>>, %arg5: memref<48x256xbf16, #tpu.memory_space<vmem>>, %arg6: memref<48x256xbf16, #tpu.memory_space<vmem>>, %arg7: memref<4x256xbf16, #tpu.memory_space<vmem>>, %arg8: memref<1x48xf32, #tpu.memory_space<vmem>>, %arg9: memref<128x4xbf16, #tpu.memory_space<vmem>>, %arg10: memref<128x1xf32, #tpu.memory_space<vmem>>, %arg11: memref<1024x128xbf16, #tpu.memory_space<vmem>>, %arg12: memref<1024x1xf32, #tpu.memory_space<vmem>>, %arg13: memref<32x32xbf16, #tpu.memory_space<vmem>>, %arg14: memref<32x1xf32, #tpu.memory_space<vmem>>, %arg15: memref<96x32xbf16, #tpu.memory_space<vmem>>, %arg16: memref<96x32xbf16, #tpu.memory_space<vmem>>, %arg17: memref<96x1xf32, #tpu.memory_space<vmem>>, %arg18: memref<96x1xf32, #tpu.memory_space<vmem>>, %arg19: memref<32x1xf32, #tpu.memory_space<vmem>>, %arg20: memref<32x1xf32, #tpu.memory_space<vmem>>, %arg21: memref<32x48xf32, #tpu.memory_space<vmem>>, %arg22: memref<32x48xf32, #tpu.memory_space<vmem>>, %arg23: memref<32x48xf32, #tpu.memory_space<vmem>>, %arg24: memref<32x48xf32, #tpu.memory_space<vmem>>) attributes {dimension_semantics = [#tpu.dimension_semantics<arbitrary>, #tpu.dimension_semantics<arbitrary>], iteration_bounds = array<i64: 3, 1>, scalar_prefetch = 0 : i64, scratch_operands = 3 : i64, tpu.core_type = #tpu.core_type<tc>, window_params = [{pipeline_mode = #tpu.pipeline_mode<synchronous>, transform_indices = @transform_0, window_bounds = array<i64: 6, 48>}, {pipeline_mode = #tpu.pipeline_mode<synchronous>, transform_indices = @transform_1, window_bounds = array<i64: 32, 6>}, {pipeline_mode = #tpu.pipeline_mode<synchronous>, transform_indices = @transform_2, window_bounds = array<i64: 32, 1>}, {transform_indices = @transform_3, window_bounds = array<i64: 48, 256>}, {transform_indices = @transform_4, window_bounds = array<i64: 48, 256>}, {transform_indices = @transform_5, window_bounds = array<i64: 4, 256>}, {pipeline_mode = #tpu.pipeline_mode<synchronous>, transform_indices = @transform_6, window_bounds = array<i64: 1, 48>}, {pipeline_mode = #tpu.pipeline_mode<synchronous>, transform_indices = @transform_7, window_bounds = array<i64: 128, 4>}, {pipeline_mode = #tpu.pipeline_mode<synchronous>, transform_indices = @transform_8, window_bounds = array<i64: 128, 1>}, {pipeline_mode = #tpu.pipeline_mode<synchronous>, transform_indices = @transform_9, window_bounds = array<i64: 1024, 128>}, {pipeline_mode = #tpu.pipeline_mode<synchronous>, transform_indices = @transform_10, window_bounds = array<i64: 1024, 1>}, {pipeline_mode = #tpu.pipeline_mode<synchronous>, transform_indices = @transform_11, window_bounds = array<i64: 32, 32>}, {pipeline_mode = #tpu.pipeline_mode<synchronous>, transform_indices = @transform_12, window_bounds = array<i64: 32, 1>}, {pipeline_mode = #tpu.pipeline_mode<synchronous>, transform_indices = @transform_13, window_bounds = array<i64: 96, 32>}, {pipeline_mode = #tpu.pipeline_mode<synchronous>, transform_indices = @transform_14, window_bounds = array<i64: 96, 32>}, {pipeline_mode = #tpu.pipeline_mode<synchronous>, transform_indices = @transform_15, window_bounds = array<i64: 96, 1>}, {pipeline_mode = #tpu.pipeline_mode<synchronous>, transform_indices = @transform_16, window_bounds = array<i64: 96, 1>}, {pipeline_mode = #tpu.pipeline_mode<synchronous>, transform_indices = @transform_17, window_bounds = array<i64: 32, 1>}, {pipeline_mode = #tpu.pipeline_mode<synchronous>, transform_indices = @transform_18, window_bounds = array<i64: 32, 1>}, {pipeline_mode = #tpu.pipeline_mode<synchronous>, transform_indices = @transform_19, window_bounds = array<i64: 32, 48>}]} {
    %c0_i32 = arith.constant 0 : i32
    %0 = arith.cmpi eq, %arg0, %c0_i32 : i32
    %c0_i32_0 = arith.constant 0 : i32
    %1 = arith.cmpi eq, %arg1, %c0_i32_0 : i32
    %2 = arith.andi %0, %1 : i1
    %3 = arith.extui %2 : i1 to i32
    %c0_i32_1 = arith.constant 0 : i32
    %4 = arith.cmpi ne, %3, %c0_i32_1 : i32
    scf.if %4 {
      %c0_31 = arith.constant 0 : index
      %c0_32 = arith.constant 0 : index
      %199 = vector.load %arg3[%c0_31, %c0_32] : memref<32x6xbf16, #tpu.memory_space<vmem>>, vector<32x6xbf16>
      %c0_33 = arith.constant 0 : index
      %c0_34 = arith.constant 0 : index
      %200 = vector.load %arg2[%c0_33, %c0_34] : memref<6x48xbf16, #tpu.memory_space<vmem>>, vector<6x48xbf16>
      %cst_35 = arith.constant dense<0.000000e+00> : vector<32x48xf32>
      %201 = tpu.matmul %199, %200, %cst_35 {dimension_numbers = #tpu.dot_dimension_numbers<[1], [0], [0], [1], [0, 0, 1, 1], [], []>} : vector<32x6xbf16>, vector<6x48xbf16>, vector<32x48xf32> -> vector<32x48xf32>
      %c0_36 = arith.constant 0 : index
      %c0_37 = arith.constant 0 : index
      %202 = vector.load %arg4[%c0_36, %c0_37] : memref<32x1xf32, #tpu.memory_space<vmem>>, vector<32x1xf32>
      %203 = vector.broadcast %202 : vector<32x1xf32> to vector<32x48xf32>
      %204 = arith.addf %201, %203 : vector<32x48xf32>
      %cst_38 = arith.constant 0.000000e+00 : f32
      %205 = vector.broadcast %cst_38 : f32 to vector<32x48xf32>
      %206 = arith.maximumf %204, %205 : vector<32x48xf32>
      %c0_39 = arith.constant 0 : index
      %c0_40 = arith.constant 0 : index
      %207 = vector.load %arg22[%c0_39, %c0_40] : memref<32x48xf32, #tpu.memory_space<vmem>>, vector<32x48xf32>
      tpu.vector_store %arg22[%c0_39, %c0_40], %206 {strides = array<i32>} : memref<32x48xf32, #tpu.memory_space<vmem>>, vector<32x48xf32>,
      %c0_41 = arith.constant 0 : index
      %c0_42 = arith.constant 0 : index
      %208 = vector.load %arg23[%c0_41, %c0_42] : memref<32x48xf32, #tpu.memory_space<vmem>>, vector<32x48xf32>
      tpu.vector_store %arg23[%c0_41, %c0_42], %206 {strides = array<i32>} : memref<32x48xf32, #tpu.memory_space<vmem>>, vector<32x48xf32>,
    } else {
    }
    %c0_i32_2 = arith.constant 0 : i32
    %5 = arith.cmpi eq, %arg1, %c0_i32_2 : i32
    %6 = arith.extui %5 : i1 to i32
    %c0_i32_3 = arith.constant 0 : i32
    %7 = arith.cmpi ne, %6, %c0_i32_3 : i32
    scf.if %7 {
      %cst_31 = arith.constant 0.000000e+00 : f32
      %199 = vector.broadcast %cst_31 : f32 to vector<32x48xf32>
      %c0_32 = arith.constant 0 : index
      %c0_33 = arith.constant 0 : index
      %200 = vector.load %arg24[%c0_32, %c0_33] : memref<32x48xf32, #tpu.memory_space<vmem>>, vector<32x48xf32>
      tpu.vector_store %arg24[%c0_32, %c0_33], %199 {strides = array<i32>} : memref<32x48xf32, #tpu.memory_space<vmem>>, vector<32x48xf32>,
    } else {
    }
    %c0 = arith.constant 0 : index
    %c0_4 = arith.constant 0 : index
    %8 = vector.load %arg9[%c0, %c0_4] : memref<128x4xbf16, #tpu.memory_space<vmem>>, vector<128x4xbf16>
    %c0_5 = arith.constant 0 : index
    %c0_6 = arith.constant 0 : index
    %9 = vector.load %arg7[%c0_5, %c0_6] : memref<4x256xbf16, #tpu.memory_space<vmem>>, vector<4x256xbf16>
    %cst = arith.constant dense<0.000000e+00> : vector<128x256xf32>
    %10 = tpu.matmul %8, %9, %cst {dimension_numbers = #tpu.dot_dimension_numbers<[1], [0], [0], [1], [0, 0, 1, 1], [], []>} : vector<128x4xbf16>, vector<4x256xbf16>, vector<128x256xf32> -> vector<128x256xf32>
    %c0_7 = arith.constant 0 : index
    %c0_8 = arith.constant 0 : index
    %11 = vector.load %arg10[%c0_7, %c0_8] : memref<128x1xf32, #tpu.memory_space<vmem>>, vector<128x1xf32>
    %12 = vector.broadcast %11 : vector<128x1xf32> to vector<128x256xf32>
    %13 = arith.addf %10, %12 : vector<128x256xf32>
    %cst_9 = arith.constant 0.000000e+00 : f32
    %14 = vector.broadcast %cst_9 : f32 to vector<128x256xf32>
    %15 = arith.maximumf %13, %14 : vector<128x256xf32>
    %c0_10 = arith.constant 0 : index
    %c0_11 = arith.constant 0 : index
    %16 = vector.load %arg11[%c0_10, %c0_11] : memref<1024x128xbf16, #tpu.memory_space<vmem>>, vector<1024x128xbf16>
    %17 = arith.truncf %15 : vector<128x256xf32> to vector<128x256xbf16>
    %cst_12 = arith.constant dense<0.000000e+00> : vector<1024x256xf32>
    %18 = tpu.matmul %16, %17, %cst_12 {dimension_numbers = #tpu.dot_dimension_numbers<[1], [0], [0], [1], [0, 0, 1, 1], [], []>} : vector<1024x128xbf16>, vector<128x256xbf16>, vector<1024x256xf32> -> vector<1024x256xf32>
    %c0_13 = arith.constant 0 : index
    %c0_14 = arith.constant 0 : index
    %19 = vector.load %arg12[%c0_13, %c0_14] : memref<1024x1xf32, #tpu.memory_space<vmem>>, vector<1024x1xf32>
    %20 = vector.broadcast %19 : vector<1024x1xf32> to vector<1024x256xf32>
    %21 = arith.addf %18, %20 : vector<1024x256xf32>
    %c0_15 = arith.constant 0 : index
    %c0_16 = arith.constant 0 : index
    %22 = vector.load %arg22[%c0_15, %c0_16] : memref<32x48xf32, #tpu.memory_space<vmem>>, vector<32x48xf32>
    %23 = arith.truncf %22 : vector<32x48xf32> to vector<32x48xbf16>
    %c0_17 = arith.constant 0 : index
    %c0_18 = arith.constant 0 : index
    %24 = vector.load %arg5[%c0_17, %c0_18] : memref<48x256xbf16, #tpu.memory_space<vmem>>, vector<48x256xbf16>
    %cst_19 = arith.constant dense<0.000000e+00> : vector<32x256xf32>
    %25 = tpu.matmul %23, %24, %cst_19 {dimension_numbers = #tpu.dot_dimension_numbers<[1], [0], [0], [1], [0, 0, 1, 1], [], []>} : vector<32x48xbf16>, vector<48x256xbf16>, vector<32x256xf32> -> vector<32x256xf32>
    %26 = vector.extract_strided_slice %25 {offsets = [0, 0], sizes = [1, 256], strides = [1, 1]} : vector<32x256xf32> to vector<1x256xf32>
    %27 = vector.extract_strided_slice %21 {offsets = [0, 0], sizes = [32, 256], strides = [1, 1]} : vector<1024x256xf32> to vector<32x256xf32>
    %28 = vector.broadcast %26 : vector<1x256xf32> to vector<32x256xf32>
    %29 = arith.mulf %28, %27 : vector<32x256xf32>
    %30 = vector.extract_strided_slice %25 {offsets = [1, 0], sizes = [1, 256], strides = [1, 1]} : vector<32x256xf32> to vector<1x256xf32>
    %31 = vector.extract_strided_slice %21 {offsets = [32, 0], sizes = [32, 256], strides = [1, 1]} : vector<1024x256xf32> to vector<32x256xf32>
    %32 = vector.broadcast %30 : vector<1x256xf32> to vector<32x256xf32>
    %33 = arith.mulf %32, %31 : vector<32x256xf32>
    %34 = vector.extract_strided_slice %25 {offsets = [2, 0], sizes = [1, 256], strides = [1, 1]} : vector<32x256xf32> to vector<1x256xf32>
    %35 = vector.extract_strided_slice %21 {offsets = [64, 0], sizes = [32, 256], strides = [1, 1]} : vector<1024x256xf32> to vector<32x256xf32>
    %36 = vector.broadcast %34 : vector<1x256xf32> to vector<32x256xf32>
    %37 = arith.mulf %36, %35 : vector<32x256xf32>
    %38 = vector.extract_strided_slice %25 {offsets = [3, 0], sizes = [1, 256], strides = [1, 1]} : vector<32x256xf32> to vector<1x256xf32>
    %39 = vector.extract_strided_slice %21 {offsets = [96, 0], sizes = [32, 256], strides = [1, 1]} : vector<1024x256xf32> to vector<32x256xf32>
    %40 = vector.broadcast %38 : vector<1x256xf32> to vector<32x256xf32>
    %41 = arith.mulf %40, %39 : vector<32x256xf32>
    %42 = vector.extract_strided_slice %25 {offsets = [4, 0], sizes = [1, 256], strides = [1, 1]} : vector<32x256xf32> to vector<1x256xf32>
    %43 = vector.extract_strided_slice %21 {offsets = [128, 0], sizes = [32, 256], strides = [1, 1]} : vector<1024x256xf32> to vector<32x256xf32>
    %44 = vector.broadcast %42 : vector<1x256xf32> to vector<32x256xf32>
    %45 = arith.mulf %44, %43 : vector<32x256xf32>
    %46 = arith.addf %29, %45 : vector<32x256xf32>
    %47 = vector.extract_strided_slice %25 {offsets = [5, 0], sizes = [1, 256], strides = [1, 1]} : vector<32x256xf32> to vector<1x256xf32>
    %48 = vector.extract_strided_slice %21 {offsets = [160, 0], sizes = [32, 256], strides = [1, 1]} : vector<1024x256xf32> to vector<32x256xf32>
    %49 = vector.broadcast %47 : vector<1x256xf32> to vector<32x256xf32>
    %50 = arith.mulf %49, %48 : vector<32x256xf32>
    %51 = arith.addf %33, %50 : vector<32x256xf32>
    %52 = vector.extract_strided_slice %25 {offsets = [6, 0], sizes = [1, 256], strides = [1, 1]} : vector<32x256xf32> to vector<1x256xf32>
    %53 = vector.extract_strided_slice %21 {offsets = [192, 0], sizes = [32, 256], strides = [1, 1]} : vector<1024x256xf32> to vector<32x256xf32>
    %54 = vector.broadcast %52 : vector<1x256xf32> to vector<32x256xf32>
    %55 = arith.mulf %54, %53 : vector<32x256xf32>
    %56 = arith.addf %37, %55 : vector<32x256xf32>
    %57 = vector.extract_strided_slice %25 {offsets = [7, 0], sizes = [1, 256], strides = [1, 1]} : vector<32x256xf32> to vector<1x256xf32>
    %58 = vector.extract_strided_slice %21 {offsets = [224, 0], sizes = [32, 256], strides = [1, 1]} : vector<1024x256xf32> to vector<32x256xf32>
    %59 = vector.broadcast %57 : vector<1x256xf32> to vector<32x256xf32>
    %60 = arith.mulf %59, %58 : vector<32x256xf32>
    %61 = arith.addf %41, %60 : vector<32x256xf32>
    %62 = vector.extract_strided_slice %25 {offsets = [8, 0], sizes = [1, 256], strides = [1, 1]} : vector<32x256xf32> to vector<1x256xf32>
    %63 = vector.extract_strided_slice %21 {offsets = [256, 0], sizes = [32, 256], strides = [1, 1]} : vector<1024x256xf32> to vector<32x256xf32>
    %64 = vector.broadcast %62 : vector<1x256xf32> to vector<32x256xf32>
    %65 = arith.mulf %64, %63 : vector<32x256xf32>
    %66 = arith.addf %46, %65 : vector<32x256xf32>
    %67 = vector.extract_strided_slice %25 {offsets = [9, 0], sizes = [1, 256], strides = [1, 1]} : vector<32x256xf32> to vector<1x256xf32>
    %68 = vector.extract_strided_slice %21 {offsets = [288, 0], sizes = [32, 256], strides = [1, 1]} : vector<1024x256xf32> to vector<32x256xf32>
    %69 = vector.broadcast %67 : vector<1x256xf32> to vector<32x256xf32>
    %70 = arith.mulf %69, %68 : vector<32x256xf32>
    %71 = arith.addf %51, %70 : vector<32x256xf32>
    %72 = vector.extract_strided_slice %25 {offsets = [10, 0], sizes = [1, 256], strides = [1, 1]} : vector<32x256xf32> to vector<1x256xf32>
    %73 = vector.extract_strided_slice %21 {offsets = [320, 0], sizes = [32, 256], strides = [1, 1]} : vector<1024x256xf32> to vector<32x256xf32>
    %74 = vector.broadcast %72 : vector<1x256xf32> to vector<32x256xf32>
    %75 = arith.mulf %74, %73 : vector<32x256xf32>
    %76 = arith.addf %56, %75 : vector<32x256xf32>
    %77 = vector.extract_strided_slice %25 {offsets = [11, 0], sizes = [1, 256], strides = [1, 1]} : vector<32x256xf32> to vector<1x256xf32>
    %78 = vector.extract_strided_slice %21 {offsets = [352, 0], sizes = [32, 256], strides = [1, 1]} : vector<1024x256xf32> to vector<32x256xf32>
    %79 = vector.broadcast %77 : vector<1x256xf32> to vector<32x256xf32>
    %80 = arith.mulf %79, %78 : vector<32x256xf32>
    %81 = arith.addf %61, %80 : vector<32x256xf32>
    %82 = vector.extract_strided_slice %25 {offsets = [12, 0], sizes = [1, 256], strides = [1, 1]} : vector<32x256xf32> to vector<1x256xf32>
    %83 = vector.extract_strided_slice %21 {offsets = [384, 0], sizes = [32, 256], strides = [1, 1]} : vector<1024x256xf32> to vector<32x256xf32>
    %84 = vector.broadcast %82 : vector<1x256xf32> to vector<32x256xf32>
    %85 = arith.mulf %84, %83 : vector<32x256xf32>
    %86 = arith.addf %66, %85 : vector<32x256xf32>
    %87 = vector.extract_strided_slice %25 {offsets = [13, 0], sizes = [1, 256], strides = [1, 1]} : vector<32x256xf32> to vector<1x256xf32>
    %88 = vector.extract_strided_slice %21 {offsets = [416, 0], sizes = [32, 256], strides = [1, 1]} : vector<1024x256xf32> to vector<32x256xf32>
    %89 = vector.broadcast %87 : vector<1x256xf32> to vector<32x256xf32>
    %90 = arith.mulf %89, %88 : vector<32x256xf32>
    %91 = arith.addf %71, %90 : vector<32x256xf32>
    %92 = vector.extract_strided_slice %25 {offsets = [14, 0], sizes = [1, 256], strides = [1, 1]} : vector<32x256xf32> to vector<1x256xf32>
    %93 = vector.extract_strided_slice %21 {offsets = [448, 0], sizes = [32, 256], strides = [1, 1]} : vector<1024x256xf32> to vector<32x256xf32>
    %94 = vector.broadcast %92 : vector<1x256xf32> to vector<32x256xf32>
    %95 = arith.mulf %94, %93 : vector<32x256xf32>
    %96 = arith.addf %76, %95 : vector<32x256xf32>
    %97 = vector.extract_strided_slice %25 {offsets = [15, 0], sizes = [1, 256], strides = [1, 1]} : vector<32x256xf32> to vector<1x256xf32>
    %98 = vector.extract_strided_slice %21 {offsets = [480, 0], sizes = [32, 256], strides = [1, 1]} : vector<1024x256xf32> to vector<32x256xf32>
    %99 = vector.broadcast %97 : vector<1x256xf32> to vector<32x256xf32>
    %100 = arith.mulf %99, %98 : vector<32x256xf32>
    %101 = arith.addf %81, %100 : vector<32x256xf32>
    %102 = vector.extract_strided_slice %25 {offsets = [16, 0], sizes = [1, 256], strides = [1, 1]} : vector<32x256xf32> to vector<1x256xf32>
    %103 = vector.extract_strided_slice %21 {offsets = [512, 0], sizes = [32, 256], strides = [1, 1]} : vector<1024x256xf32> to vector<32x256xf32>
    %104 = vector.broadcast %102 : vector<1x256xf32> to vector<32x256xf32>
    %105 = arith.mulf %104, %103 : vector<32x256xf32>
    %106 = arith.addf %86, %105 : vector<32x256xf32>
    %107 = vector.extract_strided_slice %25 {offsets = [17, 0], sizes = [1, 256], strides = [1, 1]} : vector<32x256xf32> to vector<1x256xf32>
    %108 = vector.extract_strided_slice %21 {offsets = [544, 0], sizes = [32, 256], strides = [1, 1]} : vector<1024x256xf32> to vector<32x256xf32>
    %109 = vector.broadcast %107 : vector<1x256xf32> to vector<32x256xf32>
    %110 = arith.mulf %109, %108 : vector<32x256xf32>
    %111 = arith.addf %91, %110 : vector<32x256xf32>
    %112 = vector.extract_strided_slice %25 {offsets = [18, 0], sizes = [1, 256], strides = [1, 1]} : vector<32x256xf32> to vector<1x256xf32>
    %113 = vector.extract_strided_slice %21 {offsets = [576, 0], sizes = [32, 256], strides = [1, 1]} : vector<1024x256xf32> to vector<32x256xf32>
    %114 = vector.broadcast %112 : vector<1x256xf32> to vector<32x256xf32>
    %115 = arith.mulf %114, %113 : vector<32x256xf32>
    %116 = arith.addf %96, %115 : vector<32x256xf32>
    %117 = vector.extract_strided_slice %25 {offsets = [19, 0], sizes = [1, 256], strides = [1, 1]} : vector<32x256xf32> to vector<1x256xf32>
    %118 = vector.extract_strided_slice %21 {offsets = [608, 0], sizes = [32, 256], strides = [1, 1]} : vector<1024x256xf32> to vector<32x256xf32>
    %119 = vector.broadcast %117 : vector<1x256xf32> to vector<32x256xf32>
    %120 = arith.mulf %119, %118 : vector<32x256xf32>
    %121 = arith.addf %101, %120 : vector<32x256xf32>
    %122 = vector.extract_strided_slice %25 {offsets = [20, 0], sizes = [1, 256], strides = [1, 1]} : vector<32x256xf32> to vector<1x256xf32>
    %123 = vector.extract_strided_slice %21 {offsets = [640, 0], sizes = [32, 256], strides = [1, 1]} : vector<1024x256xf32> to vector<32x256xf32>
    %124 = vector.broadcast %122 : vector<1x256xf32> to vector<32x256xf32>
    %125 = arith.mulf %124, %123 : vector<32x256xf32>
    %126 = arith.addf %106, %125 : vector<32x256xf32>
    %127 = vector.extract_strided_slice %25 {offsets = [21, 0], sizes = [1, 256], strides = [1, 1]} : vector<32x256xf32> to vector<1x256xf32>
    %128 = vector.extract_strided_slice %21 {offsets = [672, 0], sizes = [32, 256], strides = [1, 1]} : vector<1024x256xf32> to vector<32x256xf32>
    %129 = vector.broadcast %127 : vector<1x256xf32> to vector<32x256xf32>
    %130 = arith.mulf %129, %128 : vector<32x256xf32>
    %131 = arith.addf %111, %130 : vector<32x256xf32>
    %132 = vector.extract_strided_slice %25 {offsets = [22, 0], sizes = [1, 256], strides = [1, 1]} : vector<32x256xf32> to vector<1x256xf32>
    %133 = vector.extract_strided_slice %21 {offsets = [704, 0], sizes = [32, 256], strides = [1, 1]} : vector<1024x256xf32> to vector<32x256xf32>
    %134 = vector.broadcast %132 : vector<1x256xf32> to vector<32x256xf32>
    %135 = arith.mulf %134, %133 : vector<32x256xf32>
    %136 = arith.addf %116, %135 : vector<32x256xf32>
    %137 = vector.extract_strided_slice %25 {offsets = [23, 0], sizes = [1, 256], strides = [1, 1]} : vector<32x256xf32> to vector<1x256xf32>
    %138 = vector.extract_strided_slice %21 {offsets = [736, 0], sizes = [32, 256], strides = [1, 1]} : vector<1024x256xf32> to vector<32x256xf32>
    %139 = vector.broadcast %137 : vector<1x256xf32> to vector<32x256xf32>
    %140 = arith.mulf %139, %138 : vector<32x256xf32>
    %141 = arith.addf %121, %140 : vector<32x256xf32>
    %142 = vector.extract_strided_slice %25 {offsets = [24, 0], sizes = [1, 256], strides = [1, 1]} : vector<32x256xf32> to vector<1x256xf32>
    %143 = vector.extract_strided_slice %21 {offsets = [768, 0], sizes = [32, 256], strides = [1, 1]} : vector<1024x256xf32> to vector<32x256xf32>
    %144 = vector.broadcast %142 : vector<1x256xf32> to vector<32x256xf32>
    %145 = arith.mulf %144, %143 : vector<32x256xf32>
    %146 = arith.addf %126, %145 : vector<32x256xf32>
    %147 = vector.extract_strided_slice %25 {offsets = [25, 0], sizes = [1, 256], strides = [1, 1]} : vector<32x256xf32> to vector<1x256xf32>
    %148 = vector.extract_strided_slice %21 {offsets = [800, 0], sizes = [32, 256], strides = [1, 1]} : vector<1024x256xf32> to vector<32x256xf32>
    %149 = vector.broadcast %147 : vector<1x256xf32> to vector<32x256xf32>
    %150 = arith.mulf %149, %148 : vector<32x256xf32>
    %151 = arith.addf %131, %150 : vector<32x256xf32>
    %152 = vector.extract_strided_slice %25 {offsets = [26, 0], sizes = [1, 256], strides = [1, 1]} : vector<32x256xf32> to vector<1x256xf32>
    %153 = vector.extract_strided_slice %21 {offsets = [832, 0], sizes = [32, 256], strides = [1, 1]} : vector<1024x256xf32> to vector<32x256xf32>
    %154 = vector.broadcast %152 : vector<1x256xf32> to vector<32x256xf32>
    %155 = arith.mulf %154, %153 : vector<32x256xf32>
    %156 = arith.addf %136, %155 : vector<32x256xf32>
    %157 = vector.extract_strided_slice %25 {offsets = [27, 0], sizes = [1, 256], strides = [1, 1]} : vector<32x256xf32> to vector<1x256xf32>
    %158 = vector.extract_strided_slice %21 {offsets = [864, 0], sizes = [32, 256], strides = [1, 1]} : vector<1024x256xf32> to vector<32x256xf32>
    %159 = vector.broadcast %157 : vector<1x256xf32> to vector<32x256xf32>
    %160 = arith.mulf %159, %158 : vector<32x256xf32>
    %161 = arith.addf %141, %160 : vector<32x256xf32>
    %162 = vector.extract_strided_slice %25 {offsets = [28, 0], sizes = [1, 256], strides = [1, 1]} : vector<32x256xf32> to vector<1x256xf32>
    %163 = vector.extract_strided_slice %21 {offsets = [896, 0], sizes = [32, 256], strides = [1, 1]} : vector<1024x256xf32> to vector<32x256xf32>
    %164 = vector.broadcast %162 : vector<1x256xf32> to vector<32x256xf32>
    %165 = arith.mulf %164, %163 : vector<32x256xf32>
    %166 = arith.addf %146, %165 : vector<32x256xf32>
    %167 = vector.extract_strided_slice %25 {offsets = [29, 0], sizes = [1, 256], strides = [1, 1]} : vector<32x256xf32> to vector<1x256xf32>
    %168 = vector.extract_strided_slice %21 {offsets = [928, 0], sizes = [32, 256], strides = [1, 1]} : vector<1024x256xf32> to vector<32x256xf32>
    %169 = vector.broadcast %167 : vector<1x256xf32> to vector<32x256xf32>
    %170 = arith.mulf %169, %168 : vector<32x256xf32>
    %171 = arith.addf %151, %170 : vector<32x256xf32>
    %172 = vector.extract_strided_slice %25 {offsets = [30, 0], sizes = [1, 256], strides = [1, 1]} : vector<32x256xf32> to vector<1x256xf32>
    %173 = vector.extract_strided_slice %21 {offsets = [960, 0], sizes = [32, 256], strides = [1, 1]} : vector<1024x256xf32> to vector<32x256xf32>
    %174 = vector.broadcast %172 : vector<1x256xf32> to vector<32x256xf32>
    %175 = arith.mulf %174, %173 : vector<32x256xf32>
    %176 = arith.addf %156, %175 : vector<32x256xf32>
    %177 = vector.extract_strided_slice %25 {offsets = [31, 0], sizes = [1, 256], strides = [1, 1]} : vector<32x256xf32> to vector<1x256xf32>
    %178 = vector.extract_strided_slice %21 {offsets = [992, 0], sizes = [32, 256], strides = [1, 1]} : vector<1024x256xf32> to vector<32x256xf32>
    %179 = vector.broadcast %177 : vector<1x256xf32> to vector<32x256xf32>
    %180 = arith.mulf %179, %178 : vector<32x256xf32>
    %181 = arith.addf %161, %180 : vector<32x256xf32>
    %182 = arith.addf %166, %171 : vector<32x256xf32>
    %183 = arith.addf %176, %181 : vector<32x256xf32>
    %184 = arith.addf %182, %183 : vector<32x256xf32>
    %c0_20 = arith.constant 0 : index
    %c0_21 = arith.constant 0 : index
    %185 = vector.load %arg24[%c0_20, %c0_21] : memref<32x48xf32, #tpu.memory_space<vmem>>, vector<32x48xf32>
    %186 = arith.truncf %184 : vector<32x256xf32> to vector<32x256xbf16>
    %c0_22 = arith.constant 0 : index
    %c0_23 = arith.constant 0 : index
    %187 = vector.load %arg6[%c0_22, %c0_23] : memref<48x256xbf16, #tpu.memory_space<vmem>>, vector<48x256xbf16>
    %cst_24 = arith.constant dense<0.000000e+00> : vector<32x48xf32>
    %188 = tpu.matmul %186, %187, %cst_24 {dimension_numbers = #tpu.dot_dimension_numbers<[1], [1], [0], [0], [0, 0, 1, 0], [], []>} : vector<32x256xbf16>, vector<48x256xbf16>, vector<32x48xf32> -> vector<32x48xf32>
    %189 = arith.addf %185, %188 : vector<32x48xf32>
    %c0_25 = arith.constant 0 : index
    %c0_26 = arith.constant 0 : index
    %190 = vector.load %arg24[%c0_25, %c0_26] : memref<32x48xf32, #tpu.memory_space<vmem>>, vector<32x48xf32>
    tpu.vector_store %arg24[%c0_25, %c0_26], %189 {strides = array<i32>} : memref<32x48xf32, #tpu.memory_space<vmem>>, vector<32x48xf32>,
    %c0_i32_27 = arith.constant 0 : i32
    %191 = arith.cmpi eq, %arg1, %c0_i32_27 : i32
    %192 = arith.extui %191 : i1 to i32
    %c0_i32_28 = arith.constant 0 : i32
    %193 = arith.cmpi ne, %192, %c0_i32_28 : i32
    scf.if %193 {
      %c0_31 = arith.constant 0 : index
      %c0_32 = arith.constant 0 : index
      %199 = vector.load %arg22[%c0_31, %c0_32] : memref<32x48xf32, #tpu.memory_space<vmem>>, vector<32x48xf32>
      %c0_33 = arith.constant 0 : index
      %c0_34 = arith.constant 0 : index
      %200 = vector.load %arg23[%c0_33, %c0_34] : memref<32x48xf32, #tpu.memory_space<vmem>>, vector<32x48xf32>
      %c0_35 = arith.constant 0 : index
      %c0_36 = arith.constant 0 : index
      %201 = vector.load %arg24[%c0_35, %c0_36] : memref<32x48xf32, #tpu.memory_space<vmem>>, vector<32x48xf32>
      %c0_37 = arith.constant 0 : index
      %c0_38 = arith.constant 0 : index
      %202 = vector.load %arg8[%c0_37, %c0_38] : memref<1x48xf32, #tpu.memory_space<vmem>>, vector<1x48xf32>
      %203 = vector.broadcast %202 : vector<1x48xf32> to vector<32x48xf32>
      %204 = arith.mulf %201, %203 : vector<32x48xf32>
      %c0_39 = arith.constant 0 : index
      %c0_40 = arith.constant 0 : index
      %205 = vector.load %arg13[%c0_39, %c0_40] : memref<32x32xbf16, #tpu.memory_space<vmem>>, vector<32x32xbf16>
      %206 = arith.truncf %199 : vector<32x48xf32> to vector<32x48xbf16>
      %cst_41 = arith.constant dense<0.000000e+00> : vector<32x48xf32>
      %207 = tpu.matmul %205, %206, %cst_41 {dimension_numbers = #tpu.dot_dimension_numbers<[1], [0], [0], [1], [0, 0, 1, 1], [], []>} : vector<32x32xbf16>, vector<32x48xbf16>, vector<32x48xf32> -> vector<32x48xf32>
      %208 = arith.addf %204, %207 : vector<32x48xf32>
      %c0_42 = arith.constant 0 : index
      %c0_43 = arith.constant 0 : index
      %209 = vector.load %arg14[%c0_42, %c0_43] : memref<32x1xf32, #tpu.memory_space<vmem>>, vector<32x1xf32>
      %210 = vector.broadcast %209 : vector<32x1xf32> to vector<32x48xf32>
      %211 = arith.addf %208, %210 : vector<32x48xf32>
      %cst_44 = arith.constant 0.000000e+00 : f32
      %212 = vector.broadcast %cst_44 : f32 to vector<32x48xf32>
      %213 = arith.maximumf %211, %212 : vector<32x48xf32>
      %c0_45 = arith.constant 0 : index
      %c0_46 = arith.constant 0 : index
      %214 = vector.load %arg15[%c0_45, %c0_46] : memref<96x32xbf16, #tpu.memory_space<vmem>>, vector<96x32xbf16>
      %215 = arith.truncf %213 : vector<32x48xf32> to vector<32x48xbf16>
      %cst_47 = arith.constant dense<0.000000e+00> : vector<96x48xf32>
      %216 = tpu.matmul %214, %215, %cst_47 {dimension_numbers = #tpu.dot_dimension_numbers<[1], [0], [0], [1], [0, 0, 1, 1], [], []>} : vector<96x32xbf16>, vector<32x48xbf16>, vector<96x48xf32> -> vector<96x48xf32>
      %c0_48 = arith.constant 0 : index
      %c0_49 = arith.constant 0 : index
      %217 = vector.load %arg17[%c0_48, %c0_49] : memref<96x1xf32, #tpu.memory_space<vmem>>, vector<96x1xf32>
      %218 = vector.broadcast %217 : vector<96x1xf32> to vector<96x48xf32>
      %219 = arith.addf %216, %218 : vector<96x48xf32>
      %c0_50 = arith.constant 0 : index
      %c0_51 = arith.constant 0 : index
      %220 = vector.load %arg16[%c0_50, %c0_51] : memref<96x32xbf16, #tpu.memory_space<vmem>>, vector<96x32xbf16>
      %221 = arith.truncf %200 : vector<32x48xf32> to vector<32x48xbf16>
      %cst_52 = arith.constant dense<0.000000e+00> : vector<96x48xf32>
      %222 = tpu.matmul %220, %221, %cst_52 {dimension_numbers = #tpu.dot_dimension_numbers<[1], [0], [0], [1], [0, 0, 1, 1], [], []>} : vector<96x32xbf16>, vector<32x48xbf16>, vector<96x48xf32> -> vector<96x48xf32>
      %c0_53 = arith.constant 0 : index
      %c0_54 = arith.constant 0 : index
      %223 = vector.load %arg18[%c0_53, %c0_54] : memref<96x1xf32, #tpu.memory_space<vmem>>, vector<96x1xf32>
      %224 = vector.broadcast %223 : vector<96x1xf32> to vector<96x48xf32>
      %225 = arith.addf %222, %224 : vector<96x48xf32>
      %226 = vector.extract_strided_slice %219 {offsets = [0, 0], sizes = [64, 48], strides = [1, 1]} : vector<96x48xf32> to vector<64x48xf32>
      %227 = vector.extract_strided_slice %225 {offsets = [0, 0], sizes = [64, 48], strides = [1, 1]} : vector<96x48xf32> to vector<64x48xf32>
      %228 = arith.addf %226, %227 : vector<64x48xf32>
      %229 = arith.negf %228 : vector<64x48xf32>
      %230 = math.exp %229 : vector<64x48xf32>
      %cst_55 = arith.constant 1.000000e+00 : f32
      %231 = vector.broadcast %cst_55 : f32 to vector<64x48xf32>
      %232 = arith.addf %231, %230 : vector<64x48xf32>
      %233 = arith.divf %231, %232 : vector<64x48xf32>
      %234 = vector.extract_strided_slice %233 {offsets = [0, 0], sizes = [32, 48], strides = [1, 1]} : vector<64x48xf32> to vector<32x48xf32>
      %235 = vector.extract_strided_slice %233 {offsets = [32, 0], sizes = [32, 48], strides = [1, 1]} : vector<64x48xf32> to vector<32x48xf32>
      %236 = vector.extract_strided_slice %219 {offsets = [64, 0], sizes = [32, 48], strides = [1, 1]} : vector<96x48xf32> to vector<32x48xf32>
      %237 = vector.extract_strided_slice %225 {offsets = [64, 0], sizes = [32, 48], strides = [1, 1]} : vector<96x48xf32> to vector<32x48xf32>
      %238 = arith.mulf %234, %237 : vector<32x48xf32>
      %239 = arith.addf %236, %238 : vector<32x48xf32>
      %240 = math.tanh %239 : vector<32x48xf32>
      %cst_56 = arith.constant 1.000000e+00 : f32
      %241 = vector.broadcast %cst_56 : f32 to vector<32x48xf32>
      %242 = arith.subf %241, %235 : vector<32x48xf32>
      %243 = arith.mulf %242, %240 : vector<32x48xf32>
      %244 = arith.mulf %235, %200 : vector<32x48xf32>
      %245 = arith.addf %243, %244 : vector<32x48xf32>
      %c0_57 = arith.constant 0 : index
      %c0_58 = arith.constant 0 : index
      %246 = vector.load %arg23[%c0_57, %c0_58] : memref<32x48xf32, #tpu.memory_space<vmem>>, vector<32x48xf32>
      tpu.vector_store %arg23[%c0_57, %c0_58], %245 {strides = array<i32>} : memref<32x48xf32, #tpu.memory_space<vmem>>, vector<32x48xf32>,
      %cst_59 = arith.constant dense<0.000000e+00> : vector<48xf32>
      %247 = vector.multi_reduction <add>, %245, %cst_59 [0] : vector<32x48xf32> to vector<48xf32>
      %248 = vector.shape_cast %247 : vector<48xf32> to vector<1x48xf32>
      %cst_60 = arith.constant 3.200000e+01 : f32
      %249 = vector.broadcast %cst_60 : f32 to vector<1x48xf32>
      %250 = arith.divf %248, %249 : vector<1x48xf32>
      %251 = vector.broadcast %250 : vector<1x48xf32> to vector<32x48xf32>
      %252 = arith.subf %245, %251 : vector<32x48xf32>
      %253 = arith.mulf %252, %252 : vector<32x48xf32>
      %cst_61 = arith.constant dense<0.000000e+00> : vector<48xf32>
      %254 = vector.multi_reduction <add>, %253, %cst_61 [0] : vector<32x48xf32> to vector<48xf32>
      %255 = vector.shape_cast %254 : vector<48xf32> to vector<1x48xf32>
      %cst_62 = arith.constant 3.200000e+01 : f32
      %256 = vector.broadcast %cst_62 : f32 to vector<1x48xf32>
      %257 = arith.divf %255, %256 : vector<1x48xf32>
      %258 = vector.broadcast %250 : vector<1x48xf32> to vector<32x48xf32>
      %259 = arith.subf %245, %258 : vector<32x48xf32>
      %cst_63 = arith.constant 9.99999974E-6 : f32
      %260 = vector.broadcast %cst_63 : f32 to vector<1x48xf32>
      %261 = arith.addf %257, %260 : vector<1x48xf32>
      %262 = math.rsqrt %261 : vector<1x48xf32>
      %263 = vector.broadcast %262 : vector<1x48xf32> to vector<32x48xf32>
      %264 = arith.mulf %259, %263 : vector<32x48xf32>
      %c0_64 = arith.constant 0 : index
      %c0_65 = arith.constant 0 : index
      %265 = vector.load %arg19[%c0_64, %c0_65] : memref<32x1xf32, #tpu.memory_space<vmem>>, vector<32x1xf32>
      %266 = vector.broadcast %265 : vector<32x1xf32> to vector<32x48xf32>
      %267 = arith.mulf %264, %266 : vector<32x48xf32>
      %c0_66 = arith.constant 0 : index
      %c0_67 = arith.constant 0 : index
      %268 = vector.load %arg20[%c0_66, %c0_67] : memref<32x1xf32, #tpu.memory_space<vmem>>, vector<32x1xf32>
      %269 = vector.broadcast %268 : vector<32x1xf32> to vector<32x48xf32>
      %270 = arith.addf %267, %269 : vector<32x48xf32>
      %c0_68 = arith.constant 0 : index
      %c0_69 = arith.constant 0 : index
      %271 = vector.load %arg22[%c0_68, %c0_69] : memref<32x48xf32, #tpu.memory_space<vmem>>, vector<32x48xf32>
      tpu.vector_store %arg22[%c0_68, %c0_69], %270 {strides = array<i32>} : memref<32x48xf32, #tpu.memory_space<vmem>>, vector<32x48xf32>,
    } else {
    }
    %c2_i32 = arith.constant 2 : i32
    %194 = arith.cmpi eq, %arg0, %c2_i32 : i32
    %c0_i32_29 = arith.constant 0 : i32
    %195 = arith.cmpi eq, %arg1, %c0_i32_29 : i32
    %196 = arith.andi %194, %195 : i1
    %197 = arith.extui %196 : i1 to i32
    %c0_i32_30 = arith.constant 0 : i32
    %198 = arith.cmpi ne, %197, %c0_i32_30 : i32
    scf.if %198 {
      %c0_31 = arith.constant 0 : index
      %c0_32 = arith.constant 0 : index
      %199 = vector.load %arg22[%c0_31, %c0_32] : memref<32x48xf32, #tpu.memory_space<vmem>>, vector<32x48xf32>
      %c0_33 = arith.constant 0 : index
      %c0_34 = arith.constant 0 : index
      %200 = vector.load %arg21[%c0_33, %c0_34] : memref<32x48xf32, #tpu.memory_space<vmem>>, vector<32x48xf32>
      tpu.vector_store %arg21[%c0_33, %c0_34], %199 {strides = array<i32>} : memref<32x48xf32, #tpu.memory_space<vmem>>, vector<32x48xf32>,
    } else {
    }
    return
  }
  func.func @transform_0(%arg0: i32, %arg1: i32) -> (i32, i32) {
    %c0_i32 = arith.constant 0 : i32
    %c0_i32_0 = arith.constant 0 : i32
    %c0_i32_1 = arith.constant 0 : i32
    return %c0_i32, %c0_i32_0 : i32, i32
  }
  func.func @transform_1(%arg0: i32, %arg1: i32) -> (i32, i32) {
    %c0_i32 = arith.constant 0 : i32
    %c0_i32_0 = arith.constant 0 : i32
    %c0_i32_1 = arith.constant 0 : i32
    return %c0_i32, %c0_i32_0 : i32, i32
  }
  func.func @transform_2(%arg0: i32, %arg1: i32) -> (i32, i32) {
    %c0_i32 = arith.constant 0 : i32
    %c0_i32_0 = arith.constant 0 : i32
    %c0_i32_1 = arith.constant 0 : i32
    return %c0_i32, %c0_i32_0 : i32, i32
  }
  func.func @transform_3(%arg0: i32, %arg1: i32) -> (i32, i32) {
    %c0_i32 = arith.constant 0 : i32
    %c0_i32_0 = arith.constant 0 : i32
    return %c0_i32, %arg1 : i32, i32
  }
  func.func @transform_4(%arg0: i32, %arg1: i32) -> (i32, i32) {
    %c0_i32 = arith.constant 0 : i32
    %c0_i32_0 = arith.constant 0 : i32
    return %c0_i32, %arg1 : i32, i32
  }
  func.func @transform_5(%arg0: i32, %arg1: i32) -> (i32, i32) {
    %c0_i32 = arith.constant 0 : i32
    %c0_i32_0 = arith.constant 0 : i32
    return %c0_i32, %arg1 : i32, i32
  }
  func.func @transform_6(%arg0: i32, %arg1: i32) -> (i32, i32) {
    %c0_i32 = arith.constant 0 : i32
    %c0_i32_0 = arith.constant 0 : i32
    %c0_i32_1 = arith.constant 0 : i32
    return %c0_i32, %c0_i32_0 : i32, i32
  }
  func.func @transform_7(%arg0: i32, %arg1: i32) -> (i32, i32) {
    %c0_i32 = arith.constant 0 : i32
    %c0_i32_0 = arith.constant 0 : i32
    %c0_i32_1 = arith.constant 0 : i32
    return %c0_i32, %c0_i32_0 : i32, i32
  }
  func.func @transform_8(%arg0: i32, %arg1: i32) -> (i32, i32) {
    %c0_i32 = arith.constant 0 : i32
    %c0_i32_0 = arith.constant 0 : i32
    %c0_i32_1 = arith.constant 0 : i32
    return %c0_i32, %c0_i32_0 : i32, i32
  }
  func.func @transform_9(%arg0: i32, %arg1: i32) -> (i32, i32) {
    %c0_i32 = arith.constant 0 : i32
    %c0_i32_0 = arith.constant 0 : i32
    %c0_i32_1 = arith.constant 0 : i32
    return %c0_i32, %c0_i32_0 : i32, i32
  }
  func.func @transform_10(%arg0: i32, %arg1: i32) -> (i32, i32) {
    %c0_i32 = arith.constant 0 : i32
    %c0_i32_0 = arith.constant 0 : i32
    %c0_i32_1 = arith.constant 0 : i32
    return %c0_i32, %c0_i32_0 : i32, i32
  }
  func.func @transform_11(%arg0: i32, %arg1: i32) -> (i32, i32) {
    %c0_i32 = arith.constant 0 : i32
    %c0_i32_0 = arith.constant 0 : i32
    %c0_i32_1 = arith.constant 0 : i32
    return %c0_i32, %c0_i32_0 : i32, i32
  }
  func.func @transform_12(%arg0: i32, %arg1: i32) -> (i32, i32) {
    %c0_i32 = arith.constant 0 : i32
    %c0_i32_0 = arith.constant 0 : i32
    %c0_i32_1 = arith.constant 0 : i32
    return %c0_i32, %c0_i32_0 : i32, i32
  }
  func.func @transform_13(%arg0: i32, %arg1: i32) -> (i32, i32) {
    %c0_i32 = arith.constant 0 : i32
    %c0_i32_0 = arith.constant 0 : i32
    %c0_i32_1 = arith.constant 0 : i32
    return %c0_i32, %c0_i32_0 : i32, i32
  }
  func.func @transform_14(%arg0: i32, %arg1: i32) -> (i32, i32) {
    %c0_i32 = arith.constant 0 : i32
    %c0_i32_0 = arith.constant 0 : i32
    %c0_i32_1 = arith.constant 0 : i32
    return %c0_i32, %c0_i32_0 : i32, i32
  }
  func.func @transform_15(%arg0: i32, %arg1: i32) -> (i32, i32) {
    %c0_i32 = arith.constant 0 : i32
    %c0_i32_0 = arith.constant 0 : i32
    %c0_i32_1 = arith.constant 0 : i32
    return %c0_i32, %c0_i32_0 : i32, i32
  }
  func.func @transform_16(%arg0: i32, %arg1: i32) -> (i32, i32) {
    %c0_i32 = arith.constant 0 : i32
    %c0_i32_0 = arith.constant 0 : i32
    %c0_i32_1 = arith.constant 0 : i32
    return %c0_i32, %c0_i32_0 : i32, i32
  }
  func.func @transform_17(%arg0: i32, %arg1: i32) -> (i32, i32) {
    %c0_i32 = arith.constant 0 : i32
    %c0_i32_0 = arith.constant 0 : i32
    %c0_i32_1 = arith.constant 0 : i32
    return %c0_i32, %c0_i32_0 : i32, i32
  }
  func.func @transform_18(%arg0: i32, %arg1: i32) -> (i32, i32) {
    %c0_i32 = arith.constant 0 : i32
    %c0_i32_0 = arith.constant 0 : i32
    %c0_i32_1 = arith.constant 0 : i32
    return %c0_i32, %c0_i32_0 : i32, i32
  }
  func.func @transform_19(%arg0: i32, %arg1: i32) -> (i32, i32) {
    %c0_i32 = arith.constant 0 : i32
    %c0_i32_0 = arith.constant 0 : i32
    %c0_i32_1 = arith.constant 0 : i32
    return %c0_i32, %c0_i32_0 : i32, i32
  }
}

module attributes {stable_mosaic.version = 11 : i64} {
  func.func @set2set_head_kernel(%arg0: i32, %arg1: memref<32x48xf32, #tpu.memory_space<vmem>>, %arg2: memref<3x48xf32, #tpu.memory_space<vmem>>, %arg3: memref<64x128xbf16, #tpu.memory_space<vmem>>, %arg4: memref<32x128xbf16, #tpu.memory_space<vmem>>, %arg5: memref<1x128xf32, #tpu.memory_space<vmem>>, %arg6: memref<3x3xbf16, #tpu.memory_space<vmem>>, %arg7: memref<64x32xbf16, #tpu.memory_space<vmem>>, %arg8: memref<3x32xbf16, #tpu.memory_space<vmem>>, %arg9: memref<1x32xf32, #tpu.memory_space<vmem>>, %arg10: memref<32x1xbf16, #tpu.memory_space<vmem>>, %arg11: memref<1x1xf32, #tpu.memory_space<vmem>>, %arg12: memref<3x1xf32, #tpu.memory_space<vmem>>, %arg13: memref<3x32xf32, #tpu.memory_space<vmem>>, %arg14: memref<3x32xf32, #tpu.memory_space<vmem>>, %arg15: memref<3x64xf32, #tpu.memory_space<vmem>>) attributes {dimension_semantics = [#tpu.dimension_semantics<arbitrary>], iteration_bounds = array<i64: 3>, scalar_prefetch = 0 : i64, scratch_operands = 3 : i64, tpu.core_type = #tpu.core_type<tc>, window_params = [{pipeline_mode = #tpu.pipeline_mode<synchronous>, transform_indices = @transform_0, window_bounds = array<i64: 32, 48>}, {pipeline_mode = #tpu.pipeline_mode<synchronous>, transform_indices = @transform_1, window_bounds = array<i64: 3, 48>}, {pipeline_mode = #tpu.pipeline_mode<synchronous>, transform_indices = @transform_2, window_bounds = array<i64: 64, 128>}, {pipeline_mode = #tpu.pipeline_mode<synchronous>, transform_indices = @transform_3, window_bounds = array<i64: 32, 128>}, {pipeline_mode = #tpu.pipeline_mode<synchronous>, transform_indices = @transform_4, window_bounds = array<i64: 1, 128>}, {pipeline_mode = #tpu.pipeline_mode<synchronous>, transform_indices = @transform_5, window_bounds = array<i64: 3, 3>}, {pipeline_mode = #tpu.pipeline_mode<synchronous>, transform_indices = @transform_6, window_bounds = array<i64: 64, 32>}, {pipeline_mode = #tpu.pipeline_mode<synchronous>, transform_indices = @transform_7, window_bounds = array<i64: 3, 32>}, {pipeline_mode = #tpu.pipeline_mode<synchronous>, transform_indices = @transform_8, window_bounds = array<i64: 1, 32>}, {pipeline_mode = #tpu.pipeline_mode<synchronous>, transform_indices = @transform_9, window_bounds = array<i64: 32, 1>}, {pipeline_mode = #tpu.pipeline_mode<synchronous>, transform_indices = @transform_10, window_bounds = array<i64: 1, 1>}, {pipeline_mode = #tpu.pipeline_mode<synchronous>, transform_indices = @transform_11, window_bounds = array<i64: 3, 1>}]} {
    %c0_i32 = arith.constant 0 : i32
    %0 = arith.cmpi eq, %arg0, %c0_i32 : i32
    %1 = arith.extui %0 : i1 to i32
    %c0_i32_0 = arith.constant 0 : i32
    %2 = arith.cmpi ne, %1, %c0_i32_0 : i32
    scf.if %2 {
      %cst_34 = arith.constant 0.000000e+00 : f32
      %67 = vector.broadcast %cst_34 : f32 to vector<3x32xf32>
      %c0_35 = arith.constant 0 : index
      %c0_36 = arith.constant 0 : index
      %68 = vector.load %arg13[%c0_35, %c0_36] : memref<3x32xf32, #tpu.memory_space<vmem>>, vector<3x32xf32>
      tpu.vector_store %arg13[%c0_35, %c0_36], %67 {strides = array<i32>} : memref<3x32xf32, #tpu.memory_space<vmem>>, vector<3x32xf32>,
      %cst_37 = arith.constant 0.000000e+00 : f32
      %69 = vector.broadcast %cst_37 : f32 to vector<3x32xf32>
      %c0_38 = arith.constant 0 : index
      %c0_39 = arith.constant 0 : index
      %70 = vector.load %arg14[%c0_38, %c0_39] : memref<3x32xf32, #tpu.memory_space<vmem>>, vector<3x32xf32>
      tpu.vector_store %arg14[%c0_38, %c0_39], %69 {strides = array<i32>} : memref<3x32xf32, #tpu.memory_space<vmem>>, vector<3x32xf32>,
      %cst_40 = arith.constant 0.000000e+00 : f32
      %71 = vector.broadcast %cst_40 : f32 to vector<3x64xf32>
      %c0_41 = arith.constant 0 : index
      %c0_42 = arith.constant 0 : index
      %72 = vector.load %arg15[%c0_41, %c0_42] : memref<3x64xf32, #tpu.memory_space<vmem>>, vector<3x64xf32>
      tpu.vector_store %arg15[%c0_41, %c0_42], %71 {strides = array<i32>} : memref<3x64xf32, #tpu.memory_space<vmem>>, vector<3x64xf32>,
    } else {
    }
    %c0 = arith.constant 0 : index
    %c0_1 = arith.constant 0 : index
    %3 = vector.load %arg15[%c0, %c0_1] : memref<3x64xf32, #tpu.memory_space<vmem>>, vector<3x64xf32>
    %c0_2 = arith.constant 0 : index
    %c0_3 = arith.constant 0 : index
    %4 = vector.load %arg13[%c0_2, %c0_3] : memref<3x32xf32, #tpu.memory_space<vmem>>, vector<3x32xf32>
    %c0_4 = arith.constant 0 : index
    %c0_5 = arith.constant 0 : index
    %5 = vector.load %arg14[%c0_4, %c0_5] : memref<3x32xf32, #tpu.memory_space<vmem>>, vector<3x32xf32>
    %6 = arith.truncf %3 : vector<3x64xf32> to vector<3x64xbf16>
    %c0_6 = arith.constant 0 : index
    %c0_7 = arith.constant 0 : index
    %7 = vector.load %arg3[%c0_6, %c0_7] : memref<64x128xbf16, #tpu.memory_space<vmem>>, vector<64x128xbf16>
    %cst = arith.constant dense<0.000000e+00> : vector<3x128xf32>
    %8 = tpu.matmul %6, %7, %cst {dimension_numbers = #tpu.dot_dimension_numbers<[1], [0], [0], [1], [0, 0, 1, 1], [], []>} : vector<3x64xbf16>, vector<64x128xbf16>, vector<3x128xf32> -> vector<3x128xf32>
    %9 = arith.truncf %4 : vector<3x32xf32> to vector<3x32xbf16>
    %c0_8 = arith.constant 0 : index
    %c0_9 = arith.constant 0 : index
    %10 = vector.load %arg4[%c0_8, %c0_9] : memref<32x128xbf16, #tpu.memory_space<vmem>>, vector<32x128xbf16>
    %cst_10 = arith.constant dense<0.000000e+00> : vector<3x128xf32>
    %11 = tpu.matmul %9, %10, %cst_10 {dimension_numbers = #tpu.dot_dimension_numbers<[1], [0], [0], [1], [0, 0, 1, 1], [], []>} : vector<3x32xbf16>, vector<32x128xbf16>, vector<3x128xf32> -> vector<3x128xf32>
    %12 = arith.addf %8, %11 : vector<3x128xf32>
    %c0_11 = arith.constant 0 : index
    %c0_12 = arith.constant 0 : index
    %13 = vector.load %arg5[%c0_11, %c0_12] : memref<1x128xf32, #tpu.memory_space<vmem>>, vector<1x128xf32>
    %14 = vector.broadcast %13 : vector<1x128xf32> to vector<3x128xf32>
    %15 = arith.addf %12, %14 : vector<3x128xf32>
    %16 = vector.extract_strided_slice %15 {offsets = [0, 0], sizes = [3, 64], strides = [1, 1]} : vector<3x128xf32> to vector<3x64xf32>
    %17 = arith.negf %16 : vector<3x64xf32>
    %18 = math.exp %17 : vector<3x64xf32>
    %cst_13 = arith.constant 1.000000e+00 : f32
    %19 = vector.broadcast %cst_13 : f32 to vector<3x64xf32>
    %20 = arith.addf %19, %18 : vector<3x64xf32>
    %21 = arith.divf %19, %20 : vector<3x64xf32>
    %22 = vector.extract_strided_slice %21 {offsets = [0, 0], sizes = [3, 32], strides = [1, 1]} : vector<3x64xf32> to vector<3x32xf32>
    %23 = vector.extract_strided_slice %21 {offsets = [0, 32], sizes = [3, 32], strides = [1, 1]} : vector<3x64xf32> to vector<3x32xf32>
    %24 = vector.extract_strided_slice %15 {offsets = [0, 64], sizes = [3, 32], strides = [1, 1]} : vector<3x128xf32> to vector<3x32xf32>
    %25 = math.tanh %24 : vector<3x32xf32>
    %26 = vector.extract_strided_slice %15 {offsets = [0, 96], sizes = [3, 32], strides = [1, 1]} : vector<3x128xf32> to vector<3x32xf32>
    %27 = arith.negf %26 : vector<3x32xf32>
    %28 = math.exp %27 : vector<3x32xf32>
    %cst_14 = arith.constant 1.000000e+00 : f32
    %29 = vector.broadcast %cst_14 : f32 to vector<3x32xf32>
    %30 = arith.addf %29, %28 : vector<3x32xf32>
    %31 = arith.divf %29, %30 : vector<3x32xf32>
    %32 = arith.mulf %23, %5 : vector<3x32xf32>
    %33 = arith.mulf %22, %25 : vector<3x32xf32>
    %34 = arith.addf %32, %33 : vector<3x32xf32>
    %35 = math.tanh %34 : vector<3x32xf32>
    %36 = arith.mulf %31, %35 : vector<3x32xf32>
    %c0_15 = arith.constant 0 : index
    %c0_16 = arith.constant 0 : index
    %37 = vector.load %arg1[%c0_15, %c0_16] : memref<32x48xf32, #tpu.memory_space<vmem>>, vector<32x48xf32>
    %38 = arith.truncf %37 : vector<32x48xf32> to vector<32x48xbf16>
    %c0_17 = arith.constant 0 : index
    %c0_18 = arith.constant 0 : index
    %39 = vector.load %arg2[%c0_17, %c0_18] : memref<3x48xf32, #tpu.memory_space<vmem>>, vector<3x48xf32>
    %40 = arith.truncf %36 : vector<3x32xf32> to vector<3x32xbf16>
    %cst_19 = arith.constant dense<0.000000e+00> : vector<3x48xf32>
    %41 = tpu.matmul %40, %38, %cst_19 {dimension_numbers = #tpu.dot_dimension_numbers<[1], [0], [0], [1], [0, 0, 1, 1], [], []>} : vector<3x32xbf16>, vector<32x48xbf16>, vector<3x48xf32> -> vector<3x48xf32>
    %cst_20 = arith.constant 0.000000e+00 : f32
    %42 = vector.broadcast %cst_20 : f32 to vector<3x48xf32>
    %43 = arith.cmpf ogt, %39, %42 : vector<3x48xf32>
    %cst_21 = arith.constant -1.000000e+30 : f32
    %44 = vector.broadcast %cst_21 : f32 to vector<3x48xf32>
    %45 = arith.select %43, %41, %44 : vector<3x48xi1>, vector<3x48xf32>
    %cst_22 = arith.constant dense<0xFF800000> : vector<3xf32>
    %46 = vector.multi_reduction <maximumf>, %45, %cst_22 [1] : vector<3x48xf32> to vector<3xf32>
    %47 = vector.shape_cast %46 : vector<3xf32> to vector<3x1xf32>
    %48 = vector.broadcast %47 : vector<3x1xf32> to vector<3x48xf32>
    %49 = arith.subf %45, %48 : vector<3x48xf32>
    %50 = math.exp %49 : vector<3x48xf32>
    %51 = arith.mulf %50, %39 : vector<3x48xf32>
    %cst_23 = arith.constant dense<0.000000e+00> : vector<3xf32>
    %52 = vector.multi_reduction <add>, %51, %cst_23 [1] : vector<3x48xf32> to vector<3xf32>
    %53 = vector.shape_cast %52 : vector<3xf32> to vector<3x1xf32>
    %cst_24 = arith.constant 1.000000e-16 : f32
    %54 = vector.broadcast %cst_24 : f32 to vector<3x1xf32>
    %55 = arith.maximumf %53, %54 : vector<3x1xf32>
    %56 = vector.broadcast %55 : vector<3x1xf32> to vector<3x48xf32>
    %57 = arith.divf %51, %56 : vector<3x48xf32>
    %58 = arith.truncf %57 : vector<3x48xf32> to vector<3x48xbf16>
    %cst_25 = arith.constant dense<0.000000e+00> : vector<3x32xf32>
    %59 = tpu.matmul %58, %38, %cst_25 {dimension_numbers = #tpu.dot_dimension_numbers<[1], [1], [0], [0], [0, 0, 1, 0], [], []>} : vector<3x48xbf16>, vector<32x48xbf16>, vector<3x32xf32> -> vector<3x32xf32>
    %c0_26 = arith.constant 0 : index
    %c0_27 = arith.constant 0 : index
    %60 = vector.load %arg13[%c0_26, %c0_27] : memref<3x32xf32, #tpu.memory_space<vmem>>, vector<3x32xf32>
    tpu.vector_store %arg13[%c0_26, %c0_27], %36 {strides = array<i32>} : memref<3x32xf32, #tpu.memory_space<vmem>>, vector<3x32xf32>,
    %c0_28 = arith.constant 0 : index
    %c0_29 = arith.constant 0 : index
    %61 = vector.load %arg14[%c0_28, %c0_29] : memref<3x32xf32, #tpu.memory_space<vmem>>, vector<3x32xf32>
    tpu.vector_store %arg14[%c0_28, %c0_29], %34 {strides = array<i32>} : memref<3x32xf32, #tpu.memory_space<vmem>>, vector<3x32xf32>,
    %c0_30 = arith.constant 0 : index
    %c0_31 = arith.constant 0 : index
    %62 = vector.load %arg15[%c0_30, %c0_31] : memref<3x64xf32, #tpu.memory_space<vmem>>, vector<3x32xf32>
    tpu.vector_store %arg15[%c0_30, %c0_31], %36 {strides = array<i32>} : memref<3x64xf32, #tpu.memory_space<vmem>>, vector<3x32xf32>,
    %c0_32 = arith.constant 0 : index
    %c32 = arith.constant 32 : index
    %63 = vector.load %arg15[%c0_32, %c32] : memref<3x64xf32, #tpu.memory_space<vmem>>, vector<3x32xf32>
    tpu.vector_store %arg15[%c0_32, %c32], %59 {strides = array<i32>} : memref<3x64xf32, #tpu.memory_space<vmem>>, vector<3x32xf32>,
    %c2_i32 = arith.constant 2 : i32
    %64 = arith.cmpi eq, %arg0, %c2_i32 : i32
    %65 = arith.extui %64 : i1 to i32
    %c0_i32_33 = arith.constant 0 : i32
    %66 = arith.cmpi ne, %65, %c0_i32_33 : i32
    scf.if %66 {
      %c0_34 = arith.constant 0 : index
      %c0_35 = arith.constant 0 : index
      %67 = vector.load %arg15[%c0_34, %c0_35] : memref<3x64xf32, #tpu.memory_space<vmem>>, vector<3x64xf32>
      %68 = arith.truncf %67 : vector<3x64xf32> to vector<3x64xbf16>
      %c0_36 = arith.constant 0 : index
      %c0_37 = arith.constant 0 : index
      %69 = vector.load %arg7[%c0_36, %c0_37] : memref<64x32xbf16, #tpu.memory_space<vmem>>, vector<64x32xbf16>
      %cst_38 = arith.constant dense<0.000000e+00> : vector<3x32xf32>
      %70 = tpu.matmul %68, %69, %cst_38 {dimension_numbers = #tpu.dot_dimension_numbers<[1], [0], [0], [1], [0, 0, 1, 1], [], []>} : vector<3x64xbf16>, vector<64x32xbf16>, vector<3x32xf32> -> vector<3x32xf32>
      %c0_39 = arith.constant 0 : index
      %c0_40 = arith.constant 0 : index
      %71 = vector.load %arg6[%c0_39, %c0_40] : memref<3x3xbf16, #tpu.memory_space<vmem>>, vector<3x3xbf16>
      %c0_41 = arith.constant 0 : index
      %c0_42 = arith.constant 0 : index
      %72 = vector.load %arg8[%c0_41, %c0_42] : memref<3x32xbf16, #tpu.memory_space<vmem>>, vector<3x32xbf16>
      %cst_43 = arith.constant dense<0.000000e+00> : vector<3x32xf32>
      %73 = tpu.matmul %71, %72, %cst_43 {dimension_numbers = #tpu.dot_dimension_numbers<[1], [0], [0], [1], [0, 0, 1, 1], [], []>} : vector<3x3xbf16>, vector<3x32xbf16>, vector<3x32xf32> -> vector<3x32xf32>
      %74 = arith.addf %70, %73 : vector<3x32xf32>
      %c0_44 = arith.constant 0 : index
      %c0_45 = arith.constant 0 : index
      %75 = vector.load %arg9[%c0_44, %c0_45] : memref<1x32xf32, #tpu.memory_space<vmem>>, vector<1x32xf32>
      %76 = vector.broadcast %75 : vector<1x32xf32> to vector<3x32xf32>
      %77 = arith.addf %74, %76 : vector<3x32xf32>
      %cst_46 = arith.constant 0.000000e+00 : f32
      %78 = vector.broadcast %cst_46 : f32 to vector<3x32xf32>
      %79 = arith.maximumf %77, %78 : vector<3x32xf32>
      %80 = arith.truncf %79 : vector<3x32xf32> to vector<3x32xbf16>
      %c0_47 = arith.constant 0 : index
      %c0_48 = arith.constant 0 : index
      %81 = vector.load %arg10[%c0_47, %c0_48] : memref<32x1xbf16, #tpu.memory_space<vmem>>, vector<32x1xbf16>
      %cst_49 = arith.constant dense<0.000000e+00> : vector<3x1xf32>
      %82 = tpu.matmul %80, %81, %cst_49 {dimension_numbers = #tpu.dot_dimension_numbers<[1], [0], [0], [1], [0, 0, 1, 1], [], []>} : vector<3x32xbf16>, vector<32x1xbf16>, vector<3x1xf32> -> vector<3x1xf32>
      %c0_50 = arith.constant 0 : index
      %c0_51 = arith.constant 0 : index
      %83 = vector.load %arg11[%c0_50, %c0_51] : memref<1x1xf32, #tpu.memory_space<vmem>>, vector<1x1xf32>
      %84 = vector.broadcast %83 : vector<1x1xf32> to vector<3x1xf32>
      %85 = arith.addf %82, %84 : vector<3x1xf32>
      %c0_52 = arith.constant 0 : index
      %c0_53 = arith.constant 0 : index
      %86 = vector.load %arg12[%c0_52, %c0_53] : memref<3x1xf32, #tpu.memory_space<vmem>>, vector<3x1xf32>
      tpu.vector_store %arg12[%c0_52, %c0_53], %85 {strides = array<i32>} : memref<3x1xf32, #tpu.memory_space<vmem>>, vector<3x1xf32>,
    } else {
    }
    return
  }
  func.func @transform_0(%arg0: i32) -> (i32, i32) {
    %c0_i32 = arith.constant 0 : i32
    %c0_i32_0 = arith.constant 0 : i32
    %c0_i32_1 = arith.constant 0 : i32
    return %c0_i32, %c0_i32_0 : i32, i32
  }
  func.func @transform_1(%arg0: i32) -> (i32, i32) {
    %c0_i32 = arith.constant 0 : i32
    %c0_i32_0 = arith.constant 0 : i32
    %c0_i32_1 = arith.constant 0 : i32
    return %c0_i32, %c0_i32_0 : i32, i32
  }
  func.func @transform_2(%arg0: i32) -> (i32, i32) {
    %c0_i32 = arith.constant 0 : i32
    %c0_i32_0 = arith.constant 0 : i32
    %c0_i32_1 = arith.constant 0 : i32
    return %c0_i32, %c0_i32_0 : i32, i32
  }
  func.func @transform_3(%arg0: i32) -> (i32, i32) {
    %c0_i32 = arith.constant 0 : i32
    %c0_i32_0 = arith.constant 0 : i32
    %c0_i32_1 = arith.constant 0 : i32
    return %c0_i32, %c0_i32_0 : i32, i32
  }
  func.func @transform_4(%arg0: i32) -> (i32, i32) {
    %c0_i32 = arith.constant 0 : i32
    %c0_i32_0 = arith.constant 0 : i32
    %c0_i32_1 = arith.constant 0 : i32
    return %c0_i32, %c0_i32_0 : i32, i32
  }
  func.func @transform_5(%arg0: i32) -> (i32, i32) {
    %c0_i32 = arith.constant 0 : i32
    %c0_i32_0 = arith.constant 0 : i32
    %c0_i32_1 = arith.constant 0 : i32
    return %c0_i32, %c0_i32_0 : i32, i32
  }
  func.func @transform_6(%arg0: i32) -> (i32, i32) {
    %c0_i32 = arith.constant 0 : i32
    %c0_i32_0 = arith.constant 0 : i32
    %c0_i32_1 = arith.constant 0 : i32
    return %c0_i32, %c0_i32_0 : i32, i32
  }
  func.func @transform_7(%arg0: i32) -> (i32, i32) {
    %c0_i32 = arith.constant 0 : i32
    %c0_i32_0 = arith.constant 0 : i32
    %c0_i32_1 = arith.constant 0 : i32
    return %c0_i32, %c0_i32_0 : i32, i32
  }
  func.func @transform_8(%arg0: i32) -> (i32, i32) {
    %c0_i32 = arith.constant 0 : i32
    %c0_i32_0 = arith.constant 0 : i32
    %c0_i32_1 = arith.constant 0 : i32
    return %c0_i32, %c0_i32_0 : i32, i32
  }
  func.func @transform_9(%arg0: i32) -> (i32, i32) {
    %c0_i32 = arith.constant 0 : i32
    %c0_i32_0 = arith.constant 0 : i32
    %c0_i32_1 = arith.constant 0 : i32
    return %c0_i32, %c0_i32_0 : i32, i32
  }
  func.func @transform_10(%arg0: i32) -> (i32, i32) {
    %c0_i32 = arith.constant 0 : i32
    %c0_i32_0 = arith.constant 0 : i32
    %c0_i32_1 = arith.constant 0 : i32
    return %c0_i32, %c0_i32_0 : i32, i32
  }
  func.func @transform_11(%arg0: i32) -> (i32, i32) {
    %c0_i32 = arith.constant 0 : i32
    %c0_i32_0 = arith.constant 0 : i32
    %c0_i32_1 = arith.constant 0 : i32
    return %c0_i32, %c0_i32_0 : i32, i32
  }
}

</mosaic_0001>

<llo_original>
// kernel: gilmer_forward.3
$region0: #{gilmer_forward.3}
  #allocation0 [shape = 'u32[]', space=smem, size = 0x4, offset = 0x4, fixed_abs, tag = 'smem constant byte address 0x4 - core index']
  #allocation1 [shape = 'u32[144,128]{1,0:T(1,128)}', space=vmem, size = 0x12000, scoped, tag = 'internal scratch']
  #allocation2 [shape = 'f32[3,32]{1,0:T(4,128)}', space=vmem, size = 0x800, scoped, tag = 'scratch operand']
  #allocation3 [shape = 'f32[3,32]{1,0:T(4,128)}', space=vmem, size = 0x800, scoped, tag = 'scratch operand']
  #allocation4 [shape = 'f32[3,64]{1,0:T(4,128)}', space=vmem, size = 0x800, scoped, tag = 'scratch operand']
  #allocation5 [shape = 'f32[1,1]{1,0:T(1,128)S(1)}', space=vmem, size = 0x200, scoped, tag = 'scoped memory for gilmer_forward.3']
  %s0 = inlined_call_operand.vmem [shape: f32[32,48], index: 0, kind: input, shape index: {}]
  %s1 = inlined_call_operand.vmem [shape: f32[3,48], index: 1, kind: input, shape index: {}]
  %s2 = inlined_call_operand.vmem [shape: bf16[64,128], index: 2, kind: input, shape index: {}]
  %s3 = inlined_call_operand.vmem [shape: bf16[32,128], index: 3, kind: input, shape index: {}]
  %s4 = inlined_call_operand.vmem [shape: f32[1,128], index: 4, kind: input, shape index: {}]
  %s5 = inlined_call_operand.vmem [shape: bf16[3,3], index: 5, kind: input, shape index: {}]
  %s6 = inlined_call_operand.vmem [shape: bf16[64,32], index: 6, kind: input, shape index: {}]
  %s7 = inlined_call_operand.vmem [shape: bf16[3,32], index: 7, kind: input, shape index: {}]
  %s8 = inlined_call_operand.vmem [shape: f32[1,32], index: 8, kind: input, shape index: {}]
  %s9 = inlined_call_operand.vmem [shape: bf16[32,1], index: 9, kind: input, shape index: {}]
  %s10 = inlined_call_operand.<no memory space> [shape: f32[1,1], index: 10, kind: input, shape index: {}]
  %s11 = inlined_call_operand.vmem [shape: f32[3,1], index: 11, kind: output, shape index: {}]
  %s12 = sld [smem:[#allocation0]]
  $region85: #{gilmer_forward.3} parent=0
    _
  %s14 = ssub.s32 1, %s12
  %s15 = scalar_select 0, %s14, %s12
  %v16 = vstv %s10
  %17 = vst [vmem:[#allocation5] sm:$0x1] %v16
  loop: start=0, step=1, limit=5
  $region2: #{gilmer_forward.3} parent=0 // loop_pre_header
    _
  $region3: #{gilmer_forward.3} parent=0 // loop_header
    %s19 = sphi 0, %s23
    %p20 = scmp.ge.s32.totalorder %s19, 5
    %s27 = sphi 0, %s27
    %s29 = sphi 0, %s27
    %s30 = sphi 0, %s29
    %s44 = sphi 0, %s30
    %s48 = sphi 0, %s48
    %s50 = sphi 0, %s48
    %s51 = sphi 0, %s50
    %s65 = sphi 0, %s51
    %s69 = sphi 0, %s69
    %s71 = sphi 0, %s69
    %s72 = sphi 0, %s71
    %s86 = sphi 0, %s72
    %s90 = sphi 0, %s90
    %s92 = sphi 0, %s90
    %s93 = sphi 0, %s92
    %s107 = sphi 0, %s93
    %s111 = sphi 0, %s111
    %s113 = sphi 0, %s111
    %s114 = sphi 0, %s113
    %s128 = sphi 0, %s114
    %s132 = sphi 0, %s132
    %s134 = sphi 0, %s132
    %s135 = sphi 0, %s134
    %s149 = sphi 0, %s135
    %s153 = sphi 0, %s153
    %s155 = sphi 0, %s153
    %s156 = sphi 0, %s155
    %s170 = sphi 0, %s156
    %s174 = sphi 0, %s174
    %s176 = sphi 0, %s174
    %s177 = sphi 0, %s176
    %s191 = sphi 0, %s177
    %s195 = sphi 0, %s195
    %s197 = sphi 0, %s195
    %s198 = sphi 0, %s197
    %s212 = sphi 0, %s198
    %s216 = sphi 0, %s216
    %s218 = sphi 0, %s216
    %s219 = sphi 0, %s218
    %s233 = sphi 0, %s219
    %s237 = sphi 0, %s237
    %s239 = sphi 0, %s237
    %s240 = sphi 0, %s239
    %s254 = sphi 0, %s240
    %s258 = sphi 0, %s258
    %s260 = sphi 0, %s258
    %s261 = sphi 0, %s260
    %s275 = sphi 0, %s261
  $region4: #{gilmer_forward.3} parent=0 // loop_header_branch
    %22 = sbr.rel (%p20) target = $region8
  $region5: #{gilmer_forward.3} parent=0 // loop_body
    %s24 = ssub.s32 %s19, 1
    %s25 = ssub.s32 %s19, 2
    %s26 = sadd.s32 %s19, 1
    %s28 = sadd.s32 %s27, 1
    %p31 = scmp.eq.s32.totalorder %s19, 2
    %p32 = scmp.ne.s32.totalorder %s27, %s29
    %p33 = scmp.eq.s32.totalorder %s19, 0
    %p34 = por %p32, %p33
    %p35 = scmp.ne.s32.totalorder %s27, %s29
    %p36 = scmp.eq.s32.totalorder %s24, 2
    %p37 = por %p35, %p36
    %p38 = scmp.ne.s32.totalorder %s29, %s30
    %p39 = scmp.eq.s32.totalorder %s24, 0
    %p40 = por %p38, %p39
    %p41 = scmp.ne.s32.totalorder %s29, %s30
    %p42 = scmp.eq.s32.totalorder %s25, 2
    %p43 = por %p41, %p42
    %p45 = scmp.ne.s32.totalorder %s30, %s44
    %p46 = scmp.eq.s32.totalorder %s25, 0
    %p47 = por %p45, %p46
    %s49 = sadd.s32 %s48, 1
    %p52 = scmp.eq.s32.totalorder %s19, 2
    %p53 = scmp.ne.s32.totalorder %s48, %s50
    %p54 = scmp.eq.s32.totalorder %s19, 0
    %p55 = por %p53, %p54
    %p56 = scmp.ne.s32.totalorder %s48, %s50
    %p57 = scmp.eq.s32.totalorder %s24, 2
    %p58 = por %p56, %p57
    %p59 = scmp.ne.s32.totalorder %s50, %s51
    %p60 = scmp.eq.s32.totalorder %s24, 0
    %p61 = por %p59, %p60
    %p62 = scmp.ne.s32.totalorder %s50, %s51
    %p63 = scmp.eq.s32.totalorder %s25, 2
    %p64 = por %p62, %p63
    %p66 = scmp.ne.s32.totalorder %s51, %s65
    %p67 = scmp.eq.s32.totalorder %s25, 0
    %p68 = por %p66, %p67
    %s70 = sadd.s32 %s69, 1
    %p73 = scmp.eq.s32.totalorder %s19, 2
    %p74 = scmp.ne.s32.totalorder %s69, %s71
    %p75 = scmp.eq.s32.totalorder %s19, 0
    %p76 = por %p74, %p75
    %p77 = scmp.ne.s32.totalorder %s69, %s71
    %p78 = scmp.eq.s32.totalorder %s24, 2
    %p79 = por %p77, %p78
    %p80 = scmp.ne.s32.totalorder %s71, %s72
    %p81 = scmp.eq.s32.totalorder %s24, 0
    %p82 = por %p80, %p81
    %p83 = scmp.ne.s32.totalorder %s71, %s72
    %p84 = scmp.eq.s32.totalorder %s25, 2
    %p85 = por %p83, %p84
    %p87 = scmp.ne.s32.totalorder %s72, %s86
    %p88 = scmp.eq.s32.totalorder %s25, 0
    %p89 = por %p87, %p88
    %s91 = sadd.s32 %s90, 1
    %p94 = scmp.eq.s32.totalorder %s19, 2
    %p95 = scmp.ne.s32.totalorder %s90, %s92
    %p96 = scmp.eq.s32.totalorder %s19, 0
    %p97 = por %p95, %p96
    %p98 = scmp.ne.s32.totalorder %s90, %s92
    %p99 = scmp.eq.s32.totalorder %s24, 2
    %p100 = por %p98, %p99
    %p101 = scmp.ne.s32.totalorder %s92, %s93
    %p102 = scmp.eq.s32.totalorder %s24, 0
    %p103 = por %p101, %p102
    %p104 = scmp.ne.s32.totalorder %s92, %s93
    %p105 = scmp.eq.s32.totalorder %s25, 2
    %p106 = por %p104, %p105
    %p108 = scmp.ne.s32.totalorder %s93, %s107
    %p109 = scmp.eq.s32.totalorder %s25, 0
    %p110 = por %p108, %p109
    %s112 = sadd.s32 %s111, 1
    %p115 = scmp.eq.s32.totalorder %s19, 2
    %p116 = scmp.ne.s32.totalorder %s111, %s113
    %p117 = scmp.eq.s32.totalorder %s19, 0
    %p118 = por %p116, %p117
    %p119 = scmp.ne.s32.totalorder %s111, %s113
    %p120 = scmp.eq.s32.totalorder %s24, 2
    %p121 = por %p119, %p120
    %p122 = scmp.ne.s32.totalorder %s113, %s114
    %p123 = scmp.eq.s32.totalorder %s24, 0
    %p124 = por %p122, %p123
    %p125 = scmp.ne.s32.totalorder %s113, %s114
    %p126 = scmp.eq.s32.totalorder %s25, 2
    %p127 = por %p125, %p126
    %p129 = scmp.ne.s32.totalorder %s114, %s128
    %p130 = scmp.eq.s32.totalorder %s25, 0
    %p131 = por %p129, %p130
    %s133 = sadd.s32 %s132, 1
    %p136 = scmp.eq.s32.totalorder %s19, 2
    %p137 = scmp.ne.s32.totalorder %s132, %s134
    %p138 = scmp.eq.s32.totalorder %s19, 0
    %p139 = por %p137, %p138
    %p140 = scmp.ne.s32.totalorder %s132, %s134
    %p141 = scmp.eq.s32.totalorder %s24, 2
    %p142 = por %p140, %p141
    %p143 = scmp.ne.s32.totalorder %s134, %s135
    %p144 = scmp.eq.s32.totalorder %s24, 0
    %p145 = por %p143, %p144
    %p146 = scmp.ne.s32.totalorder %s134, %s135
    %p147 = scmp.eq.s32.totalorder %s25, 2
    %p148 = por %p146, %p147
    %p150 = scmp.ne.s32.totalorder %s135, %s149
    %p151 = scmp.eq.s32.totalorder %s25, 0
    %p152 = por %p150, %p151
    %s154 = sadd.s32 %s153, 1
    %p157 = scmp.eq.s32.totalorder %s19, 2
    %p158 = scmp.ne.s32.totalorder %s153, %s155
    %p159 = scmp.eq.s32.totalorder %s19, 0
    %p160 = por %p158, %p159
    %p161 = scmp.ne.s32.totalorder %s153, %s155
    %p162 = scmp.eq.s32.totalorder %s24, 2
    %p163 = por %p161, %p162
    %p164 = scmp.ne.s32.totalorder %s155, %s156
    %p165 = scmp.eq.s32.totalorder %s24, 0
    %p166 = por %p164, %p165
    %p167 = scmp.ne.s32.totalorder %s155, %s156
    %p168 = scmp.eq.s32.totalorder %s25, 2
    %p169 = por %p167, %p168
    %p171 = scmp.ne.s32.totalorder %s156, %s170
    %p172 = scmp.eq.s32.totalorder %s25, 0
    %p173 = por %p171, %p172
    %s175 = sadd.s32 %s174, 1
    %p178 = scmp.eq.s32.totalorder %s19, 2
    %p179 = scmp.ne.s32.totalorder %s174, %s176
    %p180 = scmp.eq.s32.totalorder %s19, 0
    %p181 = por %p179, %p180
    %p182 = scmp.ne.s32.totalorder %s174, %s176
    %p183 = scmp.eq.s32.totalorder %s24, 2
    %p184 = por %p182, %p183
    %p185 = scmp.ne.s32.totalorder %s176, %s177
    %p186 = scmp.eq.s32.totalorder %s24, 0
    %p187 = por %p185, %p186
    %p188 = scmp.ne.s32.totalorder %s176, %s177
    %p189 = scmp.eq.s32.totalorder %s25, 2
    %p190 = por %p188, %p189
    %p192 = scmp.ne.s32.totalorder %s177, %s191
    %p193 = scmp.eq.s32.totalorder %s25, 0
    %p194 = por %p192, %p193
    %s196 = sadd.s32 %s195, 1
    %p199 = scmp.eq.s32.totalorder %s19, 2
    %p200 = scmp.ne.s32.totalorder %s195, %s197
    %p201 = scmp.eq.s32.totalorder %s19, 0
    %p202 = por %p200, %p201
    %p203 = scmp.ne.s32.totalorder %s195, %s197
    %p204 = scmp.eq.s32.totalorder %s24, 2
    %p205 = por %p203, %p204
    %p206 = scmp.ne.s32.totalorder %s197, %s198
    %p207 = scmp.eq.s32.totalorder %s24, 0
    %p208 = por %p206, %p207
    %p209 = scmp.ne.s32.totalorder %s197, %s198
    %p210 = scmp.eq.s32.totalorder %s25, 2
    %p211 = por %p209, %p210
    %p213 = scmp.ne.s32.totalorder %s198, %s212
    %p214 = scmp.eq.s32.totalorder %s25, 0
    %p215 = por %p213, %p214
    %s217 = sadd.s32 %s216, 1
    %p220 = scmp.eq.s32.totalorder %s19, 2
    %p221 = scmp.ne.s32.totalorder %s216, %s218
    %p222 = scmp.eq.s32.totalorder %s19, 0
    %p223 = por %p221, %p222
    %p224 = scmp.ne.s32.totalorder %s216, %s218
    %p225 = scmp.eq.s32.totalorder %s24, 2
    %p226 = por %p224, %p225
    %p227 = scmp.ne.s32.totalorder %s218, %s219
    %p228 = scmp.eq.s32.totalorder %s24, 0
    %p229 = por %p227, %p228
    %p230 = scmp.ne.s32.totalorder %s218, %s219
    %p231 = scmp.eq.s32.totalorder %s25, 2
    %p232 = por %p230, %p231
    %p234 = scmp.ne.s32.totalorder %s219, %s233
    %p235 = scmp.eq.s32.totalorder %s25, 0
    %p236 = por %p234, %p235
    %s238 = sadd.s32 %s237, 1
    %p241 = scmp.eq.s32.totalorder %s19, 2
    %p242 = scmp.ne.s32.totalorder %s237, %s239
    %p243 = scmp.eq.s32.totalorder %s19, 0
    %p244 = por %p242, %p243
    %p245 = scmp.ne.s32.totalorder %s237, %s239
    %p246 = scmp.eq.s32.totalorder %s24, 2
    %p247 = por %p245, %p246
    %p248 = scmp.ne.s32.totalorder %s239, %s240
    %p249 = scmp.eq.s32.totalorder %s24, 0
    %p250 = por %p248, %p249
    %p251 = scmp.ne.s32.totalorder %s239, %s240
    %p252 = scmp.eq.s32.totalorder %s25, 2
    %p253 = por %p251, %p252
    %p255 = scmp.ne.s32.totalorder %s240, %s254
    %p256 = scmp.eq.s32.totalorder %s25, 0
    %p257 = por %p255, %p256
    %s259 = sadd.s32 %s258, 1
    %p262 = scmp.eq.s32.totalorder %s19, 2
    %p263 = scmp.ne.s32.totalorder %s258, %s260
    %p264 = scmp.eq.s32.totalorder %s19, 0
    %p265 = por %p263, %p264
    %p266 = scmp.ne.s32.totalorder %s258, %s260
    %p267 = scmp.eq.s32.totalorder %s24, 2
    %p268 = por %p266, %p267
    %p269 = scmp.ne.s32.totalorder %s260, %s261
    %p270 = scmp.eq.s32.totalorder %s24, 0
    %p271 = por %p269, %p270
    %p272 = scmp.ne.s32.totalorder %s260, %s261
    %p273 = scmp.eq.s32.totalorder %s25, 2
    %p274 = por %p272, %p273
    %p276 = scmp.ne.s32.totalorder %s261, %s275
    %p277 = scmp.eq.s32.totalorder %s25, 0
    %p278 = por %p276, %p277
    %p279 = scmp.le.s32.totalorder 1, %s19
    %p280 = scmp.lt.s32.totalorder %s19, 4
    %p281 = pnand %p279, %p280
    %p282 = pneg %p281
    // Predicated region
    $region9: #{gilmer_forward.3} parent=5 // pred_check
      _
    $region10: #{gilmer_forward.3} parent=5 // pred_check_branch
      %284 = sbr.rel (%p281) target = $region12
    $region11: #{gilmer_forward.3} parent=5 // pred_region
      %s285 = ssub.s32 %s19, 1
      // Predicated region
      $region13: #{gilmer_forward.3} parent=11 // pred_check
        %p286 = pneg %p40
      $region14: #{gilmer_forward.3} parent=11 // pred_check_branch
        %288 = sbr.rel (%p286) target = $region16
      $region15: #{gilmer_forward.3} parent=11 // pred_region
        _
      $region16: #{gilmer_forward.3} parent=11 // pred_fallthru
        _
      // Predicated region
      $region17: #{gilmer_forward.3} parent=11 // pred_check
        %p289 = pneg %p61
      $region18: #{gilmer_forward.3} parent=11 // pred_check_branch
        %291 = sbr.rel (%p289) target = $region20
      $region19: #{gilmer_forward.3} parent=11 // pred_region
        _
      $region20: #{gilmer_forward.3} parent=11 // pred_fallthru
        _
      // Predicated region
      $region21: #{gilmer_forward.3} parent=11 // pred_check
        %p292 = pneg %p82
      $region22: #{gilmer_forward.3} parent=11 // pred_check_branch
        %294 = sbr.rel (%p292) target = $region24
      $region23: #{gilmer_forward.3} parent=11 // pred_region
        _
      $region24: #{gilmer_forward.3} parent=11 // pred_fallthru
        _
      // Predicated region
      $region25: #{gilmer_forward.3} parent=11 // pred_check
        %p295 = pneg %p103
      $region26: #{gilmer_forward.3} parent=11 // pred_check_branch
        %297 = sbr.rel (%p295) target = $region28
      $region27: #{gilmer_forward.3} parent=11 // pred_region
        _
      $region28: #{gilmer_forward.3} parent=11 // pred_fallthru
        _
      // Predicated region
      $region29: #{gilmer_forward.3} parent=11 // pred_check
        %p298 = pneg %p124
      $region30: #{gilmer_forward.3} parent=11 // pred_check_branch
        %300 = sbr.rel (%p298) target = $region32
      $region31: #{gilmer_forward.3} parent=11 // pred_region
        _
      $region32: #{gilmer_forward.3} parent=11 // pred_fallthru
        _
      // Predicated region
      $region33: #{gilmer_forward.3} parent=11 // pred_check
        %p301 = pneg %p145
      $region34: #{gilmer_forward.3} parent=11 // pred_check_branch
        %303 = sbr.rel (%p301) target = $region36
      $region35: #{gilmer_forward.3} parent=11 // pred_region
        _
      $region36: #{gilmer_forward.3} parent=11 // pred_fallthru
        _
      // Predicated region
      $region37: #{gilmer_forward.3} parent=11 // pred_check
        %p304 = pneg %p166
      $region38: #{gilmer_forward.3} parent=11 // pred_check_branch
        %306 = sbr.rel (%p304) target = $region40
      $region39: #{gilmer_forward.3} parent=11 // pred_region
        _
      $region40: #{gilmer_forward.3} parent=11 // pred_fallthru
        _
      // Predicated region
      $region41: #{gilmer_forward.3} parent=11 // pred_check
        %p307 = pneg %p187
      $region42: #{gilmer_forward.3} parent=11 // pred_check_branch
        %309 = sbr.rel (%p307) target = $region44
      $region43: #{gilmer_forward.3} parent=11 // pred_region
        _
      $region44: #{gilmer_forward.3} parent=11 // pred_fallthru
        _
      // Predicated region
      $region45: #{gilmer_forward.3} parent=11 // pred_check
        %p310 = pneg %p208
      $region46: #{gilmer_forward.3} parent=11 // pred_check_branch
        %312 = sbr.rel (%p310) target = $region48
      $region47: #{gilmer_forward.3} parent=11 // pred_region
        _
      $region48: #{gilmer_forward.3} parent=11 // pred_fallthru
        _
      // Predicated region
      $region49: #{gilmer_forward.3} parent=11 // pred_check
        %p313 = pneg %p229
      $region50: #{gilmer_forward.3} parent=11 // pred_check_branch
        %315 = sbr.rel (%p313) target = $region52
      $region51: #{gilmer_forward.3} parent=11 // pred_region
        _
      $region52: #{gilmer_forward.3} parent=11 // pred_fallthru
        _
      // Predicated region
      $region53: #{gilmer_forward.3} parent=11 // pred_check
        %p316 = pneg %p250
      $region54: #{gilmer_forward.3} parent=11 // pred_check_branch
        %318 = sbr.rel (%p316) target = $region56
      $region55: #{gilmer_forward.3} parent=11 // pred_region
        _
      $region56: #{gilmer_forward.3} parent=11 // pred_fallthru
        _
    $region12: #{gilmer_forward.3} parent=5 // pred_fallthru
      _
    %p319 = scmp.lt.s32.totalorder %s19, 3
    // Predicated region
    $region57: #{gilmer_forward.3} parent=5 // pred_check
      %p320 = pneg %p319
    $region58: #{gilmer_forward.3} parent=5 // pred_check_branch
      %322 = sbr.rel (%p320) target = $region60
    $region59: #{gilmer_forward.3} parent=5 // pred_region
      _
    $region60: #{gilmer_forward.3} parent=5 // pred_fallthru
      _
    %p323 = scmp.le.s32.totalorder 1, %s19
    %p324 = scmp.lt.s32.totalorder %s19, 4
    %p325 = pnand %p323, %p324
    %p326 = pneg %p325
    // Predicated region
    $region61: #{gilmer_forward.3} parent=5 // pred_check
      _
    $region62: #{gilmer_forward.3} parent=5 // pred_check_branch
      %328 = sbr.rel (%p325) target = $region64
    $region63: #{gilmer_forward.3} parent=5 // pred_region
      %s329 = ssub.s32 %s19, 1
      %p330 = pneg %p40
      %p331 = pneg %p37
      %p332 = pneg %p61
      %p333 = pneg %p58
      %p334 = pneg %p82
      %p335 = pneg %p79
      %p336 = pneg %p103
      %p337 = pneg %p100
      %p338 = pneg %p124
      %p339 = pneg %p121
      %p340 = pneg %p145
      %p341 = pneg %p142
      %p342 = pneg %p166
      %p343 = pneg %p163
      %p344 = pneg %p187
      %p345 = pneg %p184
      %p346 = pneg %p208
      %p347 = pneg %p205
      %p348 = pneg %p229
      %p349 = pneg %p226
      %p350 = pneg %p250
      %p351 = pneg %p247
      %p352 = pneg %p271
      %p353 = pneg %p268
      %p355 = scmp.eq.s32.totalorder %s24, 0
      // Predicated region
      $region65: #{gilmer_forward.3} parent=63 // pred_check
        %p356 = pneg %p355
      $region66: #{gilmer_forward.3} parent=63 // pred_check_branch
        %358 = sbr.rel (%p356) target = $region68
      $region67: #{gilmer_forward.3} parent=63 // pred_region
        %vm359 = vcmask 256000
        %360 = vst.msk [vmem:[#allocation2] sm:$0x7] %vm359, 0.0
        %361 = vst.msk [vmem:[#allocation3] sm:$0x7] %vm359, 0.0
        %vm362 = vcmask 518144
        %363 = vst.msk [vmem:[#allocation4] sm:$0x7] %vm362, 0.0
      $region68: #{gilmer_forward.3} parent=63 // pred_fallthru
        _
      %v364 = vld [vmem:[#allocation4] sm:$0x7]
      %v365 = vld [vmem:[#allocation2] sm:$0x7]
      %v366 = vld [vmem:[#allocation3] sm:$0x7]
      %v367 = vpack.c.bf16 %v364, %v364
      %v368 = vld [vmem:[%s2] sm:$0xf]
      %v369 = vld [vmem:[%s2 + $0x4] sm:$0xf]
      %v370 = vld [vmem:[%s2 + $0x8] sm:$0xf]
      %v371 = vld [vmem:[%s2 + $0xc] sm:$0xf]
      %v372 = vld [vmem:[%s2 + $0x10] sm:$0xf]
      %v373 = vld [vmem:[%s2 + $0x14] sm:$0xf]
      %v374 = vld [vmem:[%s2 + $0x18] sm:$0xf]
      %v375 = vld [vmem:[%s2 + $0x1c] sm:$0xf]
      %v376 = vpack.c.bf16 %v365, %v365
      %v377 = vld [vmem:[%s3] sm:$0xf]
      %v378 = vld [vmem:[%s3 + $0x4] sm:$0xf]
      %v379 = vld [vmem:[%s3 + $0x8] sm:$0xf]
      %v380 = vld [vmem:[%s3 + $0xc] sm:$0xf]
      %v385 = vunpack.c.l.b16 %v377
      %v386 = vunpack.c.l.b16 %v378
      %v387 = vunpack.c.l.b16 %v379
      %v388 = vunpack.c.l.b16 %v380
      %v389 = vpack.c.b16 %v386, %v385
      %v390 = vpack.c.b16 %v388, %v387
      %vm393 = vcmask 261120
      %v395 = vsel %vm393, %v376, 0
      %397 = vmatprep.subr.bf16.mxu0 0
      %398 = vmatpush1.bf16.msra.mxu0 %v389
      %399 = vmatprep.subr.bf16.mxu0 0
      %400 = vmatpush1.bf16.msra.mxu0 %v390
      %401 = vmatprep.subr.bf16.mxu0 0
      %402 = vmatpush1.bf16.msra.mxu0 0
      %403 = vmatprep.subr.bf16.mxu0 0
      %404 = vmatpush1.bf16.msra.mxu0 0
      %405 = vmatprep.subr.bf16.mxu0 0
      %406 = vmatpush1.bf16.msra.mxu0 0
      %407 = vmatprep.subr.bf16.mxu0 0
      %408 = vmatpush1.bf16.msra.mxu0 0
      %409 = vmatprep.subr.bf16.mxu0 0
      %410 = vmatpush1.bf16.msra.mxu0 0
      %411 = vmatprep.subr.bf16.mxu0 0
      %412 = vmatpush1.bf16.msra.mxu0 0
      %413 = vmatprep.subr.bf16.mxu0 0
      %414 = vmatpush1.bf16.msra.mxu0 0
      %415 = vmatprep.subr.bf16.mxu0 0
      %416 = vmatpush1.bf16.msra.mxu0 0
      %417 = vmatprep.subr.bf16.mxu0 0
      %418 = vmatpush1.bf16.msra.mxu0 0
      %419 = vmatprep.subr.bf16.mxu0 0
      %420 = vmatpush1.bf16.msra.mxu0 0
      %421 = vmatprep.subr.bf16.mxu0 0
      %422 = vmatpush1.bf16.msra.mxu0 0
      %423 = vmatprep.subr.bf16.mxu0 0
      %424 = vmatpush1.bf16.msra.mxu0 0
      %425 = vmatprep.subr.bf16.mxu0 0
      %426 = vmatpush1.bf16.msra.mxu0 0
      %427 = vmatprep.subr.bf16.mxu0 0
      %428 = vmatpush1.bf16.msra.mxu0 0
      %429 = vmatprep.mubr.bf16.mxu0 0
      %430 = vmatmul.mubr.bf16.gmra.mrb[0].mxu0 %v395
      %v431 = vpop.f32.mrb[0].mxu0
      %v432 = vadd.f32 0.0, %v431
      %v433 = vpop.f32.mrb[0].mxu0
      %v434 = vpop.f32.mrb[0].mxu0
      %v435 = vpop.f32.mrb[0].mxu0
      %436 = vdwg.mxu0
      %v445 = vunpack.c.l.b16 %v368
      %v446 = vunpack.c.l.b16 %v369
      %v447 = vunpack.c.l.b16 %v370
      %v448 = vunpack.c.l.b16 %v371
      %v449 = vunpack.c.l.b16 %v372
      %v450 = vunpack.c.l.b16 %v373
      %v451 = vunpack.c.l.b16 %v374
      %v452 = vunpack.c.l.b16 %v375
      %v453 = vpack.c.b16 %v446, %v445
      %v454 = vpack.c.b16 %v448, %v447
      %v455 = vpack.c.b16 %v450, %v449
      %v456 = vpack.c.b16 %v452, %v451
      %vm461 = vcmask 523264
      %v463 = vsel %vm461, %v367, 0
      %465 = vmatprep.subr.bf16.mxu0 0
      %466 = vmatpush1.bf16.msra.mxu0 %v453
      %467 = vmatprep.subr.bf16.mxu0 0
      %468 = vmatpush1.bf16.msra.mxu0 %v454
      %469 = vmatprep.subr.bf16.mxu0 0
      %470 = vmatpush1.bf16.msra.mxu0 %v455
      %471 = vmatprep.subr.bf16.mxu0 0
      %472 = vmatpush1.bf16.msra.mxu0 %v456
      %473 = vmatprep.subr.bf16.mxu0 0
      %474 = vmatpush1.bf16.msra.mxu0 0
      %475 = vmatprep.subr.bf16.mxu0 0
      %476 = vmatpush1.bf16.msra.mxu0 0
      %477 = vmatprep.subr.bf16.mxu0 0
      %478 = vmatpush1.bf16.msra.mxu0 0
      %479 = vmatprep.subr.bf16.mxu0 0
      %480 = vmatpush1.bf16.msra.mxu0 0
      %481 = vmatprep.subr.bf16.mxu0 0
      %482 = vmatpush1.bf16.msra.mxu0 0
      %483 = vmatprep.subr.bf16.mxu0 0
      %484 = vmatpush1.bf16.msra.mxu0 0
      %485 = vmatprep.subr.bf16.mxu0 0
      %486 = vmatpush1.bf16.msra.mxu0 0
      %487 = vmatprep.subr.bf16.mxu0 0
      %488 = vmatpush1.bf16.msra.mxu0 0
      %489 = vmatprep.subr.bf16.mxu0 0
      %490 = vmatpush1.bf16.msra.mxu0 0
      %491 = vmatprep.subr.bf16.mxu0 0
      %492 = vmatpush1.bf16.msra.mxu0 0
      %493 = vmatprep.subr.bf16.mxu0 0
      %494 = vmatpush1.bf16.msra.mxu0 0
      %495 = vmatprep.subr.bf16.mxu0 0
      %496 = vmatpush1.bf16.msra.mxu0 0
      %497 = vmatprep.mubr.bf16.mxu0 0
      %498 = vmatmul.mubr.bf16.gmra.mrb[0].mxu0 %v463
      %v499 = vpop.f32.mrb[0].mxu0
      %v500 = vadd.f32 %v432, %v499
      %v501 = vpop.f32.mrb[0].mxu0
      %v502 = vpop.f32.mrb[0].mxu0
      %v503 = vpop.f32.mrb[0].mxu0
      %504 = vdwg.mxu0
      %v505 = vld [vmem:[%s4] sm:$0x1]
      %v507 = vlaneseq
      %v508 = vshrl.u32 %v507, 7
      %v509 = vsub.s32 0, %v508
      %v510 = vrot.slane %v505, %v509
      %v512 = vadd.f32 %v500, %v510
      %v513 = vxor.u32 %v512, 2147483648
      %v514 = vmul.f32 %v513, 1.442695
      %v515 = vpow.pop %v514
      %v516 = vadd.f32 %v515, 1.0
      %v517 = vrcp.pop %v516
      %v518 = vmul.f32 1.0, %v517
      %v519 = vtanh.pop %v512
      %521 = vrot.lane.b32.xlu0 %v366, 32
      %v522 = vpop.permute.xlu0 %521
      %v524 = vmul.f32 %v518, %v522
      %526 = vrot.lane.b32.xlu0 %v519, 64
      %v527 = vpop.permute.xlu0 %526
      %v529 = vmul.f32 %v518, %v527
      %531 = vrot.lane.b32.xlu0 %v529, 32
      %v532 = vpop.permute.xlu0 %531
      %v534 = vadd.f32 %v524, %v532
      %v535 = vtanh.pop %v534
      %537 = vrot.lane.b32.xlu0 %v535, 64
      %v538 = vpop.permute.xlu0 %537
      %v540 = vmul.f32 %v518, %v538
      %v541 = vld [vmem:[%s0] sm:$0xff]
      %v542 = vld [vmem:[%s0 + $0x8] sm:$0xff]
      %v543 = vld [vmem:[%s0 + $0x10] sm:$0xff]
      %v544 = vld [vmem:[%s0 + $0x18] sm:$0xff]
      %v545 = vpack.c.bf16 %v542, %v541
      %v546 = vpack.c.bf16 %v544, %v543
      %v547 = vld [vmem:[%s1] sm:$0x7]
      %v548 = vpack.c.bf16 %v540, %v540
      %550 = vrot.lane.b32.xlu0 %v548, 32
      %v551 = vpop.permute.xlu0 %550
      %v553 = vsel %vm393, %v551, 0
      %555 = vmatprep.subr.bf16.mxu0 0
      %556 = vmatpush1.bf16.msra.mxu0 %v545
      %557 = vmatprep.subr.bf16.mxu0 0
      %558 = vmatpush1.bf16.msra.mxu0 %v546
      %559 = vmatprep.subr.bf16.mxu0 0
      %560 = vmatpush1.bf16.msra.mxu0 0
      %561 = vmatprep.subr.bf16.mxu0 0
      %562 = vmatpush1.bf16.msra.mxu0 0
      %563 = vmatprep.subr.bf16.mxu0 0
      %564 = vmatpush1.bf16.msra.mxu0 0
      %565 = vmatprep.subr.bf16.mxu0 0
      %566 = vmatpush1.bf16.msra.mxu0 0
      %567 = vmatprep.subr.bf16.mxu0 0
      %568 = vmatpush1.bf16.msra.mxu0 0
      %569 = vmatprep.subr.bf16.mxu0 0
      %570 = vmatpush1.bf16.msra.mxu0 0
      %571 = vmatprep.subr.bf16.mxu0 0
      %572 = vmatpush1.bf16.msra.mxu0 0
      %573 = vmatprep.subr.bf16.mxu0 0
      %574 = vmatpush1.bf16.msra.mxu0 0
      %575 = vmatprep.subr.bf16.mxu0 0
      %576 = vmatpush1.bf16.msra.mxu0 0
      %577 = vmatprep.subr.bf16.mxu0 0
      %578 = vmatpush1.bf16.msra.mxu0 0
      %579 = vmatprep.subr.bf16.mxu0 0
      %580 = vmatpush1.bf16.msra.mxu0 0
      %581 = vmatprep.subr.bf16.mxu0 0
      %582 = vmatpush1.bf16.msra.mxu0 0
      %583 = vmatprep.subr.bf16.mxu0 0
      %584 = vmatpush1.bf16.msra.mxu0 0
      %585 = vmatprep.subr.bf16.mxu0 0
      %586 = vmatpush1.bf16.msra.mxu0 0
      %587 = vmatprep.mubr.bf16.mxu0 0
      %588 = vmatmul.mubr.bf16.gmra.mrb[0].mxu0 %v553
      %v589 = vpop.f32.mrb[0].mxu0
      %v590 = vadd.f32 0.0, %v589
      %v591 = vpop.f32.mrb[0].mxu0
      %v592 = vpop.f32.mrb[0].mxu0
      %v593 = vpop.f32.mrb[0].mxu0
      %594 = vdwg.mxu0
      %vm595 = vcmp.gt.f32.partialorder %v547, 0.0
      %v596 = vsel %vm595, %v590, -1e+30
      %vm597 = vcmask 387072
      %v598 = vsel %vm597, %v596, -inf
      %599 = vmax.xlane.f32.xlu0 %v598
      %v600 = vpop.xlane.xlu0 %599
      %v601 = vsub.f32 %v596, %v600
      %v602 = vmul.f32 %v601, 1.442695
      %v603 = vpow.pop %v602
      %v604 = vmul.f32 %v603, %v547
      %v605 = vsel %vm597, %v604, 0.0
      %606 = vadd.xlane.f32.xlu0 %v605
      %v607 = vpop.xlane.xlu0 %606
      %v608 = vmax.f32 %v607, 1e-16
      %v609 = vrcp.pop %v608
      %v610 = vmul.f32 %v604, %v609
      %v611 = vpack.c.bf16 %v610, %v610
      %vm612 = vcmask 392192
      %v614 = vsel %vm612, %v611, 0
      %v617 = vsel %vm612, %v545, 0
      %v620 = vsel %vm612, %v546, 0
      %622 = vmatprep.subr.bf16.mxu0 0
      %623 = vmatpush1.bf16.xpose.msra.mxu0 %v617
      %624 = vmatprep.subr.bf16.mxu0 0
      %625 = vmatpush1.bf16.xpose.msra.mxu0 %v620
      %626 = vmatprep.subr.bf16.mxu0 0
      %627 = vmatpush1.bf16.xpose.msra.mxu0 0
      %628 = vmatprep.subr.bf16.mxu0 0
      %629 = vmatpush1.bf16.xpose.msra.mxu0 0
      %630 = vmatprep.subr.bf16.mxu0 0
      %631 = vmatpush1.bf16.xpose.msra.mxu0 0
      %632 = vmatprep.subr.bf16.mxu0 0
      %633 = vmatpush1.bf16.xpose.msra.mxu0 0
      %634 = vmatprep.subr.bf16.mxu0 0
      %635 = vmatpush1.bf16.xpose.msra.mxu0 0
      %636 = vmatprep.subr.bf16.mxu0 0
      %637 = vmatpush1.bf16.xpose.msra.mxu0 0
      %638 = vmatprep.subr.bf16.mxu0 0
      %639 = vmatpush1.bf16.xpose.msra.mxu0 0
      %640 = vmatprep.subr.bf16.mxu0 0
      %641 = vmatpush1.bf16.xpose.msra.mxu0 0
      %642 = vmatprep.subr.bf16.mxu0 0
      %643 = vmatpush1.bf16.xpose.msra.mxu0 0
      %644 = vmatprep.subr.bf16.mxu0 0
      %645 = vmatpush1.bf16.xpose.msra.mxu0 0
      %646 = vmatprep.subr.bf16.mxu0 0
      %647 = vmatpush1.bf16.xpose.msra.mxu0 0
      %648 = vmatprep.subr.bf16.mxu0 0
      %649 = vmatpush1.bf16.xpose.msra.mxu0 0
      %650 = vmatprep.subr.bf16.mxu0 0
      %651 = vmatpush1.bf16.xpose.msra.mxu0 0
      %652 = vmatprep.subr.bf16.mxu0 0
      %653 = vmatpush1.bf16.xpose.msra.mxu0 0
      %654 = vmatprep.mubr.bf16.mxu0 0
      %655 = vmatmul.mubr.bf16.gmra.mrb[0].mxu0 %v614
      %v656 = vpop.f32.mrb[0].mxu0
      %v657 = vadd.f32 0.0, %v656
      %v658 = vpop.f32.mrb[0].mxu0
      %v659 = vpop.f32.mrb[0].mxu0
      %v660 = vpop.f32.mrb[0].mxu0
      %661 = vdwg.mxu0
      %663 = vrot.lane.b32.xlu0 %v540, 32
      %v664 = vpop.permute.xlu0 %663
      %vm666 = vcmask 256000
      %667 = vst.msk [vmem:[#allocation2] sm:$0x7] %vm666, %v664
      %669 = vrot.lane.b32.xlu0 %v534, 96
      %v670 = vpop.permute.xlu0 %669
      %672 = vst.msk [vmem:[#allocation3] sm:$0x7] %vm666, %v670
      %673 = vst.msk [vmem:[#allocation4] sm:$0x7] %vm666, %v664
      %675 = vrot.lane.b32.xlu0 %v657, 32
      %v676 = vpop.permute.xlu0 %675
      %vm678 = vcmask 518400
      %679 = vst.msk [vmem:[#allocation4] sm:$0x7] %vm678, %v676
      %p680 = scmp.eq.s32.totalorder %s24, 2
      // Predicated region
      $region69: #{gilmer_forward.3} parent=63 // pred_check
        %p681 = pneg %p680
      $region70: #{gilmer_forward.3} parent=63 // pred_check_branch
        %683 = sbr.rel (%p681) target = $region72
      $region71: #{gilmer_forward.3} parent=63 // pred_region
        %v684 = vld [vmem:[#allocation4] sm:$0x7]
        %v685 = vpack.c.bf16 %v684, %v684
        %v686 = vld [vmem:[%s6] sm:$0xf]
        %v687 = vld [vmem:[%s6 + $0x4] sm:$0xf]
        %v688 = vld [vmem:[%s6 + $0x8] sm:$0xf]
        %v689 = vld [vmem:[%s6 + $0xc] sm:$0xf]
        %v690 = vld [vmem:[%s6 + $0x10] sm:$0xf]
        %v691 = vld [vmem:[%s6 + $0x14] sm:$0xf]
        %v692 = vld [vmem:[%s6 + $0x18] sm:$0xf]
        %v693 = vld [vmem:[%s6 + $0x1c] sm:$0xf]
        %v694 = vld [vmem:[%s5] sm:$0x3]
        %v695 = vld [vmem:[%s7] sm:$0x3]
        %vm696 = vcmask 23552
        %v698 = vsel %vm696, %v694, 0
        %vm700 = vcmask 1040384
        %vm701 = vcmask 1041408
        %v702 = vsel %vm700, 4294967295, 65535
        %v703 = vsel %vm701, %v702, 0
        %v705 = vand.u32 %v695, %v703
        %707 = vmatprep.subr.bf16.mxu0 0
        %708 = vmatpush1.bf16.msra.mxu0 %v705
        %709 = vmatprep.subr.bf16.mxu0 0
        %710 = vmatpush1.bf16.msra.mxu0 0
        %711 = vmatprep.subr.bf16.mxu0 0
        %712 = vmatpush1.bf16.msra.mxu0 0
        %713 = vmatprep.subr.bf16.mxu0 0
        %714 = vmatpush1.bf16.msra.mxu0 0
        %715 = vmatprep.subr.bf16.mxu0 0
        %716 = vmatpush1.bf16.msra.mxu0 0
        %717 = vmatprep.subr.bf16.mxu0 0
        %718 = vmatpush1.bf16.msra.mxu0 0
        %719 = vmatprep.subr.bf16.mxu0 0
        %720 = vmatpush1.bf16.msra.mxu0 0
        %721 = vmatprep.subr.bf16.mxu0 0
        %722 = vmatpush1.bf16.msra.mxu0 0
        %723 = vmatprep.subr.bf16.mxu0 0
        %724 = vmatpush1.bf16.msra.mxu0 0
        %725 = vmatprep.subr.bf16.mxu0 0
        %726 = vmatpush1.bf16.msra.mxu0 0
        %727 = vmatprep.subr.bf16.mxu0 0
        %728 = vmatpush1.bf16.msra.mxu0 0
        %729 = vmatprep.subr.bf16.mxu0 0
        %730 = vmatpush1.bf16.msra.mxu0 0
        %731 = vmatprep.subr.bf16.mxu0 0
        %732 = vmatpush1.bf16.msra.mxu0 0
        %733 = vmatprep.subr.bf16.mxu0 0
        %734 = vmatpush1.bf16.msra.mxu0 0
        %735 = vmatprep.subr.bf16.mxu0 0
        %736 = vmatpush1.bf16.msra.mxu0 0
        %737 = vmatprep.subr.bf16.mxu0 0
        %738 = vmatpush1.bf16.msra.mxu0 0
        %739 = vmatprep.mubr.bf16.mxu0 0
        %740 = vmatmul.mubr.bf16.gmra.mrb[0].mxu0 %v698
        %v741 = vpop.f32.mrb[0].mxu0
        %v742 = vadd.f32 0.0, %v741
        %v743 = vpop.f32.mrb[0].mxu0
        %v744 = vpop.f32.mrb[0].mxu0
        %v745 = vpop.f32.mrb[0].mxu0
        %746 = vdwg.mxu0
        %v755 = vunpack.c.l.b16 %v686
        %v756 = vunpack.c.l.b16 %v687
        %v757 = vunpack.c.l.b16 %v688
        %v758 = vunpack.c.l.b16 %v689
        %v759 = vunpack.c.l.b16 %v690
        %v760 = vunpack.c.l.b16 %v691
        %v761 = vunpack.c.l.b16 %v692
        %v762 = vunpack.c.l.b16 %v693
        %v763 = vpack.c.b16 %v756, %v755
        %v764 = vpack.c.b16 %v758, %v757
        %v765 = vpack.c.b16 %v760, %v759
        %v766 = vpack.c.b16 %v762, %v761
        %v772 = vsel %vm461, %v685, 0
        %774 = vmatprep.subr.bf16.mxu0 0
        %775 = vmatpush1.bf16.msra.mxu0 %v763
        %776 = vmatprep.subr.bf16.mxu0 0
        %777 = vmatpush1.bf16.msra.mxu0 %v764
        %778 = vmatprep.subr.bf16.mxu0 0
        %779 = vmatpush1.bf16.msra.mxu0 %v765
        %780 = vmatprep.subr.bf16.mxu0 0
        %781 = vmatpush1.bf16.msra.mxu0 %v766
        %782 = vmatprep.subr.bf16.mxu0 0
        %783 = vmatpush1.bf16.msra.mxu0 0
        %784 = vmatprep.subr.bf16.mxu0 0
        %785 = vmatpush1.bf16.msra.mxu0 0
        %786 = vmatprep.subr.bf16.mxu0 0
        %787 = vmatpush1.bf16.msra.mxu0 0
        %788 = vmatprep.subr.bf16.mxu0 0
        %789 = vmatpush1.bf16.msra.mxu0 0
        %790 = vmatprep.subr.bf16.mxu0 0
        %791 = vmatpush1.bf16.msra.mxu0 0
        %792 = vmatprep.subr.bf16.mxu0 0
        %793 = vmatpush1.bf16.msra.mxu0 0
        %794 = vmatprep.subr.bf16.mxu0 0
        %795 = vmatpush1.bf16.msra.mxu0 0
        %796 = vmatprep.subr.bf16.mxu0 0
        %797 = vmatpush1.bf16.msra.mxu0 0
        %798 = vmatprep.subr.bf16.mxu0 0
        %799 = vmatpush1.bf16.msra.mxu0 0
        %800 = vmatprep.subr.bf16.mxu0 0
        %801 = vmatpush1.bf16.msra.mxu0 0
        %802 = vmatprep.subr.bf16.mxu0 0
        %803 = vmatpush1.bf16.msra.mxu0 0
        %804 = vmatprep.subr.bf16.mxu0 0
        %805 = vmatpush1.bf16.msra.mxu0 0
        %806 = vmatprep.mubr.bf16.mxu0 0
        %807 = vmatmul.mubr.bf16.gmra.mrb[0].mxu0 %v772
        %v808 = vpop.f32.mrb[0].mxu0
        %v809 = vadd.f32 %v742, %v808
        %v810 = vpop.f32.mrb[0].mxu0
        %v811 = vpop.f32.mrb[0].mxu0
        %v812 = vpop.f32.mrb[0].mxu0
        %813 = vdwg.mxu0
        %v814 = vld [vmem:[%s8] sm:$0x1]
        %v816 = vlaneseq
        %v817 = vshrl.u32 %v816, 7
        %v818 = vsub.s32 0, %v817
        %v819 = vrot.slane %v814, %v818
        %v821 = vadd.f32 %v809, %v819
        %v822 = vmax.f32 %v821, 0.0
        %v823 = vpack.c.bf16 %v822, %v822
        %v824 = vld [vmem:[%s9] sm:$0xf]
        %v825 = vld [vmem:[%s9 + $0x4] sm:$0xf]
        %v826 = vld [vmem:[%s9 + $0x8] sm:$0xf]
        %v827 = vld [vmem:[%s9 + $0xc] sm:$0xf]
        %v828 = vld [vmem:[#allocation5] sm:$0x1]
        %v830 = vlaneseq
        %v831 = vshrl.u32 %v830, 7
        %v832 = vsub.s32 0, %v831
        %v833 = vrot.slane %v828, %v832
        %v839 = vunpack.c.l.b16 %v824
        %v840 = vunpack.c.l.b16 %v825
        %v841 = vunpack.c.l.b16 %v826
        %v842 = vunpack.c.l.b16 %v827
        %v843 = vpack.c.b16 %v840, %v839
        %v844 = vpack.c.b16 %v842, %v841
        %v848 = vsel %vm393, %v823, 0
        %850 = vmatprep.subr.bf16.mxu0 0
        %851 = vmatpush1.bf16.msra.mxu0 %v843
        %852 = vmatprep.subr.bf16.mxu0 0
        %853 = vmatpush1.bf16.msra.mxu0 %v844
        %854 = vmatprep.subr.bf16.mxu0 0
        %855 = vmatpush1.bf16.msra.mxu0 0
        %856 = vmatprep.subr.bf16.mxu0 0
        %857 = vmatpush1.bf16.msra.mxu0 0
        %858 = vmatprep.subr.bf16.mxu0 0
        %859 = vmatpush1.bf16.msra.mxu0 0
        %860 = vmatprep.subr.bf16.mxu0 0
        %861 = vmatpush1.bf16.msra.mxu0 0
        %862 = vmatprep.subr.bf16.mxu0 0
        %863 = vmatpush1.bf16.msra.mxu0 0
        %864 = vmatprep.subr.bf16.mxu0 0
        %865 = vmatpush1.bf16.msra.mxu0 0
        %866 = vmatprep.subr.bf16.mxu0 0
        %867 = vmatpush1.bf16.msra.mxu0 0
        %868 = vmatprep.subr.bf16.mxu0 0
        %869 = vmatpush1.bf16.msra.mxu0 0
        %870 = vmatprep.subr.bf16.mxu0 0
        %871 = vmatpush1.bf16.msra.mxu0 0
        %872 = vmatprep.subr.bf16.mxu0 0
        %873 = vmatpush1.bf16.msra.mxu0 0
        %874 = vmatprep.subr.bf16.mxu0 0
        %875 = vmatpush1.bf16.msra.mxu0 0
        %876 = vmatprep.subr.bf16.mxu0 0
        %877 = vmatpush1.bf16.msra.mxu0 0
        %878 = vmatprep.subr.bf16.mxu0 0
        %879 = vmatpush1.bf16.msra.mxu0 0
        %880 = vmatprep.subr.bf16.mxu0 0
        %881 = vmatpush1.bf16.msra.mxu0 0
        %882 = vmatprep.mubr.bf16.mxu0 0
        %883 = vmatmul.mubr.bf16.gmra.mrb[0].mxu0 %v848
        %v884 = vpop.f32.mrb[0].mxu0
        %v885 = vadd.f32 %v833, %v884
        %v886 = vpop.f32.mrb[0].mxu0
        %v887 = vpop.f32.mrb[0].mxu0
        %v888 = vpop.f32.mrb[0].mxu0
        %889 = vdwg.mxu0
        %vm890 = vcmask 2048
        %891 = vst.msk [vmem:[%s11] sm:$0x7] %vm890, %v885
      $region72: #{gilmer_forward.3} parent=63 // pred_fallthru
        _
      // Predicated region
      $region73: #{gilmer_forward.3} parent=63 // pred_check
        %p892 = pneg %p268
      $region74: #{gilmer_forward.3} parent=63 // pred_check_branch
        %894 = sbr.rel (%p892) target = $region76
      $region75: #{gilmer_forward.3} parent=63 // pred_region
        _
      $region76: #{gilmer_forward.3} parent=63 // pred_fallthru
        _
      // Predicated region
      $region77: #{gilmer_forward.3} parent=63 // pred_check
        %p895 = pneg %p268
      $region78: #{gilmer_forward.3} parent=63 // pred_check_branch
        %897 = sbr.rel (%p895) target = $region80
      $region79: #{gilmer_forward.3} parent=63 // pred_region
        _
      $region80: #{gilmer_forward.3} parent=63 // pred_fallthru
        _
    $region64: #{gilmer_forward.3} parent=5 // pred_fallthru
      _
    %p898 = scmp.le.s32.totalorder 2, %s19
    // Predicated region
    $region81: #{gilmer_forward.3} parent=5 // pred_check
      %p899 = pneg %p898
    $region82: #{gilmer_forward.3} parent=5 // pred_check_branch
      %901 = sbr.rel (%p899) target = $region84
    $region83: #{gilmer_forward.3} parent=5 // pred_region
      %s902 = ssub.s32 %s19, 2
    $region84: #{gilmer_forward.3} parent=5 // pred_fallthru
      _
  $region6: #{gilmer_forward.3} parent=0 // loop_footer
    %s23 = sadd.s32 1, %s19
  $region7: #{gilmer_forward.3} parent=0 // loop_footer_branch
    %18 = sbr.rel target = $region3
  $region8: #{gilmer_forward.3} parent=0 // loop_exit
    _

// kernel: gilmer_forward.2
$region0: #{gilmer_forward.2}
  #allocation0 [shape = 'u32[]', space=smem, size = 0x4, offset = 0x4, fixed_abs, tag = 'smem constant byte address 0x4 - core index']
  #allocation1 [shape = 'u32[144,128]{1,0:T(1,128)}', space=vmem, size = 0x12000, scoped, tag = 'internal scratch']
  #allocation2 [shape = 'f32[32,48]{1,0:T(8,128)}', space=vmem, size = 0x4000, scoped, tag = 'scratch operand']
  #allocation3 [shape = 'f32[32,48]{1,0:T(8,128)}', space=vmem, size = 0x4000, scoped, tag = 'scratch operand']
  #allocation4 [shape = 'f32[32,48]{1,0:T(8,128)}', space=vmem, size = 0x4000, scoped, tag = 'scratch operand']
  %s0 = inlined_call_operand.vmem [shape: bf16[6,48], index: 0, kind: input, shape index: {}]
  %s1 = inlined_call_operand.vmem [shape: bf16[32,6], index: 1, kind: input, shape index: {}]
  %s2 = inlined_call_operand.vmem [shape: f32[32,1], index: 2, kind: input, shape index: {}]
  %s3 = inlined_call_operand.vmem [shape: bf16[48,256], index: 3, kind: input, shape index: {}]
  %s4 = inlined_call_operand.vmem [shape: bf16[48,256], index: 4, kind: input, shape index: {}]
  %s5 = inlined_call_operand.vmem [shape: bf16[4,256], index: 5, kind: input, shape index: {}]
  %s6 = inlined_call_operand.vmem [shape: f32[1,48], index: 6, kind: input, shape index: {}]
  %s7 = inlined_call_operand.vmem [shape: bf16[128,4], index: 7, kind: input, shape index: {}]
  %s8 = inlined_call_operand.vmem [shape: f32[128,1], index: 8, kind: input, shape index: {}]
  %s9 = inlined_call_operand.vmem [shape: bf16[1024,128], index: 9, kind: input, shape index: {}]
  %s10 = inlined_call_operand.vmem [shape: f32[1024,1], index: 10, kind: input, shape index: {}]
  %s11 = inlined_call_operand.vmem [shape: bf16[32,32], index: 11, kind: input, shape index: {}]
  %s12 = inlined_call_operand.vmem [shape: f32[32,1], index: 12, kind: input, shape index: {}]
  %s13 = inlined_call_operand.vmem [shape: bf16[96,32], index: 13, kind: input, shape index: {}]
  %s14 = inlined_call_operand.vmem [shape: bf16[96,32], index: 14, kind: input, shape index: {}]
  %s15 = inlined_call_operand.vmem [shape: f32[96,1], index: 15, kind: input, shape index: {}]
  %s16 = inlined_call_operand.vmem [shape: f32[96,1], index: 16, kind: input, shape index: {}]
  %s17 = inlined_call_operand.vmem [shape: f32[32,1], index: 17, kind: input, shape index: {}]
  %s18 = inlined_call_operand.vmem [shape: f32[32,1], index: 18, kind: input, shape index: {}]
  %s19 = inlined_call_operand.vmem [shape: f32[32,48], index: 19, kind: output, shape index: {}]
  %s20 = sld [smem:[#allocation0]]
  $region125: #{gilmer_forward.2} parent=0
    _
  %s22 = ssub.s32 1, %s20
  %s23 = scalar_select 0, %s22, %s20
  loop: start=0, step=1, limit=5
  $region2: #{gilmer_forward.2} parent=0 // loop_pre_header
    _
  $region3: #{gilmer_forward.2} parent=0 // loop_header
    %s25 = sphi 0, %s29
    %p26 = scmp.ge.s32.totalorder %s25, 5
    %s32 = sphi 0, %s44
    %s33 = sphi 0, %s40
    %s34 = sphi 0, %s32
    %s35 = sphi 0, %s33
    %s36 = sphi 0, %s34
    %s37 = sphi 0, %s35
    %s45 = sphi 0, %s45
    %s47 = sphi 0, %s45
    %s48 = sphi 0, %s47
    %s62 = sphi 0, %s48
    %s66 = sphi 0, %s66
    %s68 = sphi 0, %s66
    %s69 = sphi 0, %s68
    %s83 = sphi 0, %s69
    %s87 = sphi 0, %s87
    %s89 = sphi 0, %s87
    %s90 = sphi 0, %s89
    %s104 = sphi 0, %s90
    %s110 = sphi 0, %s112
    %s113 = sphi 0, %s110
    %s114 = sphi 0, %s113
    %s130 = sphi 0, %s114
    %s136 = sphi 0, %s138
    %s139 = sphi 0, %s136
    %s140 = sphi 0, %s139
    %s156 = sphi 0, %s140
    %s162 = sphi 0, %s164
    %s165 = sphi 0, %s162
    %s166 = sphi 0, %s165
    %s182 = sphi 0, %s166
    %s186 = sphi 0, %s186
    %s188 = sphi 0, %s186
    %s189 = sphi 0, %s188
    %s203 = sphi 0, %s189
    %s207 = sphi 0, %s207
    %s209 = sphi 0, %s207
    %s210 = sphi 0, %s209
    %s224 = sphi 0, %s210
    %s228 = sphi 0, %s228
    %s230 = sphi 0, %s228
    %s231 = sphi 0, %s230
    %s245 = sphi 0, %s231
    %s249 = sphi 0, %s249
    %s251 = sphi 0, %s249
    %s252 = sphi 0, %s251
    %s266 = sphi 0, %s252
    %s270 = sphi 0, %s270
    %s272 = sphi 0, %s270
    %s273 = sphi 0, %s272
    %s287 = sphi 0, %s273
    %s291 = sphi 0, %s291
    %s293 = sphi 0, %s291
    %s294 = sphi 0, %s293
    %s308 = sphi 0, %s294
    %s312 = sphi 0, %s312
    %s314 = sphi 0, %s312
    %s315 = sphi 0, %s314
    %s329 = sphi 0, %s315
    %s333 = sphi 0, %s333
    %s335 = sphi 0, %s333
    %s336 = sphi 0, %s335
    %s350 = sphi 0, %s336
    %s354 = sphi 0, %s354
    %s356 = sphi 0, %s354
    %s357 = sphi 0, %s356
    %s371 = sphi 0, %s357
    %s375 = sphi 0, %s375
    %s377 = sphi 0, %s375
    %s378 = sphi 0, %s377
    %s392 = sphi 0, %s378
    %s396 = sphi 0, %s396
    %s398 = sphi 0, %s396
    %s399 = sphi 0, %s398
    %s413 = sphi 0, %s399
    %s417 = sphi 0, %s417
    %s419 = sphi 0, %s417
    %s420 = sphi 0, %s419
    %s434 = sphi 0, %s420
    %s438 = sphi 0, %s438
    %s440 = sphi 0, %s438
    %s441 = sphi 0, %s440
    %s455 = sphi 0, %s441
    %s459 = sphi 0, %s459
    %s461 = sphi 0, %s459
    %s462 = sphi 0, %s461
    %s476 = sphi 0, %s462
  $region4: #{gilmer_forward.2} parent=0 // loop_header_branch
    %28 = sbr.rel (%p26) target = $region8
  $region5: #{gilmer_forward.2} parent=0 // loop_body
    %s30 = ssub.s32 %s25, 1
    %s31 = ssub.s32 %s25, 2
    %s38 = sadd.s32 1, %s33
    %p39 = scmp.ge.s32.totalorder %s38, 1
    %s40 = scalar_select %p39, 0, %s38
    %s41 = sadd.s32 1, %s32
    %s42 = scalar_select %p39, %s41, %s32
    %p43 = scmp.ge.s32.totalorder %s42, 3
    %s44 = scalar_select %p43, 0, %s42
    %s46 = sadd.s32 %s45, 1
    %p49 = scmp.eq.s32.totalorder %s25, 2
    %p50 = scmp.ne.s32.totalorder %s45, %s47
    %p51 = scmp.eq.s32.totalorder %s25, 0
    %p52 = por %p50, %p51
    %p53 = scmp.ne.s32.totalorder %s45, %s47
    %p54 = scmp.eq.s32.totalorder %s30, 2
    %p55 = por %p53, %p54
    %p56 = scmp.ne.s32.totalorder %s47, %s48
    %p57 = scmp.eq.s32.totalorder %s30, 0
    %p58 = por %p56, %p57
    %p59 = scmp.ne.s32.totalorder %s47, %s48
    %p60 = scmp.eq.s32.totalorder %s31, 2
    %p61 = por %p59, %p60
    %p63 = scmp.ne.s32.totalorder %s48, %s62
    %p64 = scmp.eq.s32.totalorder %s31, 0
    %p65 = por %p63, %p64
    %s67 = sadd.s32 %s66, 1
    %p70 = scmp.eq.s32.totalorder %s25, 2
    %p71 = scmp.ne.s32.totalorder %s66, %s68
    %p72 = scmp.eq.s32.totalorder %s25, 0
    %p73 = por %p71, %p72
    %p74 = scmp.ne.s32.totalorder %s66, %s68
    %p75 = scmp.eq.s32.totalorder %s30, 2
    %p76 = por %p74, %p75
    %p77 = scmp.ne.s32.totalorder %s68, %s69
    %p78 = scmp.eq.s32.totalorder %s30, 0
    %p79 = por %p77, %p78
    %p80 = scmp.ne.s32.totalorder %s68, %s69
    %p81 = scmp.eq.s32.totalorder %s31, 2
    %p82 = por %p80, %p81
    %p84 = scmp.ne.s32.totalorder %s69, %s83
    %p85 = scmp.eq.s32.totalorder %s31, 0
    %p86 = por %p84, %p85
    %s88 = sadd.s32 %s87, 1
    %p91 = scmp.eq.s32.totalorder %s25, 2
    %p92 = scmp.ne.s32.totalorder %s87, %s89
    %p93 = scmp.eq.s32.totalorder %s25, 0
    %p94 = por %p92, %p93
    %p95 = scmp.ne.s32.totalorder %s87, %s89
    %p96 = scmp.eq.s32.totalorder %s30, 2
    %p97 = por %p95, %p96
    %p98 = scmp.ne.s32.totalorder %s89, %s90
    %p99 = scmp.eq.s32.totalorder %s30, 0
    %p100 = por %p98, %p99
    %p101 = scmp.ne.s32.totalorder %s89, %s90
    %p102 = scmp.eq.s32.totalorder %s31, 2
    %p103 = por %p101, %p102
    %p105 = scmp.ne.s32.totalorder %s90, %s104
    %p106 = scmp.eq.s32.totalorder %s31, 0
    %p107 = por %p105, %p106
    %s108 = ssub.s32 %s33, %s40
    %p109 = scmp.eq.s32.totalorder %s108, 0
    %s111 = sadd.s32 %s110, 1
    %s112 = scalar_select %p109, %s110, %s111
    %p115 = pneg %p109
    %p116 = scmp.eq.s32.totalorder %s25, 2
    %p117 = por %p115, %p116
    %p118 = scmp.ne.s32.totalorder %s110, %s113
    %p119 = scmp.eq.s32.totalorder %s25, 0
    %p120 = por %p118, %p119
    %p121 = scmp.ne.s32.totalorder %s110, %s113
    %p122 = scmp.eq.s32.totalorder %s30, 2
    %p123 = por %p121, %p122
    %p124 = scmp.ne.s32.totalorder %s113, %s114
    %p125 = scmp.eq.s32.totalorder %s30, 0
    %p126 = por %p124, %p125
    %p127 = scmp.ne.s32.totalorder %s113, %s114
    %p128 = scmp.eq.s32.totalorder %s31, 2
    %p129 = por %p127, %p128
    %p131 = scmp.ne.s32.totalorder %s114, %s130
    %p132 = scmp.eq.s32.totalorder %s31, 0
    %p133 = por %p131, %p132
    %s134 = ssub.s32 %s33, %s40
    %p135 = scmp.eq.s32.totalorder %s134, 0
    %s137 = sadd.s32 %s136, 1
    %s138 = scalar_select %p135, %s136, %s137
    %p141 = pneg %p135
    %p142 = scmp.eq.s32.totalorder %s25, 2
    %p143 = por %p141, %p142
    %p144 = scmp.ne.s32.totalorder %s136, %s139
    %p145 = scmp.eq.s32.totalorder %s25, 0
    %p146 = por %p144, %p145
    %p147 = scmp.ne.s32.totalorder %s136, %s139
    %p148 = scmp.eq.s32.totalorder %s30, 2
    %p149 = por %p147, %p148
    %p150 = scmp.ne.s32.totalorder %s139, %s140
    %p151 = scmp.eq.s32.totalorder %s30, 0
    %p152 = por %p150, %p151
    %p153 = scmp.ne.s32.totalorder %s139, %s140
    %p154 = scmp.eq.s32.totalorder %s31, 2
    %p155 = por %p153, %p154
    %p157 = scmp.ne.s32.totalorder %s140, %s156
    %p158 = scmp.eq.s32.totalorder %s31, 0
    %p159 = por %p157, %p158
    %s160 = ssub.s32 %s33, %s40
    %p161 = scmp.eq.s32.totalorder %s160, 0
    %s163 = sadd.s32 %s162, 1
    %s164 = scalar_select %p161, %s162, %s163
    %p167 = pneg %p161
    %p168 = scmp.eq.s32.totalorder %s25, 2
    %p169 = por %p167, %p168
    %p170 = scmp.ne.s32.totalorder %s162, %s165
    %p171 = scmp.eq.s32.totalorder %s25, 0
    %p172 = por %p170, %p171
    %p173 = scmp.ne.s32.totalorder %s162, %s165
    %p174 = scmp.eq.s32.totalorder %s30, 2
    %p175 = por %p173, %p174
    %p176 = scmp.ne.s32.totalorder %s165, %s166
    %p177 = scmp.eq.s32.totalorder %s30, 0
    %p178 = por %p176, %p177
    %p179 = scmp.ne.s32.totalorder %s165, %s166
    %p180 = scmp.eq.s32.totalorder %s31, 2
    %p181 = por %p179, %p180
    %p183 = scmp.ne.s32.totalorder %s166, %s182
    %p184 = scmp.eq.s32.totalorder %s31, 0
    %p185 = por %p183, %p184
    %s187 = sadd.s32 %s186, 1
    %p190 = scmp.eq.s32.totalorder %s25, 2
    %p191 = scmp.ne.s32.totalorder %s186, %s188
    %p192 = scmp.eq.s32.totalorder %s25, 0
    %p193 = por %p191, %p192
    %p194 = scmp.ne.s32.totalorder %s186, %s188
    %p195 = scmp.eq.s32.totalorder %s30, 2
    %p196 = por %p194, %p195
    %p197 = scmp.ne.s32.totalorder %s188, %s189
    %p198 = scmp.eq.s32.totalorder %s30, 0
    %p199 = por %p197, %p198
    %p200 = scmp.ne.s32.totalorder %s188, %s189
    %p201 = scmp.eq.s32.totalorder %s31, 2
    %p202 = por %p200, %p201
    %p204 = scmp.ne.s32.totalorder %s189, %s203
    %p205 = scmp.eq.s32.totalorder %s31, 0
    %p206 = por %p204, %p205
    %s208 = sadd.s32 %s207, 1
    %p211 = scmp.eq.s32.totalorder %s25, 2
    %p212 = scmp.ne.s32.totalorder %s207, %s209
    %p213 = scmp.eq.s32.totalorder %s25, 0
    %p214 = por %p212, %p213
    %p215 = scmp.ne.s32.totalorder %s207, %s209
    %p216 = scmp.eq.s32.totalorder %s30, 2
    %p217 = por %p215, %p216
    %p218 = scmp.ne.s32.totalorder %s209, %s210
    %p219 = scmp.eq.s32.totalorder %s30, 0
    %p220 = por %p218, %p219
    %p221 = scmp.ne.s32.totalorder %s209, %s210
    %p222 = scmp.eq.s32.totalorder %s31, 2
    %p223 = por %p221, %p222
    %p225 = scmp.ne.s32.totalorder %s210, %s224
    %p226 = scmp.eq.s32.totalorder %s31, 0
    %p227 = por %p225, %p226
    %s229 = sadd.s32 %s228, 1
    %p232 = scmp.eq.s32.totalorder %s25, 2
    %p233 = scmp.ne.s32.totalorder %s228, %s230
    %p234 = scmp.eq.s32.totalorder %s25, 0
    %p235 = por %p233, %p234
    %p236 = scmp.ne.s32.totalorder %s228, %s230
    %p237 = scmp.eq.s32.totalorder %s30, 2
    %p238 = por %p236, %p237
    %p239 = scmp.ne.s32.totalorder %s230, %s231
    %p240 = scmp.eq.s32.totalorder %s30, 0
    %p241 = por %p239, %p240
    %p242 = scmp.ne.s32.totalorder %s230, %s231
    %p243 = scmp.eq.s32.totalorder %s31, 2
    %p244 = por %p242, %p243
    %p246 = scmp.ne.s32.totalorder %s231, %s245
    %p247 = scmp.eq.s32.totalorder %s31, 0
    %p248 = por %p246, %p247
    %s250 = sadd.s32 %s249, 1
    %p253 = scmp.eq.s32.totalorder %s25, 2
    %p254 = scmp.ne.s32.totalorder %s249, %s251
    %p255 = scmp.eq.s32.totalorder %s25, 0
    %p256 = por %p254, %p255
    %p257 = scmp.ne.s32.totalorder %s249, %s251
    %p258 = scmp.eq.s32.totalorder %s30, 2
    %p259 = por %p257, %p258
    %p260 = scmp.ne.s32.totalorder %s251, %s252
    %p261 = scmp.eq.s32.totalorder %s30, 0
    %p262 = por %p260, %p261
    %p263 = scmp.ne.s32.totalorder %s251, %s252
    %p264 = scmp.eq.s32.totalorder %s31, 2
    %p265 = por %p263, %p264
    %p267 = scmp.ne.s32.totalorder %s252, %s266
    %p268 = scmp.eq.s32.totalorder %s31, 0
    %p269 = por %p267, %p268
    %s271 = sadd.s32 %s270, 1
    %p274 = scmp.eq.s32.totalorder %s25, 2
    %p275 = scmp.ne.s32.totalorder %s270, %s272
    %p276 = scmp.eq.s32.totalorder %s25, 0
    %p277 = por %p275, %p276
    %p278 = scmp.ne.s32.totalorder %s270, %s272
    %p279 = scmp.eq.s32.totalorder %s30, 2
    %p280 = por %p278, %p279
    %p281 = scmp.ne.s32.totalorder %s272, %s273
    %p282 = scmp.eq.s32.totalorder %s30, 0
    %p283 = por %p281, %p282
    %p284 = scmp.ne.s32.totalorder %s272, %s273
    %p285 = scmp.eq.s32.totalorder %s31, 2
    %p286 = por %p284, %p285
    %p288 = scmp.ne.s32.totalorder %s273, %s287
    %p289 = scmp.eq.s32.totalorder %s31, 0
    %p290 = por %p288, %p289
    %s292 = sadd.s32 %s291, 1
    %p295 = scmp.eq.s32.totalorder %s25, 2
    %p296 = scmp.ne.s32.totalorder %s291, %s293
    %p297 = scmp.eq.s32.totalorder %s25, 0
    %p298 = por %p296, %p297
    %p299 = scmp.ne.s32.totalorder %s291, %s293
    %p300 = scmp.eq.s32.totalorder %s30, 2
    %p301 = por %p299, %p300
    %p302 = scmp.ne.s32.totalorder %s293, %s294
    %p303 = scmp.eq.s32.totalorder %s30, 0
    %p304 = por %p302, %p303
    %p305 = scmp.ne.s32.totalorder %s293, %s294
    %p306 = scmp.eq.s32.totalorder %s31, 2
    %p307 = por %p305, %p306
    %p309 = scmp.ne.s32.totalorder %s294, %s308
    %p310 = scmp.eq.s32.totalorder %s31, 0
    %p311 = por %p309, %p310
    %s313 = sadd.s32 %s312, 1
    %p316 = scmp.eq.s32.totalorder %s25, 2
    %p317 = scmp.ne.s32.totalorder %s312, %s314
    %p318 = scmp.eq.s32.totalorder %s25, 0
    %p319 = por %p317, %p318
    %p320 = scmp.ne.s32.totalorder %s312, %s314
    %p321 = scmp.eq.s32.totalorder %s30, 2
    %p322 = por %p320, %p321
    %p323 = scmp.ne.s32.totalorder %s314, %s315
    %p324 = scmp.eq.s32.totalorder %s30, 0
    %p325 = por %p323, %p324
    %p326 = scmp.ne.s32.totalorder %s314, %s315
    %p327 = scmp.eq.s32.totalorder %s31, 2
    %p328 = por %p326, %p327
    %p330 = scmp.ne.s32.totalorder %s315, %s329
    %p331 = scmp.eq.s32.totalorder %s31, 0
    %p332 = por %p330, %p331
    %s334 = sadd.s32 %s333, 1
    %p337 = scmp.eq.s32.totalorder %s25, 2
    %p338 = scmp.ne.s32.totalorder %s333, %s335
    %p339 = scmp.eq.s32.totalorder %s25, 0
    %p340 = por %p338, %p339
    %p341 = scmp.ne.s32.totalorder %s333, %s335
    %p342 = scmp.eq.s32.totalorder %s30, 2
    %p343 = por %p341, %p342
    %p344 = scmp.ne.s32.totalorder %s335, %s336
    %p345 = scmp.eq.s32.totalorder %s30, 0
    %p346 = por %p344, %p345
    %p347 = scmp.ne.s32.totalorder %s335, %s336
    %p348 = scmp.eq.s32.totalorder %s31, 2
    %p349 = por %p347, %p348
    %p351 = scmp.ne.s32.totalorder %s336, %s350
    %p352 = scmp.eq.s32.totalorder %s31, 0
    %p353 = por %p351, %p352
    %s355 = sadd.s32 %s354, 1
    %p358 = scmp.eq.s32.totalorder %s25, 2
    %p359 = scmp.ne.s32.totalorder %s354, %s356
    %p360 = scmp.eq.s32.totalorder %s25, 0
    %p361 = por %p359, %p360
    %p362 = scmp.ne.s32.totalorder %s354, %s356
    %p363 = scmp.eq.s32.totalorder %s30, 2
    %p364 = por %p362, %p363
    %p365 = scmp.ne.s32.totalorder %s356, %s357
    %p366 = scmp.eq.s32.totalorder %s30, 0
    %p367 = por %p365, %p366
    %p368 = scmp.ne.s32.totalorder %s356, %s357
    %p369 = scmp.eq.s32.totalorder %s31, 2
    %p370 = por %p368, %p369
    %p372 = scmp.ne.s32.totalorder %s357, %s371
    %p373 = scmp.eq.s32.totalorder %s31, 0
    %p374 = por %p372, %p373
    %s376 = sadd.s32 %s375, 1
    %p379 = scmp.eq.s32.totalorder %s25, 2
    %p380 = scmp.ne.s32.totalorder %s375, %s377
    %p381 = scmp.eq.s32.totalorder %s25, 0
    %p382 = por %p380, %p381
    %p383 = scmp.ne.s32.totalorder %s375, %s377
    %p384 = scmp.eq.s32.totalorder %s30, 2
    %p385 = por %p383, %p384
    %p386 = scmp.ne.s32.totalorder %s377, %s378
    %p387 = scmp.eq.s32.totalorder %s30, 0
    %p388 = por %p386, %p387
    %p389 = scmp.ne.s32.totalorder %s377, %s378
    %p390 = scmp.eq.s32.totalorder %s31, 2
    %p391 = por %p389, %p390
    %p393 = scmp.ne.s32.totalorder %s378, %s392
    %p394 = scmp.eq.s32.totalorder %s31, 0
    %p395 = por %p393, %p394
    %s397 = sadd.s32 %s396, 1
    %p400 = scmp.eq.s32.totalorder %s25, 2
    %p401 = scmp.ne.s32.totalorder %s396, %s398
    %p402 = scmp.eq.s32.totalorder %s25, 0
    %p403 = por %p401, %p402
    %p404 = scmp.ne.s32.totalorder %s396, %s398
    %p405 = scmp.eq.s32.totalorder %s30, 2
    %p406 = por %p404, %p405
    %p407 = scmp.ne.s32.totalorder %s398, %s399
    %p408 = scmp.eq.s32.totalorder %s30, 0
    %p409 = por %p407, %p408
    %p410 = scmp.ne.s32.totalorder %s398, %s399
    %p411 = scmp.eq.s32.totalorder %s31, 2
    %p412 = por %p410, %p411
    %p414 = scmp.ne.s32.totalorder %s399, %s413
    %p415 = scmp.eq.s32.totalorder %s31, 0
    %p416 = por %p414, %p415
    %s418 = sadd.s32 %s417, 1
    %p421 = scmp.eq.s32.totalorder %s25, 2
    %p422 = scmp.ne.s32.totalorder %s417, %s419
    %p423 = scmp.eq.s32.totalorder %s25, 0
    %p424 = por %p422, %p423
    %p425 = scmp.ne.s32.totalorder %s417, %s419
    %p426 = scmp.eq.s32.totalorder %s30, 2
    %p427 = por %p425, %p426
    %p428 = scmp.ne.s32.totalorder %s419, %s420
    %p429 = scmp.eq.s32.totalorder %s30, 0
    %p430 = por %p428, %p429
    %p431 = scmp.ne.s32.totalorder %s419, %s420
    %p432 = scmp.eq.s32.totalorder %s31, 2
    %p433 = por %p431, %p432
    %p435 = scmp.ne.s32.totalorder %s420, %s434
    %p436 = scmp.eq.s32.totalorder %s31, 0
    %p437 = por %p435, %p436
    %s439 = sadd.s32 %s438, 1
    %p442 = scmp.eq.s32.totalorder %s25, 2
    %p443 = scmp.ne.s32.totalorder %s438, %s440
    %p444 = scmp.eq.s32.totalorder %s25, 0
    %p445 = por %p443, %p444
    %p446 = scmp.ne.s32.totalorder %s438, %s440
    %p447 = scmp.eq.s32.totalorder %s30, 2
    %p448 = por %p446, %p447
    %p449 = scmp.ne.s32.totalorder %s440, %s441
    %p450 = scmp.eq.s32.totalorder %s30, 0
    %p451 = por %p449, %p450
    %p452 = scmp.ne.s32.totalorder %s440, %s441
    %p453 = scmp.eq.s32.totalorder %s31, 2
    %p454 = por %p452, %p453
    %p456 = scmp.ne.s32.totalorder %s441, %s455
    %p457 = scmp.eq.s32.totalorder %s31, 0
    %p458 = por %p456, %p457
    %s460 = sadd.s32 %s459, 1
    %p463 = scmp.eq.s32.totalorder %s25, 2
    %p464 = scmp.ne.s32.totalorder %s459, %s461
    %p465 = scmp.eq.s32.totalorder %s25, 0
    %p466 = por %p464, %p465
    %p467 = scmp.ne.s32.totalorder %s459, %s461
    %p468 = scmp.eq.s32.totalorder %s30, 2
    %p469 = por %p467, %p468
    %p470 = scmp.ne.s32.totalorder %s461, %s462
    %p471 = scmp.eq.s32.totalorder %s30, 0
    %p472 = por %p470, %p471
    %p473 = scmp.ne.s32.totalorder %s461, %s462
    %p474 = scmp.eq.s32.totalorder %s31, 2
    %p475 = por %p473, %p474
    %p477 = scmp.ne.s32.totalorder %s462, %s476
    %p478 = scmp.eq.s32.totalorder %s31, 0
    %p479 = por %p477, %p478
    %p480 = scmp.le.s32.totalorder 1, %s25
    %p481 = scmp.lt.s32.totalorder %s25, 4
    %p482 = pnand %p480, %p481
    %p483 = pneg %p482
    // Predicated region
    $region9: #{gilmer_forward.2} parent=5 // pred_check
      _
    $region10: #{gilmer_forward.2} parent=5 // pred_check_branch
      %485 = sbr.rel (%p482) target = $region12
    $region11: #{gilmer_forward.2} parent=5 // pred_region
      %s486 = ssub.s32 %s25, 1
      // Predicated region
      $region13: #{gilmer_forward.2} parent=11 // pred_check
        %p487 = pneg %p58
      $region14: #{gilmer_forward.2} parent=11 // pred_check_branch
        %489 = sbr.rel (%p487) target = $region16
      $region15: #{gilmer_forward.2} parent=11 // pred_region
        _
      $region16: #{gilmer_forward.2} parent=11 // pred_fallthru
        _
      // Predicated region
      $region17: #{gilmer_forward.2} parent=11 // pred_check
        %p490 = pneg %p79
      $region18: #{gilmer_forward.2} parent=11 // pred_check_branch
        %492 = sbr.rel (%p490) target = $region20
      $region19: #{gilmer_forward.2} parent=11 // pred_region
        _
      $region20: #{gilmer_forward.2} parent=11 // pred_fallthru
        _
      // Predicated region
      $region21: #{gilmer_forward.2} parent=11 // pred_check
        %p493 = pneg %p100
      $region22: #{gilmer_forward.2} parent=11 // pred_check_branch
        %495 = sbr.rel (%p493) target = $region24
      $region23: #{gilmer_forward.2} parent=11 // pred_region
        _
      $region24: #{gilmer_forward.2} parent=11 // pred_fallthru
        _
      // Predicated region
      $region25: #{gilmer_forward.2} parent=11 // pred_check
        %p496 = pneg %p126
      $region26: #{gilmer_forward.2} parent=11 // pred_check_branch
        %498 = sbr.rel (%p496) target = $region28
      $region27: #{gilmer_forward.2} parent=11 // pred_region
        %s499 = smul.u32 2, %s35
        %p500 = scmp.lt.s32.totalorder %s499, 1
        %s501 = scalar_select %p500, %s499, 1
        %s502 = smul.addr %s501, 4
        %s503 = scalar_lea.vmem %s3, %s502
        %s504 = smul.u32 2, %s35
      $region28: #{gilmer_forward.2} parent=11 // pred_fallthru
        _
      // Predicated region
      $region29: #{gilmer_forward.2} parent=11 // pred_check
        %p505 = pneg %p152
      $region30: #{gilmer_forward.2} parent=11 // pred_check_branch
        %507 = sbr.rel (%p505) target = $region32
      $region31: #{gilmer_forward.2} parent=11 // pred_region
        %s508 = smul.u32 2, %s35
        %p509 = scmp.lt.s32.totalorder %s508, 1
        %s510 = scalar_select %p509, %s508, 1
        %s511 = smul.addr %s510, 4
        %s512 = scalar_lea.vmem %s4, %s511
        %s513 = smul.u32 2, %s35
      $region32: #{gilmer_forward.2} parent=11 // pred_fallthru
        _
      // Predicated region
      $region33: #{gilmer_forward.2} parent=11 // pred_check
        %p514 = pneg %p178
      $region34: #{gilmer_forward.2} parent=11 // pred_check_branch
        %516 = sbr.rel (%p514) target = $region36
      $region35: #{gilmer_forward.2} parent=11 // pred_region
        %s517 = smul.u32 2, %s35
        %p518 = scmp.lt.s32.totalorder %s517, 1
        %s519 = scalar_select %p518, %s517, 1
        %s520 = smul.addr %s519, 2
        %s521 = scalar_lea.vmem %s5, %s520
        %s522 = smul.u32 2, %s35
      $region36: #{gilmer_forward.2} parent=11 // pred_fallthru
        _
      // Predicated region
      $region37: #{gilmer_forward.2} parent=11 // pred_check
        %p523 = pneg %p199
      $region38: #{gilmer_forward.2} parent=11 // pred_check_branch
        %525 = sbr.rel (%p523) target = $region40
      $region39: #{gilmer_forward.2} parent=11 // pred_region
        _
      $region40: #{gilmer_forward.2} parent=11 // pred_fallthru
        _
      // Predicated region
      $region41: #{gilmer_forward.2} parent=11 // pred_check
        %p526 = pneg %p220
      $region42: #{gilmer_forward.2} parent=11 // pred_check_branch
        %528 = sbr.rel (%p526) target = $region44
      $region43: #{gilmer_forward.2} parent=11 // pred_region
        _
      $region44: #{gilmer_forward.2} parent=11 // pred_fallthru
        _
      // Predicated region
      $region45: #{gilmer_forward.2} parent=11 // pred_check
        %p529 = pneg %p241
      $region46: #{gilmer_forward.2} parent=11 // pred_check_branch
        %531 = sbr.rel (%p529) target = $region48
      $region47: #{gilmer_forward.2} parent=11 // pred_region
        _
      $region48: #{gilmer_forward.2} parent=11 // pred_fallthru
        _
      // Predicated region
      $region49: #{gilmer_forward.2} parent=11 // pred_check
        %p532 = pneg %p262
      $region50: #{gilmer_forward.2} parent=11 // pred_check_branch
        %534 = sbr.rel (%p532) target = $region52
      $region51: #{gilmer_forward.2} parent=11 // pred_region
        _
      $region52: #{gilmer_forward.2} parent=11 // pred_fallthru
        _
      // Predicated region
      $region53: #{gilmer_forward.2} parent=11 // pred_check
        %p535 = pneg %p283
      $region54: #{gilmer_forward.2} parent=11 // pred_check_branch
        %537 = sbr.rel (%p535) target = $region56
      $region55: #{gilmer_forward.2} parent=11 // pred_region
        _
      $region56: #{gilmer_forward.2} parent=11 // pred_fallthru
        _
      // Predicated region
      $region57: #{gilmer_forward.2} parent=11 // pred_check
        %p538 = pneg %p304
      $region58: #{gilmer_forward.2} parent=11 // pred_check_branch
        %540 = sbr.rel (%p538) target = $region60
      $region59: #{gilmer_forward.2} parent=11 // pred_region
        _
      $region60: #{gilmer_forward.2} parent=11 // pred_fallthru
        _
      // Predicated region
      $region61: #{gilmer_forward.2} parent=11 // pred_check
        %p541 = pneg %p325
      $region62: #{gilmer_forward.2} parent=11 // pred_check_branch
        %543 = sbr.rel (%p541) target = $region64
      $region63: #{gilmer_forward.2} parent=11 // pred_region
        _
      $region64: #{gilmer_forward.2} parent=11 // pred_fallthru
        _
      // Predicated region
      $region65: #{gilmer_forward.2} parent=11 // pred_check
        %p544 = pneg %p346
      $region66: #{gilmer_forward.2} parent=11 // pred_check_branch
        %546 = sbr.rel (%p544) target = $region68
      $region67: #{gilmer_forward.2} parent=11 // pred_region
        _
      $region68: #{gilmer_forward.2} parent=11 // pred_fallthru
        _
      // Predicated region
      $region69: #{gilmer_forward.2} parent=11 // pred_check
        %p547 = pneg %p367
      $region70: #{gilmer_forward.2} parent=11 // pred_check_branch
        %549 = sbr.rel (%p547) target = $region72
      $region71: #{gilmer_forward.2} parent=11 // pred_region
        _
      $region72: #{gilmer_forward.2} parent=11 // pred_fallthru
        _
      // Predicated region
      $region73: #{gilmer_forward.2} parent=11 // pred_check
        %p550 = pneg %p388
      $region74: #{gilmer_forward.2} parent=11 // pred_check_branch
        %552 = sbr.rel (%p550) target = $region76
      $region75: #{gilmer_forward.2} parent=11 // pred_region
        _
      $region76: #{gilmer_forward.2} parent=11 // pred_fallthru
        _
      // Predicated region
      $region77: #{gilmer_forward.2} parent=11 // pred_check
        %p553 = pneg %p409
      $region78: #{gilmer_forward.2} parent=11 // pred_check_branch
        %555 = sbr.rel (%p553) target = $region80
      $region79: #{gilmer_forward.2} parent=11 // pred_region
        _
      $region80: #{gilmer_forward.2} parent=11 // pred_fallthru
        _
      // Predicated region
      $region81: #{gilmer_forward.2} parent=11 // pred_check
        %p556 = pneg %p430
      $region82: #{gilmer_forward.2} parent=11 // pred_check_branch
        %558 = sbr.rel (%p556) target = $region84
      $region83: #{gilmer_forward.2} parent=11 // pred_region
        _
      $region84: #{gilmer_forward.2} parent=11 // pred_fallthru
        _
      // Predicated region
      $region85: #{gilmer_forward.2} parent=11 // pred_check
        %p559 = pneg %p451
      $region86: #{gilmer_forward.2} parent=11 // pred_check_branch
        %561 = sbr.rel (%p559) target = $region88
      $region87: #{gilmer_forward.2} parent=11 // pred_region
        _
      $region88: #{gilmer_forward.2} parent=11 // pred_fallthru
        _
    $region12: #{gilmer_forward.2} parent=5 // pred_fallthru
      _
    %p562 = scmp.lt.s32.totalorder %s25, 3
    // Predicated region
    $region89: #{gilmer_forward.2} parent=5 // pred_check
      %p563 = pneg %p562
    $region90: #{gilmer_forward.2} parent=5 // pred_check_branch
      %565 = sbr.rel (%p563) target = $region92
    $region91: #{gilmer_forward.2} parent=5 // pred_region
      _
    $region92: #{gilmer_forward.2} parent=5 // pred_fallthru
      _
    %p566 = scmp.le.s32.totalorder 1, %s25
    %p567 = scmp.lt.s32.totalorder %s25, 4
    %p568 = pnand %p566, %p567
    %p569 = pneg %p568
    // Predicated region
    $region93: #{gilmer_forward.2} parent=5 // pred_check
      _
    $region94: #{gilmer_forward.2} parent=5 // pred_check_branch
      %571 = sbr.rel (%p568) target = $region96
    $region95: #{gilmer_forward.2} parent=5 // pred_region
      %s572 = ssub.s32 %s25, 1
      %p573 = pneg %p58
      %p574 = pneg %p55
      %p575 = pneg %p79
      %p576 = pneg %p76
      %p577 = pneg %p100
      %p578 = pneg %p97
      %s579 = smul.u32 2, %s35
      %p580 = scmp.lt.s32.totalorder %s579, 1
      %s581 = scalar_select %p580, %s579, 1
      %s582 = smul.addr %s581, 4
      %s583 = scalar_lea.vmem %s3, %s582
      %p584 = pneg %p126
      %p585 = pneg %p123
      %s586 = smul.u32 2, %s35
      %p587 = scmp.lt.s32.totalorder %s586, 1
      %s588 = scalar_select %p587, %s586, 1
      %s589 = smul.addr %s588, 4
      %s590 = scalar_lea.vmem %s4, %s589
      %p591 = pneg %p152
      %p592 = pneg %p149
      %s593 = smul.u32 2, %s35
      %p594 = scmp.lt.s32.totalorder %s593, 1
      %s595 = scalar_select %p594, %s593, 1
      %s596 = smul.addr %s595, 2
      %s597 = scalar_lea.vmem %s5, %s596
      %p598 = pneg %p178
      %p599 = pneg %p175
      %p600 = pneg %p199
      %p601 = pneg %p196
      %p602 = pneg %p220
      %p603 = pneg %p217
      %p604 = pneg %p241
      %p605 = pneg %p238
      %p606 = pneg %p262
      %p607 = pneg %p259
      %p608 = pneg %p283
      %p609 = pneg %p280
      %p610 = pneg %p304
      %p611 = pneg %p301
      %p612 = pneg %p325
      %p613 = pneg %p322
      %p614 = pneg %p346
      %p615 = pneg %p343
      %p616 = pneg %p367
      %p617 = pneg %p364
      %p618 = pneg %p388
      %p619 = pneg %p385
      %p620 = pneg %p409
      %p621 = pneg %p406
      %p622 = pneg %p430
      %p623 = pneg %p427
      %p624 = pneg %p451
      %p625 = pneg %p448
      %p626 = pneg %p472
      %p627 = pneg %p469
      %s628 = smul.u32 2, %s35
      %p629 = scmp.lt.s32.totalorder %s628, 1
      %s630 = scalar_select %p629, %s628, 1
      %s631 = smul.addr %s630, 4
      %s632 = scalar_lea.vmem %s3, %s631
      %s633 = smul.u32 2, %s35
      %s634 = smul.u32 2, %s35
      %p635 = scmp.lt.s32.totalorder %s634, 1
      %s636 = scalar_select %p635, %s634, 1
      %s637 = smul.addr %s636, 4
      %s638 = scalar_lea.vmem %s4, %s637
      %s639 = smul.u32 2, %s35
      %s640 = smul.u32 2, %s35
      %p641 = scmp.lt.s32.totalorder %s640, 1
      %s642 = scalar_select %p641, %s640, 1
      %s643 = smul.addr %s642, 2
      %s644 = scalar_lea.vmem %s5, %s643
      %s645 = smul.u32 2, %s35
      %p647 = scmp.eq.s32.totalorder %s34, 0
      %p648 = scmp.eq.s32.totalorder %s35, 0
      %p649 = pnand %p647, %p648
      %p650 = pneg %p649
      // Predicated region
      $region97: #{gilmer_forward.2} parent=95 // pred_check
        _
      $region98: #{gilmer_forward.2} parent=95 // pred_check_branch
        %652 = sbr.rel (%p649) target = $region100
      $region99: #{gilmer_forward.2} parent=95 // pred_region
        %v653 = vld [vmem:[%s1] sm:$0xf]
        %v654 = vld [vmem:[%s1 + $0x4] sm:$0xf]
        %v655 = vld [vmem:[%s1 + $0x8] sm:$0xf]
        %v656 = vld [vmem:[%s1 + $0xc] sm:$0xf]
        %v657 = vld [vmem:[%s0] sm:$0x7]
        %v658 = vld [vmem:[%s2] sm:$0xff]
        %v659 = vld [vmem:[%s2 + $0x8] sm:$0xff]
        %v660 = vld [vmem:[%s2 + $0x10] sm:$0xff]
        %v661 = vld [vmem:[%s2 + $0x18] sm:$0xff]
        %663 = vset.pattern.permute.xlu0 0
        %664 = vperm.xlu0 %663, %v658
        %v665 = vpop.permute.xlu0 %664
        %668 = vset.pattern.permute.xlu0 0
        %669 = vperm.xlu0 %668, %v659
        %v670 = vpop.permute.xlu0 %669
        %673 = vset.pattern.permute.xlu0 0
        %674 = vperm.xlu0 %673, %v660
        %v675 = vpop.permute.xlu0 %674
        %678 = vset.pattern.permute.xlu0 0
        %679 = vperm.xlu0 %678, %v661
        %v680 = vpop.permute.xlu0 %679
        %v686 = vunpack.c.l.b16 %v653
        %v687 = vunpack.c.l.b16 %v654
        %v688 = vunpack.c.l.b16 %v655
        %v689 = vunpack.c.l.b16 %v656
        %v690 = vpack.c.b16 %v687, %v686
        %v691 = vpack.c.b16 %v689, %v688
        %vm692 = vcmask 48128
        %v694 = vsel %vm692, %v690, 0
        %v697 = vsel %vm692, %v691, 0
        %vm699 = vcmask 1042432
        %v701 = vsel %vm699, %v657, 0
        %703 = vmatprep.subr.bf16.mxu0 0
        %704 = vmatpush1.bf16.msra.mxu0 %v701
        %705 = vmatprep.subr.bf16.mxu0 0
        %706 = vmatpush1.bf16.msra.mxu0 0
        %707 = vmatprep.subr.bf16.mxu0 0
        %708 = vmatpush1.bf16.msra.mxu0 0
        %709 = vmatprep.subr.bf16.mxu0 0
        %710 = vmatpush1.bf16.msra.mxu0 0
        %711 = vmatprep.subr.bf16.mxu0 0
        %712 = vmatpush1.bf16.msra.mxu0 0
        %713 = vmatprep.subr.bf16.mxu0 0
        %714 = vmatpush1.bf16.msra.mxu0 0
        %715 = vmatprep.subr.bf16.mxu0 0
        %716 = vmatpush1.bf16.msra.mxu0 0
        %717 = vmatprep.subr.bf16.mxu0 0
        %718 = vmatpush1.bf16.msra.mxu0 0
        %719 = vmatprep.subr.bf16.mxu0 0
        %720 = vmatpush1.bf16.msra.mxu0 0
        %721 = vmatprep.subr.bf16.mxu0 0
        %722 = vmatpush1.bf16.msra.mxu0 0
        %723 = vmatprep.subr.bf16.mxu0 0
        %724 = vmatpush1.bf16.msra.mxu0 0
        %725 = vmatprep.subr.bf16.mxu0 0
        %726 = vmatpush1.bf16.msra.mxu0 0
        %727 = vmatprep.subr.bf16.mxu0 0
        %728 = vmatpush1.bf16.msra.mxu0 0
        %729 = vmatprep.subr.bf16.mxu0 0
        %730 = vmatpush1.bf16.msra.mxu0 0
        %731 = vmatprep.subr.bf16.mxu0 0
        %732 = vmatpush1.bf16.msra.mxu0 0
        %733 = vmatprep.subr.bf16.mxu0 0
        %734 = vmatpush1.bf16.msra.mxu0 0
        %735 = vmatprep.mubr.bf16.mxu0 0
        %736 = vmatmul.mubr.bf16.gmra.mrb[0].mxu0 %v694
        %v737 = vpop.f32.mrb[0].mxu0
        %v738 = vadd.f32 %v665, %v737
        %v739 = vpop.f32.mrb[0].mxu0
        %v740 = vpop.f32.mrb[0].mxu0
        %v741 = vadd.f32 %v670, %v740
        %v742 = vpop.f32.mrb[0].mxu0
        %743 = vmatprep.mubr.bf16.mxu0 0
        %744 = vmatmul.mubr.bf16.gmra.mrb[0].mxu0 %v697
        %v745 = vpop.f32.mrb[0].mxu0
        %v746 = vadd.f32 %v675, %v745
        %v747 = vpop.f32.mrb[0].mxu0
        %v748 = vpop.f32.mrb[0].mxu0
        %v749 = vadd.f32 %v680, %v748
        %v750 = vpop.f32.mrb[0].mxu0
        %751 = vdwg.mxu0
        %v752 = vmax.f32 %v738, 0.0
        %v753 = vmax.f32 %v741, 0.0
        %v754 = vmax.f32 %v746, 0.0
        %v755 = vmax.f32 %v749, 0.0
        %vm756 = vcmask 392192
        %757 = vst.msk [vmem:[#allocation2] sm:$0xff] %vm756, %v752
        %758 = vst.msk [vmem:[#allocation2 + $0x8] sm:$0xff] %vm756, %v753
        %759 = vst.msk [vmem:[#allocation2 + $0x10] sm:$0xff] %vm756, %v754
        %760 = vst.msk [vmem:[#allocation2 + $0x18] sm:$0xff] %vm756, %v755
        %761 = vst.msk [vmem:[#allocation3] sm:$0xff] %vm756, %v752
        %762 = vst.msk [vmem:[#allocation3 + $0x8] sm:$0xff] %vm756, %v753
        %763 = vst.msk [vmem:[#allocation3 + $0x10] sm:$0xff] %vm756, %v754
        %764 = vst.msk [vmem:[#allocation3 + $0x18] sm:$0xff] %vm756, %v755
      $region100: #{gilmer_forward.2} parent=95 // pred_fallthru
        _
      // Predicated region
      $region101: #{gilmer_forward.2} parent=95 // pred_check
        %p765 = pneg %p648
      $region102: #{gilmer_forward.2} parent=95 // pred_check_branch
        %767 = sbr.rel (%p765) target = $region104
      $region103: #{gilmer_forward.2} parent=95 // pred_region
        %vm768 = vcmask 392192
        %769 = vst.msk [vmem:[#allocation4] sm:$0xff] %vm768, 0.0
        %770 = vst.msk [vmem:[#allocation4 + $0x8] sm:$0xff] %vm768, 0.0
        %771 = vst.msk [vmem:[#allocation4 + $0x10] sm:$0xff] %vm768, 0.0
        %772 = vst.msk [vmem:[#allocation4 + $0x18] sm:$0xff] %vm768, 0.0
      $region104: #{gilmer_forward.2} parent=95 // pred_fallthru
        _
      %v773 = vld [vmem:[%s7] sm:$0xf]
      %v774 = vld [vmem:[%s7 + $0x4] sm:$0xf]
      %v775 = vld [vmem:[%s7 + $0x8] sm:$0xf]
      %v776 = vld [vmem:[%s7 + $0xc] sm:$0xf]
      %v777 = vld [vmem:[%s7 + $0x10] sm:$0xf]
      %v778 = vld [vmem:[%s7 + $0x14] sm:$0xf]
      %v779 = vld [vmem:[%s7 + $0x18] sm:$0xf]
      %v780 = vld [vmem:[%s7 + $0x1c] sm:$0xf]
      %v781 = vld [vmem:[%s7 + $0x20] sm:$0xf]
      %v782 = vld [vmem:[%s7 + $0x24] sm:$0xf]
      %v783 = vld [vmem:[%s7 + $0x28] sm:$0xf]
      %v784 = vld [vmem:[%s7 + $0x2c] sm:$0xf]
      %v785 = vld [vmem:[%s7 + $0x30] sm:$0xf]
      %v786 = vld [vmem:[%s7 + $0x34] sm:$0xf]
      %v787 = vld [vmem:[%s7 + $0x38] sm:$0xf]
      %v788 = vld [vmem:[%s7 + $0x3c] sm:$0xf]
      %v789 = vld [vmem:[%s644] sm:$0xf]
      %v790 = vld [vmem:[%s8] sm:$0xff]
      %v791 = vld [vmem:[%s8 + $0x8] sm:$0xff]
      %v792 = vld [vmem:[%s8 + $0x10] sm:$0xff]
      %v793 = vld [vmem:[%s8 + $0x18] sm:$0xff]
      %v794 = vld [vmem:[%s8 + $0x20] sm:$0xff]
      %v795 = vld [vmem:[%s8 + $0x28] sm:$0xff]
      %v796 = vld [vmem:[%s8 + $0x30] sm:$0xff]
      %v797 = vld [vmem:[%s8 + $0x38] sm:$0xff]
      %v798 = vld [vmem:[%s8 + $0x40] sm:$0xff]
      %v799 = vld [vmem:[%s8 + $0x48] sm:$0xff]
      %v800 = vld [vmem:[%s8 + $0x50] sm:$0xff]
      %v801 = vld [vmem:[%s8 + $0x58] sm:$0xff]
      %v802 = vld [vmem:[%s8 + $0x60] sm:$0xff]
      %v803 = vld [vmem:[%s8 + $0x68] sm:$0xff]
      %v804 = vld [vmem:[%s8 + $0x70] sm:$0xff]
      %v805 = vld [vmem:[%s8 + $0x78] sm:$0xff]
      %807 = vset.pattern.permute.xlu0 0
      %808 = vperm.xlu0 %807, %v790
      %v809 = vpop.permute.xlu0 %808
      %812 = vset.pattern.permute.xlu0 0
      %813 = vperm.xlu0 %812, %v791
      %v814 = vpop.permute.xlu0 %813
      %817 = vset.pattern.permute.xlu0 0
      %818 = vperm.xlu0 %817, %v792
      %v819 = vpop.permute.xlu0 %818
      %822 = vset.pattern.permute.xlu0 0
      %823 = vperm.xlu0 %822, %v793
      %v824 = vpop.permute.xlu0 %823
      %827 = vset.pattern.permute.xlu0 0
      %828 = vperm.xlu0 %827, %v794
      %v829 = vpop.permute.xlu0 %828
      %832 = vset.pattern.permute.xlu0 0
      %833 = vperm.xlu0 %832, %v795
      %v834 = vpop.permute.xlu0 %833
      %837 = vset.pattern.permute.xlu0 0
      %838 = vperm.xlu0 %837, %v796
      %v839 = vpop.permute.xlu0 %838
      %842 = vset.pattern.permute.xlu0 0
      %843 = vperm.xlu0 %842, %v797
      %v844 = vpop.permute.xlu0 %843
      %847 = vset.pattern.permute.xlu0 0
      %848 = vperm.xlu0 %847, %v798
      %v849 = vpop.permute.xlu0 %848
      %852 = vset.pattern.permute.xlu0 0
      %853 = vperm.xlu0 %852, %v799
      %v854 = vpop.permute.xlu0 %853
      %857 = vset.pattern.permute.xlu0 0
      %858 = vperm.xlu0 %857, %v800
      %v859 = vpop.permute.xlu0 %858
      %862 = vset.pattern.permute.xlu0 0
      %863 = vperm.xlu0 %862, %v801
      %v864 = vpop.permute.xlu0 %863
      %867 = vset.pattern.permute.xlu0 0
      %868 = vperm.xlu0 %867, %v802
      %v869 = vpop.permute.xlu0 %868
      %872 = vset.pattern.permute.xlu0 0
      %873 = vperm.xlu0 %872, %v803
      %v874 = vpop.permute.xlu0 %873
      %877 = vset.pattern.permute.xlu0 0
      %878 = vperm.xlu0 %877, %v804
      %v879 = vpop.permute.xlu0 %878
      %882 = vset.pattern.permute.xlu0 0
      %883 = vperm.xlu0 %882, %v805
      %v884 = vpop.permute.xlu0 %883
      %v902 = vunpack.c.l.b16 %v773
      %v903 = vunpack.c.l.b16 %v774
      %v904 = vunpack.c.l.b16 %v775
      %v905 = vunpack.c.l.b16 %v776
      %v906 = vunpack.c.l.b16 %v777
      %v907 = vunpack.c.l.b16 %v778
      %v908 = vunpack.c.l.b16 %v779
      %v909 = vunpack.c.l.b16 %v780
      %v910 = vunpack.c.l.b16 %v781
      %v911 = vunpack.c.l.b16 %v782
      %v912 = vunpack.c.l.b16 %v783
      %v913 = vunpack.c.l.b16 %v784
      %v914 = vunpack.c.l.b16 %v785
      %v915 = vunpack.c.l.b16 %v786
      %v916 = vunpack.c.l.b16 %v787
      %v917 = vunpack.c.l.b16 %v788
      %v918 = vpack.c.b16 %v903, %v902
      %v919 = vpack.c.b16 %v905, %v904
      %v920 = vpack.c.b16 %v907, %v906
      %v921 = vpack.c.b16 %v909, %v908
      %v922 = vpack.c.b16 %v911, %v910
      %v923 = vpack.c.b16 %v913, %v912
      %v924 = vpack.c.b16 %v915, %v914
      %v925 = vpack.c.b16 %v917, %v916
      %v928 = vunpack.c.l.s4 1983009808
      %v929 = vunpack.c.0.s8 %v928
      %v930 = vlaneseq
      %v931 = vshrl.u32 %v930, 7
      %v932 = vsub.s32 %v929, %v931
      %v933 = vrot.slane %v789, %v932
      %v934 = vcombine.high %v933, %v933
      %vm935 = vcmask 31744
      %v937 = vsel %vm935, %v918, 0
      %v940 = vsel %vm935, %v919, 0
      %v943 = vsel %vm935, %v920, 0
      %v946 = vsel %vm935, %v921, 0
      %v949 = vsel %vm935, %v922, 0
      %v952 = vsel %vm935, %v923, 0
      %v955 = vsel %vm935, %v924, 0
      %v958 = vsel %vm935, %v925, 0
      %vm960 = vcmask 1041408
      %v962 = vsel %vm960, %v933, 0
      %v965 = vsel %vm960, %v934, 0
      %967 = vmatprep.subr.bf16.mxu0 %v965
      %968 = vmatpush1.bf16.msra.mxu0 %v962
      %969 = vmatprep.subr.bf16.mxu0 0
      %970 = vmatpush1.bf16.msra.mxu0 0
      %971 = vmatprep.subr.bf16.mxu0 0
      %972 = vmatpush1.bf16.msra.mxu0 0
      %973 = vmatprep.subr.bf16.mxu0 0
      %974 = vmatpush1.bf16.msra.mxu0 0
      %975 = vmatprep.subr.bf16.mxu0 0
      %976 = vmatpush1.bf16.msra.mxu0 0
      %977 = vmatprep.subr.bf16.mxu0 0
      %978 = vmatpush1.bf16.msra.mxu0 0
      %979 = vmatprep.subr.bf16.mxu0 0
      %980 = vmatpush1.bf16.msra.mxu0 0
      %981 = vmatprep.subr.bf16.mxu0 0
      %982 = vmatpush1.bf16.msra.mxu0 0
      %983 = vmatprep.subr.bf16.mxu0 0
      %984 = vmatpush1.bf16.msra.mxu0 0
      %985 = vmatprep.subr.bf16.mxu0 0
      %986 = vmatpush1.bf16.msra.mxu0 0
      %987 = vmatprep.subr.bf16.mxu0 0
      %988 = vmatpush1.bf16.msra.mxu0 0
      %989 = vmatprep.subr.bf16.mxu0 0
      %990 = vmatpush1.bf16.msra.mxu0 0
      %991 = vmatprep.subr.bf16.mxu0 0
      %992 = vmatpush1.bf16.msra.mxu0 0
      %993 = vmatprep.subr.bf16.mxu0 0
      %994 = vmatpush1.bf16.msra.mxu0 0
      %995 = vmatprep.subr.bf16.mxu0 0
      %996 = vmatpush1.bf16.msra.mxu0 0
      %997 = vmatprep.subr.bf16.mxu0 0
      %998 = vmatpush1.bf16.msra.mxu0 0
      %999 = vmatprep.mubr.bf16.mxu0 0
      %1000 = vmatmul.mubr.bf16.gmra.mrb[0].mxu0 %v937
      %v1001 = vpop.f32.mrb[0].mxu0
      %v1002 = vadd.f32 %v809, %v1001
      %v1003 = vpop.f32.mrb[0].mxu0
      %v1004 = vadd.f32 %v809, %v1003
      %v1005 = vpop.f32.mrb[0].mxu0
      %v1006 = vadd.f32 %v814, %v1005
      %v1007 = vpop.f32.mrb[0].mxu0
      %v1008 = vadd.f32 %v814, %v1007
      %1009 = vmatprep.mubr.bf16.mxu0 0
      %1010 = vmatmul.mubr.bf16.gmra.mrb[0].mxu0 %v940
      %v1011 = vpop.f32.mrb[0].mxu0
      %v1012 = vadd.f32 %v819, %v1011
      %v1013 = vpop.f32.mrb[0].mxu0
      %v1014 = vadd.f32 %v819, %v1013
      %v1015 = vpop.f32.mrb[0].mxu0
      %v1016 = vadd.f32 %v824, %v1015
      %v1017 = vpop.f32.mrb[0].mxu0
      %v1018 = vadd.f32 %v824, %v1017
      %1019 = vmatprep.mubr.bf16.mxu0 0
      %1020 = vmatmul.mubr.bf16.gmra.mrb[0].mxu0 %v943
      %v1021 = vpop.f32.mrb[0].mxu0
      %v1022 = vadd.f32 %v829, %v1021
      %v1023 = vpop.f32.mrb[0].mxu0
      %v1024 = vadd.f32 %v829, %v1023
      %v1025 = vpop.f32.mrb[0].mxu0
      %v1026 = vadd.f32 %v834, %v1025
      %v1027 = vpop.f32.mrb[0].mxu0
      %v1028 = vadd.f32 %v834, %v1027
      %1029 = vmatprep.mubr.bf16.mxu0 0
      %1030 = vmatmul.mubr.bf16.gmra.mrb[0].mxu0 %v946
      %v1031 = vpop.f32.mrb[0].mxu0
      %v1032 = vadd.f32 %v839, %v1031
      %v1033 = vpop.f32.mrb[0].mxu0
      %v1034 = vadd.f32 %v839, %v1033
      %v1035 = vpop.f32.mrb[0].mxu0
      %v1036 = vadd.f32 %v844, %v1035
      %v1037 = vpop.f32.mrb[0].mxu0
      %v1038 = vadd.f32 %v844, %v1037
      %1039 = vmatprep.mubr.bf16.mxu0 0
      %1040 = vmatmul.mubr.bf16.gmra.mrb[0].mxu0 %v949
      %v1041 = vpop.f32.mrb[0].mxu0
      %v1042 = vadd.f32 %v849, %v1041
      %v1043 = vpop.f32.mrb[0].mxu0
      %v1044 = vadd.f32 %v849, %v1043
      %v1045 = vpop.f32.mrb[0].mxu0
      %v1046 = vadd.f32 %v854, %v1045
      %v1047 = vpop.f32.mrb[0].mxu0
      %v1048 = vadd.f32 %v854, %v1047
      %1049 = vmatprep.mubr.bf16.mxu0 0
      %1050 = vmatmul.mubr.bf16.gmra.mrb[0].mxu0 %v952
      %v1051 = vpop.f32.mrb[0].mxu0
      %v1052 = vadd.f32 %v859, %v1051
      %v1053 = vpop.f32.mrb[0].mxu0
      %v1054 = vadd.f32 %v859, %v1053
      %v1055 = vpop.f32.mrb[0].mxu0
      %v1056 = vadd.f32 %v864, %v1055
      %v1057 = vpop.f32.mrb[0].mxu0
      %v1058 = vadd.f32 %v864, %v1057
      %1059 = vmatprep.mubr.bf16.mxu0 0
      %1060 = vmatmul.mubr.bf16.gmra.mrb[0].mxu0 %v955
      %v1061 = vpop.f32.mrb[0].mxu0
      %v1062 = vadd.f32 %v869, %v1061
      %v1063 = vpop.f32.mrb[0].mxu0
      %v1064 = vadd.f32 %v869, %v1063
      %v1065 = vpop.f32.mrb[0].mxu0
      %v1066 = vadd.f32 %v874, %v1065
      %v1067 = vpop.f32.mrb[0].mxu0
      %v1068 = vadd.f32 %v874, %v1067
      %1069 = vmatprep.mubr.bf16.mxu0 0
      %1070 = vmatmul.mubr.bf16.gmra.mrb[0].mxu0 %v958
      %v1071 = vpop.f32.mrb[0].mxu0
      %v1072 = vadd.f32 %v879, %v1071
      %v1073 = vpop.f32.mrb[0].mxu0
      %v1074 = vadd.f32 %v879, %v1073
      %v1075 = vpop.f32.mrb[0].mxu0
      %v1076 = vadd.f32 %v884, %v1075
      %v1077 = vpop.f32.mrb[0].mxu0
      %v1078 = vadd.f32 %v884, %v1077
      %1079 = vdwg.mxu0
      %v1080 = vmax.f32 %v1002, 0.0
      %v1081 = vmax.f32 %v1004, 0.0
      %v1082 = vmax.f32 %v1006, 0.0
      %v1083 = vmax.f32 %v1008, 0.0
      %v1084 = vmax.f32 %v1012, 0.0
      %v1085 = vmax.f32 %v1014, 0.0
      %v1086 = vmax.f32 %v1016, 0.0
      %v1087 = vmax.f32 %v1018, 0.0
      %v1088 = vmax.f32 %v1022, 0.0
      %v1089 = vmax.f32 %v1024, 0.0
      %v1090 = vmax.f32 %v1026, 0.0
      %v1091 = vmax.f32 %v1028, 0.0
      %v1092 = vmax.f32 %v1032, 0.0
      %v1093 = vmax.f32 %v1034, 0.0
      %v1094 = vmax.f32 %v1036, 0.0
      %v1095 = vmax.f32 %v1038, 0.0
      %v1096 = vmax.f32 %v1042, 0.0
      %v1097 = vmax.f32 %v1044, 0.0
      %v1098 = vmax.f32 %v1046, 0.0
      %v1099 = vmax.f32 %v1048, 0.0
      %v1100 = vmax.f32 %v1052, 0.0
      %v1101 = vmax.f32 %v1054, 0.0
      %v1102 = vmax.f32 %v1056, 0.0
      %v1103 = vmax.f32 %v1058, 0.0
      %v1104 = vmax.f32 %v1062, 0.0
      %v1105 = vmax.f32 %v1064, 0.0
      %v1106 = vmax.f32 %v1066, 0.0
      %v1107 = vmax.f32 %v1068, 0.0
      %v1108 = vmax.f32 %v1072, 0.0
      %v1109 = vmax.f32 %v1074, 0.0
      %v1110 = vmax.f32 %v1076, 0.0
      %v1111 = vmax.f32 %v1078, 0.0
      %v1112 = vld [vmem:[%s9] sm:$0xf]
      %v1113 = vld [vmem:[%s9 + $0x4] sm:$0xf]
      %v1114 = vld [vmem:[%s9 + $0x8] sm:$0xf]
      %v1115 = vld [vmem:[%s9 + $0xc] sm:$0xf]
      %v1116 = vld [vmem:[%s9 + $0x10] sm:$0xf]
      %v1117 = vld [vmem:[%s9 + $0x14] sm:$0xf]
      %v1118 = vld [vmem:[%s9 + $0x18] sm:$0xf]
      %v1119 = vld [vmem:[%s9 + $0x1c] sm:$0xf]
      %v1120 = vld [vmem:[%s9 + $0x20] sm:$0xf]
      %v1121 = vld [vmem:[%s9 + $0x24] sm:$0xf]
      %v1122 = vld [vmem:[%s9 + $0x28] sm:$0xf]
      %v1123 = vld [vmem:[%s9 + $0x2c] sm:$0xf]
      %v1124 = vld [vmem:[%s9 + $0x30] sm:$0xf]
      %v1125 = vld [vmem:[%s9 + $0x34] sm:$0xf]
      %v1126 = vld [vmem:[%s9 + $0x38] sm:$0xf]
      %v1127 = vld [vmem:[%s9 + $0x3c] sm:$0xf]
      %v1128 = vld [vmem:[%s9 + $0x40] sm:$0xf]
      %v1129 = vld [vmem:[%s9 + $0x44] sm:$0xf]
      %v1130 = vld [vmem:[%s9 + $0x48] sm:$0xf]
      %v1131 = vld [vmem:[%s9 + $0x4c] sm:$0xf]
      %v1132 = vld [vmem:[%s9 + $0x50] sm:$0xf]
      %v1133 = vld [vmem:[%s9 + $0x54] sm:$0xf]
      %v1134 = vld [vmem:[%s9 + $0x58] sm:$0xf]
      %v1135 = vld [vmem:[%s9 + $0x5c] sm:$0xf]
      %v1136 = vld [vmem:[%s9 + $0x60] sm:$0xf]
      %v1137 = vld [vmem:[%s9 + $0x64] sm:$0xf]
      %v1138 = vld [vmem:[%s9 + $0x68] sm:$0xf]
      %v1139 = vld [vmem:[%s9 + $0x6c] sm:$0xf]
      %v1140 = vld [vmem:[%s9 + $0x70] sm:$0xf]
      %v1141 = vld [vmem:[%s9 + $0x74] sm:$0xf]
      %v1142 = vld [vmem:[%s9 + $0x78] sm:$0xf]
      %v1143 = vld [vmem:[%s9 + $0x7c] sm:$0xf]
      %v1144 = vld [vmem:[%s9 + $0x80] sm:$0xf]
      %v1145 = vld [vmem:[%s9 + $0x84] sm:$0xf]
      %v1146 = vld [vmem:[%s9 + $0x88] sm:$0xf]
      %v1147 = vld [vmem:[%s9 + $0x8c] sm:$0xf]
      %v1148 = vld [vmem:[%s9 + $0x90] sm:$0xf]
      %v1149 = vld [vmem:[%s9 + $0x94] sm:$0xf]
      %v1150 = vld [vmem:[%s9 + $0x98] sm:$0xf]
      %v1151 = vld [vmem:[%s9 + $0x9c] sm:$0xf]
      %v1152 = vld [vmem:[%s9 + $0xa0] sm:$0xf]
      %v1153 = vld [vmem:[%s9 + $0xa4] sm:$0xf]
      %v1154 = vld [vmem:[%s9 + $0xa8] sm:$0xf]
      %v1155 = vld [vmem:[%s9 + $0xac] sm:$0xf]
      %v1156 = vld [vmem:[%s9 + $0xb0] sm:$0xf]
      %v1157 = vld [vmem:[%s9 + $0xb4] sm:$0xf]
      %v1158 = vld [vmem:[%s9 + $0xb8] sm:$0xf]
      %v1159 = vld [vmem:[%s9 + $0xbc] sm:$0xf]
      %v1160 = vld [vmem:[%s9 + $0xc0] sm:$0xf]
      %v1161 = vld [vmem:[%s9 + $0xc4] sm:$0xf]
      %v1162 = vld [vmem:[%s9 + $0xc8] sm:$0xf]
      %v1163 = vld [vmem:[%s9 + $0xcc] sm:$0xf]
      %v1164 = vld [vmem:[%s9 + $0xd0] sm:$0xf]
      %v1165 = vld [vmem:[%s9 + $0xd4] sm:$0xf]
      %v1166 = vld [vmem:[%s9 + $0xd8] sm:$0xf]
      %v1167 = vld [vmem:[%s9 + $0xdc] sm:$0xf]
      %v1168 = vld [vmem:[%s9 + $0xe0] sm:$0xf]
      %v1169 = vld [vmem:[%s9 + $0xe4] sm:$0xf]
      %v1170 = vld [vmem:[%s9 + $0xe8] sm:$0xf]
      %v1171 = vld [vmem:[%s9 + $0xec] sm:$0xf]
      %v1172 = vld [vmem:[%s9 + $0xf0] sm:$0xf]
      %v1173 = vld [vmem:[%s9 + $0xf4] sm:$0xf]
      %v1174 = vld [vmem:[%s9 + $0xf8] sm:$0xf]
      %v1175 = vld [vmem:[%s9 + $0xfc] sm:$0xf]
      %v1176 = vld [vmem:[%s9 + $0x100] sm:$0xf]
      %v1177 = vld [vmem:[%s9 + $0x104] sm:$0xf]
      %v1178 = vld [vmem:[%s9 + $0x108] sm:$0xf]
      %v1179 = vld [vmem:[%s9 + $0x10c] sm:$0xf]
      %v1180 = vld [vmem:[%s9 + $0x110] sm:$0xf]
      %v1181 = vld [vmem:[%s9 + $0x114] sm:$0xf]
      %v1182 = vld [vmem:[%s9 + $0x118] sm:$0xf]
      %v1183 = vld [vmem:[%s9 + $0x11c] sm:$0xf]
      %v1184 = vld [vmem:[%s9 + $0x120] sm:$0xf]
      %v1185 = vld [vmem:[%s9 + $0x124] sm:$0xf]
      %v1186 = vld [vmem:[%s9 + $0x128] sm:$0xf]
      %v1187 = vld [vmem:[%s9 + $0x12c] sm:$0xf]
      %v1188 = vld [vmem:[%s9 + $0x130] sm:$0xf]
      %v1189 = vld [vmem:[%s9 + $0x134] sm:$0xf]
      %v1190 = vld [vmem:[%s9 + $0x138] sm:$0xf]
      %v1191 = vld [vmem:[%s9 + $0x13c] sm:$0xf]
      %v1192 = vld [vmem:[%s9 + $0x140] sm:$0xf]
      %v1193 = vld [vmem:[%s9 + $0x144] sm:$0xf]
      %v1194 = vld [vmem:[%s9 + $0x148] sm:$0xf]
      %v1195 = vld [vmem:[%s9 + $0x14c] sm:$0xf]
      %v1196 = vld [vmem:[%s9 + $0x150] sm:$0xf]
      %v1197 = vld [vmem:[%s9 + $0x154] sm:$0xf]
      %v1198 = vld [vmem:[%s9 + $0x158] sm:$0xf]
      %v1199 = vld [vmem:[%s9 + $0x15c] sm:$0xf]
      %v1200 = vld [vmem:[%s9 + $0x160] sm:$0xf]
      %v1201 = vld [vmem:[%s9 + $0x164] sm:$0xf]
      %v1202 = vld [vmem:[%s9 + $0x168] sm:$0xf]
      %v1203 = vld [vmem:[%s9 + $0x16c] sm:$0xf]
      %v1204 = vld [vmem:[%s9 + $0x170] sm:$0xf]
      %v1205 = vld [vmem:[%s9 + $0x174] sm:$0xf]
      %v1206 = vld [vmem:[%s9 + $0x178] sm:$0xf]
      %v1207 = vld [vmem:[%s9 + $0x17c] sm:$0xf]
      %v1208 = vld [vmem:[%s9 + $0x180] sm:$0xf]
      %v1209 = vld [vmem:[%s9 + $0x184] sm:$0xf]
      %v1210 = vld [vmem:[%s9 + $0x188] sm:$0xf]
      %v1211 = vld [vmem:[%s9 + $0x18c] sm:$0xf]
      %v1212 = vld [vmem:[%s9 + $0x190] sm:$0xf]
      %v1213 = vld [vmem:[%s9 + $0x194] sm:$0xf]
      %v1214 = vld [vmem:[%s9 + $0x198] sm:$0xf]
      %v1215 = vld [vmem:[%s9 + $0x19c] sm:$0xf]
      %v1216 = vld [vmem:[%s9 + $0x1a0] sm:$0xf]
      %v1217 = vld [vmem:[%s9 + $0x1a4] sm:$0xf]
      %v1218 = vld [vmem:[%s9 + $0x1a8] sm:$0xf]
      %v1219 = vld [vmem:[%s9 + $0x1ac] sm:$0xf]
      %v1220 = vld [vmem:[%s9 + $0x1b0] sm:$0xf]
      %v1221 = vld [vmem:[%s9 + $0x1b4] sm:$0xf]
      %v1222 = vld [vmem:[%s9 + $0x1b8] sm:$0xf]
      %v1223 = vld [vmem:[%s9 + $0x1bc] sm:$0xf]
      %v1224 = vld [vmem:[%s9 + $0x1c0] sm:$0xf]
      %v1225 = vld [vmem:[%s9 + $0x1c4] sm:$0xf]
      %v1226 = vld [vmem:[%s9 + $0x1c8] sm:$0xf]
      %v1227 = vld [vmem:[%s9 + $0x1cc] sm:$0xf]
      %v1228 = vld [vmem:[%s9 + $0x1d0] sm:$0xf]
      %v1229 = vld [vmem:[%s9 + $0x1d4] sm:$0xf]
      %v1230 = vld [vmem:[%s9 + $0x1d8] sm:$0xf]
      %v1231 = vld [vmem:[%s9 + $0x1dc] sm:$0xf]
      %v1232 = vld [vmem:[%s9 + $0x1e0] sm:$0xf]
      %v1233 = vld [vmem:[%s9 + $0x1e4] sm:$0xf]
      %v1234 = vld [vmem:[%s9 + $0x1e8] sm:$0xf]
      %v1235 = vld [vmem:[%s9 + $0x1ec] sm:$0xf]
      %v1236 = vld [vmem:[%s9 + $0x1f0] sm:$0xf]
      %v1237 = vld [vmem:[%s9 + $0x1f4] sm:$0xf]
      %v1238 = vld [vmem:[%s9 + $0x1f8] sm:$0xf]
      %v1239 = vld [vmem:[%s9 + $0x1fc] sm:$0xf]
      %v1240 = vpack.c.bf16 %v1082, %v1080
      %v1241 = vpack.c.bf16 %v1083, %v1081
      %v1242 = vpack.c.bf16 %v1086, %v1084
      %v1243 = vpack.c.bf16 %v1087, %v1085
      %v1244 = vpack.c.bf16 %v1090, %v1088
      %v1245 = vpack.c.bf16 %v1091, %v1089
      %v1246 = vpack.c.bf16 %v1094, %v1092
      %v1247 = vpack.c.bf16 %v1095, %v1093
      %v1248 = vpack.c.bf16 %v1098, %v1096
      %v1249 = vpack.c.bf16 %v1099, %v1097
      %v1250 = vpack.c.bf16 %v1102, %v1100
      %v1251 = vpack.c.bf16 %v1103, %v1101
      %v1252 = vpack.c.bf16 %v1106, %v1104
      %v1253 = vpack.c.bf16 %v1107, %v1105
      %v1254 = vpack.c.bf16 %v1110, %v1108
      %v1255 = vpack.c.bf16 %v1111, %v1109
      %v1256 = vld [vmem:[%s10] sm:$0xff]
      %v1257 = vld [vmem:[%s10 + $0x8] sm:$0xff]
      %v1258 = vld [vmem:[%s10 + $0x10] sm:$0xff]
      %v1259 = vld [vmem:[%s10 + $0x18] sm:$0xff]
      %v1260 = vld [vmem:[%s10 + $0x20] sm:$0xff]
      %v1261 = vld [vmem:[%s10 + $0x28] sm:$0xff]
      %v1262 = vld [vmem:[%s10 + $0x30] sm:$0xff]
      %v1263 = vld [vmem:[%s10 + $0x38] sm:$0xff]
      %v1264 = vld [vmem:[%s10 + $0x40] sm:$0xff]
      %v1265 = vld [vmem:[%s10 + $0x48] sm:$0xff]
      %v1266 = vld [vmem:[%s10 + $0x50] sm:$0xff]
      %v1267 = vld [vmem:[%s10 + $0x58] sm:$0xff]
      %v1268 = vld [vmem:[%s10 + $0x60] sm:$0xff]
      %v1269 = vld [vmem:[%s10 + $0x68] sm:$0xff]
      %v1270 = vld [vmem:[%s10 + $0x70] sm:$0xff]
      %v1271 = vld [vmem:[%s10 + $0x78] sm:$0xff]
      %v1272 = vld [vmem:[%s10 + $0x80] sm:$0xff]
      %v1273 = vld [vmem:[%s10 + $0x88] sm:$0xff]
      %v1274 = vld [vmem:[%s10 + $0x90] sm:$0xff]
      %v1275 = vld [vmem:[%s10 + $0x98] sm:$0xff]
      %v1276 = vld [vmem:[%s10 + $0xa0] sm:$0xff]
      %v1277 = vld [vmem:[%s10 + $0xa8] sm:$0xff]
      %v1278 = vld [vmem:[%s10 + $0xb0] sm:$0xff]
      %v1279 = vld [vmem:[%s10 + $0xb8] sm:$0xff]
      %v1280 = vld [vmem:[%s10 + $0xc0] sm:$0xff]
      %v1281 = vld [vmem:[%s10 + $0xc8] sm:$0xff]
      %v1282 = vld [vmem:[%s10 + $0xd0] sm:$0xff]
      %v1283 = vld [vmem:[%s10 + $0xd8] sm:$0xff]
      %v1284 = vld [vmem:[%s10 + $0xe0] sm:$0xff]
      %v1285 = vld [vmem:[%s10 + $0xe8] sm:$0xff]
      %v1286 = vld [vmem:[%s10 + $0xf0] sm:$0xff]
      %v1287 = vld [vmem:[%s10 + $0xf8] sm:$0xff]
      %v1288 = vld [vmem:[%s10 + $0x100] sm:$0xff]
      %v1289 = vld [vmem:[%s10 + $0x108] sm:$0xff]
      %v1290 = vld [vmem:[%s10 + $0x110] sm:$0xff]
      %v1291 = vld [vmem:[%s10 + $0x118] sm:$0xff]
      %v1292 = vld [vmem:[%s10 + $0x120] sm:$0xff]
      %v1293 = vld [vmem:[%s10 + $0x128] sm:$0xff]
      %v1294 = vld [vmem:[%s10 + $0x130] sm:$0xff]
      %v1295 = vld [vmem:[%s10 + $0x138] sm:$0xff]
      %v1296 = vld [vmem:[%s10 + $0x140] sm:$0xff]
      %v1297 = vld [vmem:[%s10 + $0x148] sm:$0xff]
      %v1298 = vld [vmem:[%s10 + $0x150] sm:$0xff]
      %v1299 = vld [vmem:[%s10 + $0x158] sm:$0xff]
      %v1300 = vld [vmem:[%s10 + $0x160] sm:$0xff]
      %v1301 = vld [vmem:[%s10 + $0x168] sm:$0xff]
      %v1302 = vld [vmem:[%s10 + $0x170] sm:$0xff]
      %v1303 = vld [vmem:[%s10 + $0x178] sm:$0xff]
      %v1304 = vld [vmem:[%s10 + $0x180] sm:$0xff]
      %v1305 = vld [vmem:[%s10 + $0x188] sm:$0xff]
      %v1306 = vld [vmem:[%s10 + $0x190] sm:$0xff]
      %v1307 = vld [vmem:[%s10 + $0x198] sm:$0xff]
      %v1308 = vld [vmem:[%s10 + $0x1a0] sm:$0xff]
      %v1309 = vld [vmem:[%s10 + $0x1a8] sm:$0xff]
      %v1310 = vld [vmem:[%s10 + $0x1b0] sm:$0xff]
      %v1311 = vld [vmem:[%s10 + $0x1b8] sm:$0xff]
      %v1312 = vld [vmem:[%s10 + $0x1c0] sm:$0xff]
      %v1313 = vld [vmem:[%s10 + $0x1c8] sm:$0xff]
      %v1314 = vld [vmem:[%s10 + $0x1d0] sm:$0xff]
      %v1315 = vld [vmem:[%s10 + $0x1d8] sm:$0xff]
      %v1316 = vld [vmem:[%s10 + $0x1e0] sm:$0xff]
      %v1317 = vld [vmem:[%s10 + $0x1e8] sm:$0xff]
      %v1318 = vld [vmem:[%s10 + $0x1f0] sm:$0xff]
      %v1319 = vld [vmem:[%s10 + $0x1f8] sm:$0xff]
      %v1320 = vld [vmem:[%s10 + $0x200] sm:$0xff]
      %v1321 = vld [vmem:[%s10 + $0x208] sm:$0xff]
      %v1322 = vld [vmem:[%s10 + $0x210] sm:$0xff]
      %v1323 = vld [vmem:[%s10 + $0x218] sm:$0xff]
      %v1324 = vld [vmem:[%s10 + $0x220] sm:$0xff]
      %v1325 = vld [vmem:[%s10 + $0x228] sm:$0xff]
      %v1326 = vld [vmem:[%s10 + $0x230] sm:$0xff]
      %v1327 = vld [vmem:[%s10 + $0x238] sm:$0xff]
      %v1328 = vld [vmem:[%s10 + $0x240] sm:$0xff]
      %v1329 = vld [vmem:[%s10 + $0x248] sm:$0xff]
      %v1330 = vld [vmem:[%s10 + $0x250] sm:$0xff]
      %v1331 = vld [vmem:[%s10 + $0x258] sm:$0xff]
      %v1332 = vld [vmem:[%s10 + $0x260] sm:$0xff]
      %v1333 = vld [vmem:[%s10 + $0x268] sm:$0xff]
      %v1334 = vld [vmem:[%s10 + $0x270] sm:$0xff]
      %v1335 = vld [vmem:[%s10 + $0x278] sm:$0xff]
      %v1336 = vld [vmem:[%s10 + $0x280] sm:$0xff]
      %v1337 = vld [vmem:[%s10 + $0x288] sm:$0xff]
      %v1338 = vld [vmem:[%s10 + $0x290] sm:$0xff]
      %v1339 = vld [vmem:[%s10 + $0x298] sm:$0xff]
      %v1340 = vld [vmem:[%s10 + $0x2a0] sm:$0xff]
      %v1341 = vld [vmem:[%s10 + $0x2a8] sm:$0xff]
      %v1342 = vld [vmem:[%s10 + $0x2b0] sm:$0xff]
      %v1343 = vld [vmem:[%s10 + $0x2b8] sm:$0xff]
      %v1344 = vld [vmem:[%s10 + $0x2c0] sm:$0xff]
      %v1345 = vld [vmem:[%s10 + $0x2c8] sm:$0xff]
      %v1346 = vld [vmem:[%s10 + $0x2d0] sm:$0xff]
      %v1347 = vld [vmem:[%s10 + $0x2d8] sm:$0xff]
      %v1348 = vld [vmem:[%s10 + $0x2e0] sm:$0xff]
      %v1349 = vld [vmem:[%s10 + $0x2e8] sm:$0xff]
      %v1350 = vld [vmem:[%s10 + $0x2f0] sm:$0xff]
      %v1351 = vld [vmem:[%s10 + $0x2f8] sm:$0xff]
      %v1352 = vld [vmem:[%s10 + $0x300] sm:$0xff]
      %v1353 = vld [vmem:[%s10 + $0x308] sm:$0xff]
      %v1354 = vld [vmem:[%s10 + $0x310] sm:$0xff]
      %v1355 = vld [vmem:[%s10 + $0x318] sm:$0xff]
      %v1356 = vld [vmem:[%s10 + $0x320] sm:$0xff]
      %v1357 = vld [vmem:[%s10 + $0x328] sm:$0xff]
      %v1358 = vld [vmem:[%s10 + $0x330] sm:$0xff]
      %v1359 = vld [vmem:[%s10 + $0x338] sm:$0xff]
      %v1360 = vld [vmem:[%s10 + $0x340] sm:$0xff]
      %v1361 = vld [vmem:[%s10 + $0x348] sm:$0xff]
      %v1362 = vld [vmem:[%s10 + $0x350] sm:$0xff]
      %v1363 = vld [vmem:[%s10 + $0x358] sm:$0xff]
      %v1364 = vld [vmem:[%s10 + $0x360] sm:$0xff]
      %v1365 = vld [vmem:[%s10 + $0x368] sm:$0xff]
      %v1366 = vld [vmem:[%s10 + $0x370] sm:$0xff]
      %v1367 = vld [vmem:[%s10 + $0x378] sm:$0xff]
      %v1368 = vld [vmem:[%s10 + $0x380] sm:$0xff]
      %v1369 = vld [vmem:[%s10 + $0x388] sm:$0xff]
      %v1370 = vld [vmem:[%s10 + $0x390] sm:$0xff]
      %v1371 = vld [vmem:[%s10 + $0x398] sm:$0xff]
      %v1372 = vld [vmem:[%s10 + $0x3a0] sm:$0xff]
      %v1373 = vld [vmem:[%s10 + $0x3a8] sm:$0xff]
      %v1374 = vld [vmem:[%s10 + $0x3b0] sm:$0xff]
      %v1375 = vld [vmem:[%s10 + $0x3b8] sm:$0xff]
      %v1376 = vld [vmem:[%s10 + $0x3c0] sm:$0xff]
      %v1377 = vld [vmem:[%s10 + $0x3c8] sm:$0xff]
      %v1378 = vld [vmem:[%s10 + $0x3d0] sm:$0xff]
      %v1379 = vld [vmem:[%s10 + $0x3d8] sm:$0xff]
      %v1380 = vld [vmem:[%s10 + $0x3e0] sm:$0xff]
      %v1381 = vld [vmem:[%s10 + $0x3e8] sm:$0xff]
      %v1382 = vld [vmem:[%s10 + $0x3f0] sm:$0xff]
      %v1383 = vld [vmem:[%s10 + $0x3f8] sm:$0xff]
      %1385 = vset.pattern.permute.xlu0 0
      %1386 = vperm.xlu0 %1385, %v1256
      %v1387 = vpop.permute.xlu0 %1386
      %1390 = vset.pattern.permute.xlu0 0
      %1391 = vperm.xlu0 %1390, %v1257
      %v1392 = vpop.permute.xlu0 %1391
      %1395 = vset.pattern.permute.xlu0 0
      %1396 = vperm.xlu0 %1395, %v1258
      %v1397 = vpop.permute.xlu0 %1396
      %1400 = vset.pattern.permute.xlu0 0
      %1401 = vperm.xlu0 %1400, %v1259
      %v1402 = vpop.permute.xlu0 %1401
      %1405 = vset.pattern.permute.xlu0 0
      %1406 = vperm.xlu0 %1405, %v1260
      %v1407 = vpop.permute.xlu0 %1406
      %1410 = vset.pattern.permute.xlu0 0
      %1411 = vperm.xlu0 %1410, %v1261
      %v1412 = vpop.permute.xlu0 %1411
      %1415 = vset.pattern.permute.xlu0 0
      %1416 = vperm.xlu0 %1415, %v1262
      %v1417 = vpop.permute.xlu0 %1416
      %1420 = vset.pattern.permute.xlu0 0
      %1421 = vperm.xlu0 %1420, %v1263
      %v1422 = vpop.permute.xlu0 %1421
      %1425 = vset.pattern.permute.xlu0 0
      %1426 = vperm.xlu0 %1425, %v1264
      %v1427 = vpop.permute.xlu0 %1426
      %1430 = vset.pattern.permute.xlu0 0
      %1431 = vperm.xlu0 %1430, %v1265
      %v1432 = vpop.permute.xlu0 %1431
      %1435 = vset.pattern.permute.xlu0 0
      %1436 = vperm.xlu0 %1435, %v1266
      %v1437 = vpop.permute.xlu0 %1436
      %1440 = vset.pattern.permute.xlu0 0
      %1441 = vperm.xlu0 %1440, %v1267
      %v1442 = vpop.permute.xlu0 %1441
      %1445 = vset.pattern.permute.xlu0 0
      %1446 = vperm.xlu0 %1445, %v1268
      %v1447 = vpop.permute.xlu0 %1446
      %1450 = vset.pattern.permute.xlu0 0
      %1451 = vperm.xlu0 %1450, %v1269
      %v1452 = vpop.permute.xlu0 %1451
      %1455 = vset.pattern.permute.xlu0 0
      %1456 = vperm.xlu0 %1455, %v1270
      %v1457 = vpop.permute.xlu0 %1456
      %1460 = vset.pattern.permute.xlu0 0
      %1461 = vperm.xlu0 %1460, %v1271
      %v1462 = vpop.permute.xlu0 %1461
      %1465 = vset.pattern.permute.xlu0 0
      %1466 = vperm.xlu0 %1465, %v1272
      %v1467 = vpop.permute.xlu0 %1466
      %1470 = vset.pattern.permute.xlu0 0
      %1471 = vperm.xlu0 %1470, %v1273
      %v1472 = vpop.permute.xlu0 %1471
      %1475 = vset.pattern.permute.xlu0 0
      %1476 = vperm.xlu0 %1475, %v1274
      %v1477 = vpop.permute.xlu0 %1476
      %1480 = vset.pattern.permute.xlu0 0
      %1481 = vperm.xlu0 %1480, %v1275
      %v1482 = vpop.permute.xlu0 %1481
      %1485 = vset.pattern.permute.xlu0 0
      %1486 = vperm.xlu0 %1485, %v1276
      %v1487 = vpop.permute.xlu0 %1486
      %1490 = vset.pattern.permute.xlu0 0
      %1491 = vperm.xlu0 %1490, %v1277
      %v1492 = vpop.permute.xlu0 %1491
      %1495 = vset.pattern.permute.xlu0 0
      %1496 = vperm.xlu0 %1495, %v1278
      %v1497 = vpop.permute.xlu0 %1496
      %1500 = vset.pattern.permute.xlu0 0
      %1501 = vperm.xlu0 %1500, %v1279
      %v1502 = vpop.permute.xlu0 %1501
      %1505 = vset.pattern.permute.xlu0 0
      %1506 = vperm.xlu0 %1505, %v1280
      %v1507 = vpop.permute.xlu0 %1506
      %1510 = vset.pattern.permute.xlu0 0
      %1511 = vperm.xlu0 %1510, %v1281
      %v1512 = vpop.permute.xlu0 %1511
      %1515 = vset.pattern.permute.xlu0 0
      %1516 = vperm.xlu0 %1515, %v1282
      %v1517 = vpop.permute.xlu0 %1516
      %1520 = vset.pattern.permute.xlu0 0
      %1521 = vperm.xlu0 %1520, %v1283
      %v1522 = vpop.permute.xlu0 %1521
      %1525 = vset.pattern.permute.xlu0 0
      %1526 = vperm.xlu0 %1525, %v1284
      %v1527 = vpop.permute.xlu0 %1526
      %1530 = vset.pattern.permute.xlu0 0
      %1531 = vperm.xlu0 %1530, %v1285
      %v1532 = vpop.permute.xlu0 %1531
      %1535 = vset.pattern.permute.xlu0 0
      %1536 = vperm.xlu0 %1535, %v1286
      %v1537 = vpop.permute.xlu0 %1536
      %1540 = vset.pattern.permute.xlu0 0
      %1541 = vperm.xlu0 %1540, %v1287
      %v1542 = vpop.permute.xlu0 %1541
      %1545 = vset.pattern.permute.xlu0 0
      %1546 = vperm.xlu0 %1545, %v1288
      %v1547 = vpop.permute.xlu0 %1546
      %1550 = vset.pattern.permute.xlu0 0
      %1551 = vperm.xlu0 %1550, %v1289
      %v1552 = vpop.permute.xlu0 %1551
      %1555 = vset.pattern.permute.xlu0 0
      %1556 = vperm.xlu0 %1555, %v1290
      %v1557 = vpop.permute.xlu0 %1556
      %1560 = vset.pattern.permute.xlu0 0
      %1561 = vperm.xlu0 %1560, %v1291
      %v1562 = vpop.permute.xlu0 %1561
      %1565 = vset.pattern.permute.xlu0 0
      %1566 = vperm.xlu0 %1565, %v1292
      %v1567 = vpop.permute.xlu0 %1566
      %1570 = vset.pattern.permute.xlu0 0
      %1571 = vperm.xlu0 %1570, %v1293
      %v1572 = vpop.permute.xlu0 %1571
      %1575 = vset.pattern.permute.xlu0 0
      %1576 = vperm.xlu0 %1575, %v1294
      %v1577 = vpop.permute.xlu0 %1576
      %1580 = vset.pattern.permute.xlu0 0
      %1581 = vperm.xlu0 %1580, %v1295
      %v1582 = vpop.permute.xlu0 %1581
      %1585 = vset.pattern.permute.xlu0 0
      %1586 = vperm.xlu0 %1585, %v1296
      %v1587 = vpop.permute.xlu0 %1586
      %1590 = vset.pattern.permute.xlu0 0
      %1591 = vperm.xlu0 %1590, %v1297
      %v1592 = vpop.permute.xlu0 %1591
      %1595 = vset.pattern.permute.xlu0 0
      %1596 = vperm.xlu0 %1595, %v1298
      %v1597 = vpop.permute.xlu0 %1596
      %1600 = vset.pattern.permute.xlu0 0
      %1601 = vperm.xlu0 %1600, %v1299
      %v1602 = vpop.permute.xlu0 %1601
      %1605 = vset.pattern.permute.xlu0 0
      %1606 = vperm.xlu0 %1605, %v1300
      %v1607 = vpop.permute.xlu0 %1606
      %1610 = vset.pattern.permute.xlu0 0
      %1611 = vperm.xlu0 %1610, %v1301
      %v1612 = vpop.permute.xlu0 %1611
      %1615 = vset.pattern.permute.xlu0 0
      %1616 = vperm.xlu0 %1615, %v1302
      %v1617 = vpop.permute.xlu0 %1616
      %1620 = vset.pattern.permute.xlu0 0
      %1621 = vperm.xlu0 %1620, %v1303
      %v1622 = vpop.permute.xlu0 %1621
      %1625 = vset.pattern.permute.xlu0 0
      %1626 = vperm.xlu0 %1625, %v1304
      %v1627 = vpop.permute.xlu0 %1626
      %1630 = vset.pattern.permute.xlu0 0
      %1631 = vperm.xlu0 %1630, %v1305
      %v1632 = vpop.permute.xlu0 %1631
      %1635 = vset.pattern.permute.xlu0 0
      %1636 = vperm.xlu0 %1635, %v1306
      %v1637 = vpop.permute.xlu0 %1636
      %1640 = vset.pattern.permute.xlu0 0
      %1641 = vperm.xlu0 %1640, %v1307
      %v1642 = vpop.permute.xlu0 %1641
      %1645 = vset.pattern.permute.xlu0 0
      %1646 = vperm.xlu0 %1645, %v1308
      %v1647 = vpop.permute.xlu0 %1646
      %1650 = vset.pattern.permute.xlu0 0
      %1651 = vperm.xlu0 %1650, %v1309
      %v1652 = vpop.permute.xlu0 %1651
      %1655 = vset.pattern.permute.xlu0 0
      %1656 = vperm.xlu0 %1655, %v1310
      %v1657 = vpop.permute.xlu0 %1656
      %1660 = vset.pattern.permute.xlu0 0
      %1661 = vperm.xlu0 %1660, %v1311
      %v1662 = vpop.permute.xlu0 %1661
      %1665 = vset.pattern.permute.xlu0 0
      %1666 = vperm.xlu0 %1665, %v1312
      %v1667 = vpop.permute.xlu0 %1666
      %1670 = vset.pattern.permute.xlu0 0
      %1671 = vperm.xlu0 %1670, %v1313
      %v1672 = vpop.permute.xlu0 %1671
      %1675 = vset.pattern.permute.xlu0 0
      %1676 = vperm.xlu0 %1675, %v1314
      %v1677 = vpop.permute.xlu0 %1676
      %1680 = vset.pattern.permute.xlu0 0
      %1681 = vperm.xlu0 %1680, %v1315
      %v1682 = vpop.permute.xlu0 %1681
      %1685 = vset.pattern.permute.xlu0 0
      %1686 = vperm.xlu0 %1685, %v1316
      %v1687 = vpop.permute.xlu0 %1686
      %1690 = vset.pattern.permute.xlu0 0
      %1691 = vperm.xlu0 %1690, %v1317
      %v1692 = vpop.permute.xlu0 %1691
      %1695 = vset.pattern.permute.xlu0 0
      %1696 = vperm.xlu0 %1695, %v1318
      %v1697 = vpop.permute.xlu0 %1696
      %1700 = vset.pattern.permute.xlu0 0
      %1701 = vperm.xlu0 %1700, %v1319
      %v1702 = vpop.permute.xlu0 %1701
      %1705 = vset.pattern.permute.xlu0 0
      %1706 = vperm.xlu0 %1705, %v1320
      %v1707 = vpop.permute.xlu0 %1706
      %1710 = vset.pattern.permute.xlu0 0
      %1711 = vperm.xlu0 %1710, %v1321
      %v1712 = vpop.permute.xlu0 %1711
      %1715 = vset.pattern.permute.xlu0 0
      %1716 = vperm.xlu0 %1715, %v1322
      %v1717 = vpop.permute.xlu0 %1716
      %1720 = vset.pattern.permute.xlu0 0
      %1721 = vperm.xlu0 %1720, %v1323
      %v1722 = vpop.permute.xlu0 %1721
      %1725 = vset.pattern.permute.xlu0 0
      %1726 = vperm.xlu0 %1725, %v1324
      %v1727 = vpop.permute.xlu0 %1726
      %1730 = vset.pattern.permute.xlu0 0
      %1731 = vperm.xlu0 %1730, %v1325
      %v1732 = vpop.permute.xlu0 %1731
      %1735 = vset.pattern.permute.xlu0 0
      %1736 = vperm.xlu0 %1735, %v1326
      %v1737 = vpop.permute.xlu0 %1736
      %1740 = vset.pattern.permute.xlu0 0
      %1741 = vperm.xlu0 %1740, %v1327
      %v1742 = vpop.permute.xlu0 %1741
      %1745 = vset.pattern.permute.xlu0 0
      %1746 = vperm.xlu0 %1745, %v1328
      %v1747 = vpop.permute.xlu0 %1746
      %1750 = vset.pattern.permute.xlu0 0
      %1751 = vperm.xlu0 %1750, %v1329
      %v1752 = vpop.permute.xlu0 %1751
      %1755 = vset.pattern.permute.xlu0 0
      %1756 = vperm.xlu0 %1755, %v1330
      %v1757 = vpop.permute.xlu0 %1756
      %1760 = vset.pattern.permute.xlu0 0
      %1761 = vperm.xlu0 %1760, %v1331
      %v1762 = vpop.permute.xlu0 %1761
      %1765 = vset.pattern.permute.xlu0 0
      %1766 = vperm.xlu0 %1765, %v1332
      %v1767 = vpop.permute.xlu0 %1766
      %1770 = vset.pattern.permute.xlu0 0
      %1771 = vperm.xlu0 %1770, %v1333
      %v1772 = vpop.permute.xlu0 %1771
      %1775 = vset.pattern.permute.xlu0 0
      %1776 = vperm.xlu0 %1775, %v1334
      %v1777 = vpop.permute.xlu0 %1776
      %1780 = vset.pattern.permute.xlu0 0
      %1781 = vperm.xlu0 %1780, %v1335
      %v1782 = vpop.permute.xlu0 %1781
      %1785 = vset.pattern.permute.xlu0 0
      %1786 = vperm.xlu0 %1785, %v1336
      %v1787 = vpop.permute.xlu0 %1786
      %1790 = vset.pattern.permute.xlu0 0
      %1791 = vperm.xlu0 %1790, %v1337
      %v1792 = vpop.permute.xlu0 %1791
      %1795 = vset.pattern.permute.xlu0 0
      %1796 = vperm.xlu0 %1795, %v1338
      %v1797 = vpop.permute.xlu0 %1796
      %1800 = vset.pattern.permute.xlu0 0
      %1801 = vperm.xlu0 %1800, %v1339
      %v1802 = vpop.permute.xlu0 %1801
      %1805 = vset.pattern.permute.xlu0 0
      %1806 = vperm.xlu0 %1805, %v1340
      %v1807 = vpop.permute.xlu0 %1806
      %1810 = vset.pattern.permute.xlu0 0
      %1811 = vperm.xlu0 %1810, %v1341
      %v1812 = vpop.permute.xlu0 %1811
      %1815 = vset.pattern.permute.xlu0 0
      %1816 = vperm.xlu0 %1815, %v1342
      %v1817 = vpop.permute.xlu0 %1816
      %1820 = vset.pattern.permute.xlu0 0
      %1821 = vperm.xlu0 %1820, %v1343
      %v1822 = vpop.permute.xlu0 %1821
      %1825 = vset.pattern.permute.xlu0 0
      %1826 = vperm.xlu0 %1825, %v1344
      %v1827 = vpop.permute.xlu0 %1826
      %1830 = vset.pattern.permute.xlu0 0
      %1831 = vperm.xlu0 %1830, %v1345
      %v1832 = vpop.permute.xlu0 %1831
      %1835 = vset.pattern.permute.xlu0 0
      %1836 = vperm.xlu0 %1835, %v1346
      %v1837 = vpop.permute.xlu0 %1836
      %1840 = vset.pattern.permute.xlu0 0
      %1841 = vperm.xlu0 %1840, %v1347
      %v1842 = vpop.permute.xlu0 %1841
      %1845 = vset.pattern.permute.xlu0 0
      %1846 = vperm.xlu0 %1845, %v1348
      %v1847 = vpop.permute.xlu0 %1846
      %1850 = vset.pattern.permute.xlu0 0
      %1851 = vperm.xlu0 %1850, %v1349
      %v1852 = vpop.permute.xlu0 %1851
      %1855 = vset.pattern.permute.xlu0 0
      %1856 = vperm.xlu0 %1855, %v1350
      %v1857 = vpop.permute.xlu0 %1856
      %1860 = vset.pattern.permute.xlu0 0
      %1861 = vperm.xlu0 %1860, %v1351
      %v1862 = vpop.permute.xlu0 %1861
      %1865 = vset.pattern.permute.xlu0 0
      %1866 = vperm.xlu0 %1865, %v1352
      %v1867 = vpop.permute.xlu0 %1866
      %1870 = vset.pattern.permute.xlu0 0
      %1871 = vperm.xlu0 %1870, %v1353
      %v1872 = vpop.permute.xlu0 %1871
      %1875 = vset.pattern.permute.xlu0 0
      %1876 = vperm.xlu0 %1875, %v1354
      %v1877 = vpop.permute.xlu0 %1876
      %1880 = vset.pattern.permute.xlu0 0
      %1881 = vperm.xlu0 %1880, %v1355
      %v1882 = vpop.permute.xlu0 %1881
      %1885 = vset.pattern.permute.xlu0 0
      %1886 = vperm.xlu0 %1885, %v1356
      %v1887 = vpop.permute.xlu0 %1886
      %1890 = vset.pattern.permute.xlu0 0
      %1891 = vperm.xlu0 %1890, %v1357
      %v1892 = vpop.permute.xlu0 %1891
      %1895 = vset.pattern.permute.xlu0 0
      %1896 = vperm.xlu0 %1895, %v1358
      %v1897 = vpop.permute.xlu0 %1896
      %1900 = vset.pattern.permute.xlu0 0
      %1901 = vperm.xlu0 %1900, %v1359
      %v1902 = vpop.permute.xlu0 %1901
      %1905 = vset.pattern.permute.xlu0 0
      %1906 = vperm.xlu0 %1905, %v1360
      %v1907 = vpop.permute.xlu0 %1906
      %1910 = vset.pattern.permute.xlu0 0
      %1911 = vperm.xlu0 %1910, %v1361
      %v1912 = vpop.permute.xlu0 %1911
      %1915 = vset.pattern.permute.xlu0 0
      %1916 = vperm.xlu0 %1915, %v1362
      %v1917 = vpop.permute.xlu0 %1916
      %1920 = vset.pattern.permute.xlu0 0
      %1921 = vperm.xlu0 %1920, %v1363
      %v1922 = vpop.permute.xlu0 %1921
      %1925 = vset.pattern.permute.xlu0 0
      %1926 = vperm.xlu0 %1925, %v1364
      %v1927 = vpop.permute.xlu0 %1926
      %1930 = vset.pattern.permute.xlu0 0
      %1931 = vperm.xlu0 %1930, %v1365
      %v1932 = vpop.permute.xlu0 %1931
      %1935 = vset.pattern.permute.xlu0 0
      %1936 = vperm.xlu0 %1935, %v1366
      %v1937 = vpop.permute.xlu0 %1936
      %1940 = vset.pattern.permute.xlu0 0
      %1941 = vperm.xlu0 %1940, %v1367
      %v1942 = vpop.permute.xlu0 %1941
      %1945 = vset.pattern.permute.xlu0 0
      %1946 = vperm.xlu0 %1945, %v1368
      %v1947 = vpop.permute.xlu0 %1946
      %1950 = vset.pattern.permute.xlu0 0
      %1951 = vperm.xlu0 %1950, %v1369
      %v1952 = vpop.permute.xlu0 %1951
      %1955 = vset.pattern.permute.xlu0 0
      %1956 = vperm.xlu0 %1955, %v1370
      %v1957 = vpop.permute.xlu0 %1956
      %1960 = vset.pattern.permute.xlu0 0
      %1961 = vperm.xlu0 %1960, %v1371
      %v1962 = vpop.permute.xlu0 %1961
      %1965 = vset.pattern.permute.xlu0 0
      %1966 = vperm.xlu0 %1965, %v1372
      %v1967 = vpop.permute.xlu0 %1966
      %1970 = vset.pattern.permute.xlu0 0
      %1971 = vperm.xlu0 %1970, %v1373
      %v1972 = vpop.permute.xlu0 %1971
      %1975 = vset.pattern.permute.xlu0 0
      %1976 = vperm.xlu0 %1975, %v1374
      %v1977 = vpop.permute.xlu0 %1976
      %1980 = vset.pattern.permute.xlu0 0
      %1981 = vperm.xlu0 %1980, %v1375
      %v1982 = vpop.permute.xlu0 %1981
      %1985 = vset.pattern.permute.xlu0 0
      %1986 = vperm.xlu0 %1985, %v1376
      %v1987 = vpop.permute.xlu0 %1986
      %1990 = vset.pattern.permute.xlu0 0
      %1991 = vperm.xlu0 %1990, %v1377
      %v1992 = vpop.permute.xlu0 %1991
      %1995 = vset.pattern.permute.xlu0 0
      %1996 = vperm.xlu0 %1995, %v1378
      %v1997 = vpop.permute.xlu0 %1996
      %2000 = vset.pattern.permute.xlu0 0
      %2001 = vperm.xlu0 %2000, %v1379
      %v2002 = vpop.permute.xlu0 %2001
      %2005 = vset.pattern.permute.xlu0 0
      %2006 = vperm.xlu0 %2005, %v1380
      %v2007 = vpop.permute.xlu0 %2006
      %2010 = vset.pattern.permute.xlu0 0
      %2011 = vperm.xlu0 %2010, %v1381
      %v2012 = vpop.permute.xlu0 %2011
      %2015 = vset.pattern.permute.xlu0 0
      %2016 = vperm.xlu0 %2015, %v1382
      %v2017 = vpop.permute.xlu0 %2016
      %2020 = vset.pattern.permute.xlu0 0
      %2021 = vperm.xlu0 %2020, %v1383
      %v2022 = vpop.permute.xlu0 %2021
      %v2152 = vunpack.c.l.b16 %v1112
      %v2153 = vunpack.c.l.b16 %v1113
      %v2154 = vunpack.c.l.b16 %v1114
      %v2155 = vunpack.c.l.b16 %v1115
      %v2156 = vunpack.c.l.b16 %v1116
      %v2157 = vunpack.c.l.b16 %v1117
      %v2158 = vunpack.c.l.b16 %v1118
      %v2159 = vunpack.c.l.b16 %v1119
      %v2160 = vunpack.c.l.b16 %v1120
      %v2161 = vunpack.c.l.b16 %v1121
      %v2162 = vunpack.c.l.b16 %v1122
      %v2163 = vunpack.c.l.b16 %v1123
      %v2164 = vunpack.c.l.b16 %v1124
      %v2165 = vunpack.c.l.b16 %v1125
      %v2166 = vunpack.c.l.b16 %v1126
      %v2167 = vunpack.c.l.b16 %v1127
      %v2168 = vunpack.c.l.b16 %v1128
      %v2169 = vunpack.c.l.b16 %v1129
      %v2170 = vunpack.c.l.b16 %v1130
      %v2171 = vunpack.c.l.b16 %v1131
      %v2172 = vunpack.c.l.b16 %v1132
      %v2173 = vunpack.c.l.b16 %v1133
      %v2174 = vunpack.c.l.b16 %v1134
      %v2175 = vunpack.c.l.b16 %v1135
      %v2176 = vunpack.c.l.b16 %v1136
      %v2177 = vunpack.c.l.b16 %v1137
      %v2178 = vunpack.c.l.b16 %v1138
      %v2179 = vunpack.c.l.b16 %v1139
      %v2180 = vunpack.c.l.b16 %v1140
      %v2181 = vunpack.c.l.b16 %v1141
      %v2182 = vunpack.c.l.b16 %v1142
      %v2183 = vunpack.c.l.b16 %v1143
      %v2184 = vunpack.c.l.b16 %v1144
      %v2185 = vunpack.c.l.b16 %v1145
      %v2186 = vunpack.c.l.b16 %v1146
      %v2187 = vunpack.c.l.b16 %v1147
      %v2188 = vunpack.c.l.b16 %v1148
      %v2189 = vunpack.c.l.b16 %v1149
      %v2190 = vunpack.c.l.b16 %v1150
      %v2191 = vunpack.c.l.b16 %v1151
      %v2192 = vunpack.c.l.b16 %v1152
      %v2193 = vunpack.c.l.b16 %v1153
      %v2194 = vunpack.c.l.b16 %v1154
      %v2195 = vunpack.c.l.b16 %v1155
      %v2196 = vunpack.c.l.b16 %v1156
      %v2197 = vunpack.c.l.b16 %v1157
      %v2198 = vunpack.c.l.b16 %v1158
      %v2199 = vunpack.c.l.b16 %v1159
      %v2200 = vunpack.c.l.b16 %v1160
      %v2201 = vunpack.c.l.b16 %v1161
      %v2202 = vunpack.c.l.b16 %v1162
      %v2203 = vunpack.c.l.b16 %v1163
      %v2204 = vunpack.c.l.b16 %v1164
      %v2205 = vunpack.c.l.b16 %v1165
      %v2206 = vunpack.c.l.b16 %v1166
      %v2207 = vunpack.c.l.b16 %v1167
      %v2208 = vunpack.c.l.b16 %v1168
      %v2209 = vunpack.c.l.b16 %v1169
      %v2210 = vunpack.c.l.b16 %v1170
      %v2211 = vunpack.c.l.b16 %v1171
      %v2212 = vunpack.c.l.b16 %v1172
      %v2213 = vunpack.c.l.b16 %v1173
      %v2214 = vunpack.c.l.b16 %v1174
      %v2215 = vunpack.c.l.b16 %v1175
      %v2216 = vunpack.c.l.b16 %v1176
      %v2217 = vunpack.c.l.b16 %v1177
      %v2218 = vunpack.c.l.b16 %v1178
      %v2219 = vunpack.c.l.b16 %v1179
      %v2220 = vunpack.c.l.b16 %v1180
      %v2221 = vunpack.c.l.b16 %v1181
      %v2222 = vunpack.c.l.b16 %v1182
      %v2223 = vunpack.c.l.b16 %v1183
      %v2224 = vunpack.c.l.b16 %v1184
      %v2225 = vunpack.c.l.b16 %v1185
      %v2226 = vunpack.c.l.b16 %v1186
      %v2227 = vunpack.c.l.b16 %v1187
      %v2228 = vunpack.c.l.b16 %v1188
      %v2229 = vunpack.c.l.b16 %v1189
      %v2230 = vunpack.c.l.b16 %v1190
      %v2231 = vunpack.c.l.b16 %v1191
      %v2232 = vunpack.c.l.b16 %v1192
      %v2233 = vunpack.c.l.b16 %v1193
      %v2234 = vunpack.c.l.b16 %v1194
      %v2235 = vunpack.c.l.b16 %v1195
      %v2236 = vunpack.c.l.b16 %v1196
      %v2237 = vunpack.c.l.b16 %v1197
      %v2238 = vunpack.c.l.b16 %v1198
      %v2239 = vunpack.c.l.b16 %v1199
      %v2240 = vunpack.c.l.b16 %v1200
      %v2241 = vunpack.c.l.b16 %v1201
      %v2242 = vunpack.c.l.b16 %v1202
      %v2243 = vunpack.c.l.b16 %v1203
      %v2244 = vunpack.c.l.b16 %v1204
      %v2245 = vunpack.c.l.b16 %v1205
      %v2246 = vunpack.c.l.b16 %v1206
      %v2247 = vunpack.c.l.b16 %v1207
      %v2248 = vunpack.c.l.b16 %v1208
      %v2249 = vunpack.c.l.b16 %v1209
      %v2250 = vunpack.c.l.b16 %v1210
      %v2251 = vunpack.c.l.b16 %v1211
      %v2252 = vunpack.c.l.b16 %v1212
      %v2253 = vunpack.c.l.b16 %v1213
      %v2254 = vunpack.c.l.b16 %v1214
      %v2255 = vunpack.c.l.b16 %v1215
      %v2256 = vunpack.c.l.b16 %v1216
      %v2257 = vunpack.c.l.b16 %v1217
      %v2258 = vunpack.c.l.b16 %v1218
      %v2259 = vunpack.c.l.b16 %v1219
      %v2260 = vunpack.c.l.b16 %v1220
      %v2261 = vunpack.c.l.b16 %v1221
      %v2262 = vunpack.c.l.b16 %v1222
      %v2263 = vunpack.c.l.b16 %v1223
      %v2264 = vunpack.c.l.b16 %v1224
      %v2265 = vunpack.c.l.b16 %v1225
      %v2266 = vunpack.c.l.b16 %v1226
      %v2267 = vunpack.c.l.b16 %v1227
      %v2268 = vunpack.c.l.b16 %v1228
      %v2269 = vunpack.c.l.b16 %v1229
      %v2270 = vunpack.c.l.b16 %v1230
      %v2271 = vunpack.c.l.b16 %v1231
      %v2272 = vunpack.c.l.b16 %v1232
      %v2273 = vunpack.c.l.b16 %v1233
      %v2274 = vunpack.c.l.b16 %v1234
      %v2275 = vunpack.c.l.b16 %v1235
      %v2276 = vunpack.c.l.b16 %v1236
      %v2277 = vunpack.c.l.b16 %v1237
      %v2278 = vunpack.c.l.b16 %v1238
      %v2279 = vunpack.c.l.b16 %v1239
      %v2280 = vpack.c.b16 %v2153, %v2152
      %v2281 = vpack.c.b16 %v2155, %v2154
      %v2282 = vpack.c.b16 %v2157, %v2156
      %v2283 = vpack.c.b16 %v2159, %v2158
      %v2284 = vpack.c.b16 %v2161, %v2160
      %v2285 = vpack.c.b16 %v2163, %v2162
      %v2286 = vpack.c.b16 %v2165, %v2164
      %v2287 = vpack.c.b16 %v2167, %v2166
      %v2288 = vpack.c.b16 %v2169, %v2168
      %v2289 = vpack.c.b16 %v2171, %v2170
      %v2290 = vpack.c.b16 %v2173, %v2172
      %v2291 = vpack.c.b16 %v2175, %v2174
      %v2292 = vpack.c.b16 %v2177, %v2176
      %v2293 = vpack.c.b16 %v2179, %v2178
      %v2294 = vpack.c.b16 %v2181, %v2180
      %v2295 = vpack.c.b16 %v2183, %v2182
      %v2296 = vpack.c.b16 %v2185, %v2184
      %v2297 = vpack.c.b16 %v2187, %v2186
      %v2298 = vpack.c.b16 %v2189, %v2188
      %v2299 = vpack.c.b16 %v2191, %v2190
      %v2300 = vpack.c.b16 %v2193, %v2192
      %v2301 = vpack.c.b16 %v2195, %v2194
      %v2302 = vpack.c.b16 %v2197, %v2196
      %v2303 = vpack.c.b16 %v2199, %v2198
      %v2304 = vpack.c.b16 %v2201, %v2200
      %v2305 = vpack.c.b16 %v2203, %v2202
      %v2306 = vpack.c.b16 %v2205, %v2204
      %v2307 = vpack.c.b16 %v2207, %v2206
      %v2308 = vpack.c.b16 %v2209, %v2208
      %v2309 = vpack.c.b16 %v2211, %v2210
      %v2310 = vpack.c.b16 %v2213, %v2212
      %v2311 = vpack.c.b16 %v2215, %v2214
      %v2312 = vpack.c.b16 %v2217, %v2216
      %v2313 = vpack.c.b16 %v2219, %v2218
      %v2314 = vpack.c.b16 %v2221, %v2220
      %v2315 = vpack.c.b16 %v2223, %v2222
      %v2316 = vpack.c.b16 %v2225, %v2224
      %v2317 = vpack.c.b16 %v2227, %v2226
      %v2318 = vpack.c.b16 %v2229, %v2228
      %v2319 = vpack.c.b16 %v2231, %v2230
      %v2320 = vpack.c.b16 %v2233, %v2232
      %v2321 = vpack.c.b16 %v2235, %v2234
      %v2322 = vpack.c.b16 %v2237, %v2236
      %v2323 = vpack.c.b16 %v2239, %v2238
      %v2324 = vpack.c.b16 %v2241, %v2240
      %v2325 = vpack.c.b16 %v2243, %v2242
      %v2326 = vpack.c.b16 %v2245, %v2244
      %v2327 = vpack.c.b16 %v2247, %v2246
      %v2328 = vpack.c.b16 %v2249, %v2248
      %v2329 = vpack.c.b16 %v2251, %v2250
      %v2330 = vpack.c.b16 %v2253, %v2252
      %v2331 = vpack.c.b16 %v2255, %v2254
      %v2332 = vpack.c.b16 %v2257, %v2256
      %v2333 = vpack.c.b16 %v2259, %v2258
      %v2334 = vpack.c.b16 %v2261, %v2260
      %v2335 = vpack.c.b16 %v2263, %v2262
      %v2336 = vpack.c.b16 %v2265, %v2264
      %v2337 = vpack.c.b16 %v2267, %v2266
      %v2338 = vpack.c.b16 %v2269, %v2268
      %v2339 = vpack.c.b16 %v2271, %v2270
      %v2340 = vpack.c.b16 %v2273, %v2272
      %v2341 = vpack.c.b16 %v2275, %v2274
      %v2342 = vpack.c.b16 %v2277, %v2276
      %v2343 = vpack.c.b16 %v2279, %v2278
      %2408 = vmatprep.subr.bf16.mxu0 %v1241
      %2409 = vmatpush1.bf16.msra.mxu0 %v1240
      %2410 = vmatprep.subr.bf16.mxu0 %v1243
      %2411 = vmatpush1.bf16.msra.mxu0 %v1242
      %2412 = vmatprep.subr.bf16.mxu0 %v1245
      %2413 = vmatpush1.bf16.msra.mxu0 %v1244
      %2414 = vmatprep.subr.bf16.mxu0 %v1247
      %2415 = vmatpush1.bf16.msra.mxu0 %v1246
      %2416 = vmatprep.subr.bf16.mxu0 %v1249
      %2417 = vmatpush1.bf16.msra.mxu0 %v1248
      %2418 = vmatprep.subr.bf16.mxu0 %v1251
      %2419 = vmatpush1.bf16.msra.mxu0 %v1250
      %2420 = vmatprep.subr.bf16.mxu0 %v1253
      %2421 = vmatpush1.bf16.msra.mxu0 %v1252
      %2422 = vmatprep.subr.bf16.mxu0 %v1255
      %2423 = vmatpush1.bf16.msra.mxu0 %v1254
      %2424 = vmatprep.subr.bf16.mxu0 0
      %2425 = vmatpush1.bf16.msra.mxu0 0
      %2426 = vmatprep.subr.bf16.mxu0 0
      %2427 = vmatpush1.bf16.msra.mxu0 0
      %2428 = vmatprep.subr.bf16.mxu0 0
      %2429 = vmatpush1.bf16.msra.mxu0 0
      %2430 = vmatprep.subr.bf16.mxu0 0
      %2431 = vmatpush1.bf16.msra.mxu0 0
      %2432 = vmatprep.subr.bf16.mxu0 0
      %2433 = vmatpush1.bf16.msra.mxu0 0
      %2434 = vmatprep.subr.bf16.mxu0 0
      %2435 = vmatpush1.bf16.msra.mxu0 0
      %2436 = vmatprep.subr.bf16.mxu0 0
      %2437 = vmatpush1.bf16.msra.mxu0 0
      %2438 = vmatprep.subr.bf16.mxu0 0
      %2439 = vmatpush1.bf16.msra.mxu0 0
      %2440 = vmatprep.mubr.bf16.mxu0 0
      %2441 = vmatmul.mubr.bf16.gmra.mrb[0].mxu0 %v2280
      %v2442 = vpop.f32.mrb[0].mxu0
      %v2443 = vadd.f32 %v1387, %v2442
      %v2444 = vpop.f32.mrb[0].mxu0
      %v2445 = vadd.f32 %v1387, %v2444
      %v2446 = vpop.f32.mrb[0].mxu0
      %v2447 = vadd.f32 %v1392, %v2446
      %v2448 = vpop.f32.mrb[0].mxu0
      %v2449 = vadd.f32 %v1392, %v2448
      %2450 = vmatprep.mubr.bf16.mxu0 0
      %2451 = vmatmul.mubr.bf16.gmra.mrb[0].mxu0 %v2281
      %v2452 = vpop.f32.mrb[0].mxu0
      %v2453 = vadd.f32 %v1397, %v2452
      %v2454 = vpop.f32.mrb[0].mxu0
      %v2455 = vadd.f32 %v1397, %v2454
      %v2456 = vpop.f32.mrb[0].mxu0
      %v2457 = vadd.f32 %v1402, %v2456
      %v2458 = vpop.f32.mrb[0].mxu0
      %v2459 = vadd.f32 %v1402, %v2458
      %2460 = vmatprep.mubr.bf16.mxu0 0
      %2461 = vmatmul.mubr.bf16.gmra.mrb[0].mxu0 %v2282
      %v2462 = vpop.f32.mrb[0].mxu0
      %v2463 = vadd.f32 %v1407, %v2462
      %v2464 = vpop.f32.mrb[0].mxu0
      %v2465 = vadd.f32 %v1407, %v2464
      %v2466 = vpop.f32.mrb[0].mxu0
      %v2467 = vadd.f32 %v1412, %v2466
      %v2468 = vpop.f32.mrb[0].mxu0
      %v2469 = vadd.f32 %v1412, %v2468
      %2470 = vmatprep.mubr.bf16.mxu0 0
      %2471 = vmatmul.mubr.bf16.gmra.mrb[0].mxu0 %v2283
      %v2472 = vpop.f32.mrb[0].mxu0
      %v2473 = vadd.f32 %v1417, %v2472
      %v2474 = vpop.f32.mrb[0].mxu0
      %v2475 = vadd.f32 %v1417, %v2474
      %v2476 = vpop.f32.mrb[0].mxu0
      %v2477 = vadd.f32 %v1422, %v2476
      %v2478 = vpop.f32.mrb[0].mxu0
      %v2479 = vadd.f32 %v1422, %v2478
      %2480 = vmatprep.mubr.bf16.mxu0 0
      %2481 = vmatmul.mubr.bf16.gmra.mrb[0].mxu0 %v2284
      %v2482 = vpop.f32.mrb[0].mxu0
      %v2483 = vadd.f32 %v1427, %v2482
      %v2484 = vpop.f32.mrb[0].mxu0
      %v2485 = vadd.f32 %v1427, %v2484
      %v2486 = vpop.f32.mrb[0].mxu0
      %v2487 = vadd.f32 %v1432, %v2486
      %v2488 = vpop.f32.mrb[0].mxu0
      %v2489 = vadd.f32 %v1432, %v2488
      %2490 = vmatprep.mubr.bf16.mxu0 0
      %2491 = vmatmul.mubr.bf16.gmra.mrb[0].mxu0 %v2285
      %v2492 = vpop.f32.mrb[0].mxu0
      %v2493 = vadd.f32 %v1437, %v2492
      %v2494 = vpop.f32.mrb[0].mxu0
      %v2495 = vadd.f32 %v1437, %v2494
      %v2496 = vpop.f32.mrb[0].mxu0
      %v2497 = vadd.f32 %v1442, %v2496
      %v2498 = vpop.f32.mrb[0].mxu0
      %v2499 = vadd.f32 %v1442, %v2498
      %2500 = vmatprep.mubr.bf16.mxu0 0
      %2501 = vmatmul.mubr.bf16.gmra.mrb[0].mxu0 %v2286
      %v2502 = vpop.f32.mrb[0].mxu0
      %v2503 = vadd.f32 %v1447, %v2502
      %v2504 = vpop.f32.mrb[0].mxu0
      %v2505 = vadd.f32 %v1447, %v2504
      %v2506 = vpop.f32.mrb[0].mxu0
      %v2507 = vadd.f32 %v1452, %v2506
      %v2508 = vpop.f32.mrb[0].mxu0
      %v2509 = vadd.f32 %v1452, %v2508
      %2510 = vmatprep.mubr.bf16.mxu0 0
      %2511 = vmatmul.mubr.bf16.gmra.mrb[0].mxu0 %v2287
      %v2512 = vpop.f32.mrb[0].mxu0
      %v2513 = vadd.f32 %v1457, %v2512
      %v2514 = vpop.f32.mrb[0].mxu0
      %v2515 = vadd.f32 %v1457, %v2514
      %v2516 = vpop.f32.mrb[0].mxu0
      %v2517 = vadd.f32 %v1462, %v2516
      %v2518 = vpop.f32.mrb[0].mxu0
      %v2519 = vadd.f32 %v1462, %v2518
      %2520 = vmatprep.mubr.bf16.mxu0 0
      %2521 = vmatmul.mubr.bf16.gmra.mrb[0].mxu0 %v2288
      %v2522 = vpop.f32.mrb[0].mxu0
      %v2523 = vadd.f32 %v1467, %v2522
      %v2524 = vpop.f32.mrb[0].mxu0
      %v2525 = vadd.f32 %v1467, %v2524
      %v2526 = vpop.f32.mrb[0].mxu0
      %v2527 = vadd.f32 %v1472, %v2526
      %v2528 = vpop.f32.mrb[0].mxu0
      %v2529 = vadd.f32 %v1472, %v2528
      %2530 = vmatprep.mubr.bf16.mxu0 0
      %2531 = vmatmul.mubr.bf16.gmra.mrb[0].mxu0 %v2289
      %v2532 = vpop.f32.mrb[0].mxu0
      %v2533 = vadd.f32 %v1477, %v2532
      %v2534 = vpop.f32.mrb[0].mxu0
      %v2535 = vadd.f32 %v1477, %v2534
      %v2536 = vpop.f32.mrb[0].mxu0
      %v2537 = vadd.f32 %v1482, %v2536
      %v2538 = vpop.f32.mrb[0].mxu0
      %v2539 = vadd.f32 %v1482, %v2538
      %2540 = vmatprep.mubr.bf16.mxu0 0
      %2541 = vmatmul.mubr.bf16.gmra.mrb[0].mxu0 %v2290
      %v2542 = vpop.f32.mrb[0].mxu0
      %v2543 = vadd.f32 %v1487, %v2542
      %v2544 = vpop.f32.mrb[0].mxu0
      %v2545 = vadd.f32 %v1487, %v2544
      %v2546 = vpop.f32.mrb[0].mxu0
      %v2547 = vadd.f32 %v1492, %v2546
      %v2548 = vpop.f32.mrb[0].mxu0
      %v2549 = vadd.f32 %v1492, %v2548
      %2550 = vmatprep.mubr.bf16.mxu0 0
      %2551 = vmatmul.mubr.bf16.gmra.mrb[0].mxu0 %v2291
      %v2552 = vpop.f32.mrb[0].mxu0
      %v2553 = vadd.f32 %v1497, %v2552
      %v2554 = vpop.f32.mrb[0].mxu0
      %v2555 = vadd.f32 %v1497, %v2554
      %v2556 = vpop.f32.mrb[0].mxu0
      %v2557 = vadd.f32 %v1502, %v2556
      %v2558 = vpop.f32.mrb[0].mxu0
      %v2559 = vadd.f32 %v1502, %v2558
      %2560 = vmatprep.mubr.bf16.mxu0 0
      %2561 = vmatmul.mubr.bf16.gmra.mrb[0].mxu0 %v2292
      %v2562 = vpop.f32.mrb[0].mxu0
      %v2563 = vadd.f32 %v1507, %v2562
      %v2564 = vpop.f32.mrb[0].mxu0
      %v2565 = vadd.f32 %v1507, %v2564
      %v2566 = vpop.f32.mrb[0].mxu0
      %v2567 = vadd.f32 %v1512, %v2566
      %v2568 = vpop.f32.mrb[0].mxu0
      %v2569 = vadd.f32 %v1512, %v2568
      %2570 = vmatprep.mubr.bf16.mxu0 0
      %2571 = vmatmul.mubr.bf16.gmra.mrb[0].mxu0 %v2293
      %v2572 = vpop.f32.mrb[0].mxu0
      %v2573 = vadd.f32 %v1517, %v2572
      %v2574 = vpop.f32.mrb[0].mxu0
      %v2575 = vadd.f32 %v1517, %v2574
      %v2576 = vpop.f32.mrb[0].mxu0
      %v2577 = vadd.f32 %v1522, %v2576
      %v2578 = vpop.f32.mrb[0].mxu0
      %v2579 = vadd.f32 %v1522, %v2578
      %2580 = vmatprep.mubr.bf16.mxu0 0
      %2581 = vmatmul.mubr.bf16.gmra.mrb[0].mxu0 %v2294
      %v2582 = vpop.f32.mrb[0].mxu0
      %v2583 = vadd.f32 %v1527, %v2582
      %v2584 = vpop.f32.mrb[0].mxu0
      %v2585 = vadd.f32 %v1527, %v2584
      %v2586 = vpop.f32.mrb[0].mxu0
      %v2587 = vadd.f32 %v1532, %v2586
      %v2588 = vpop.f32.mrb[0].mxu0
      %v2589 = vadd.f32 %v1532, %v2588
      %2590 = vmatprep.mubr.bf16.mxu0 0
      %2591 = vmatmul.mubr.bf16.gmra.mrb[0].mxu0 %v2295
      %v2592 = vpop.f32.mrb[0].mxu0
      %v2593 = vadd.f32 %v1537, %v2592
      %v2594 = vpop.f32.mrb[0].mxu0
      %v2595 = vadd.f32 %v1537, %v2594
      %v2596 = vpop.f32.mrb[0].mxu0
      %v2597 = vadd.f32 %v1542, %v2596
      %v2598 = vpop.f32.mrb[0].mxu0
      %v2599 = vadd.f32 %v1542, %v2598
      %2600 = vmatprep.mubr.bf16.mxu0 0
      %2601 = vmatmul.mubr.bf16.gmra.mrb[0].mxu0 %v2296
      %v2602 = vpop.f32.mrb[0].mxu0
      %v2603 = vadd.f32 %v1547, %v2602
      %v2604 = vpop.f32.mrb[0].mxu0
      %v2605 = vadd.f32 %v1547, %v2604
      %v2606 = vpop.f32.mrb[0].mxu0
      %v2607 = vadd.f32 %v1552, %v2606
      %v2608 = vpop.f32.mrb[0].mxu0
      %v2609 = vadd.f32 %v1552, %v2608
      %2610 = vmatprep.mubr.bf16.mxu0 0
      %2611 = vmatmul.mubr.bf16.gmra.mrb[0].mxu0 %v2297
      %v2612 = vpop.f32.mrb[0].mxu0
      %v2613 = vadd.f32 %v1557, %v2612
      %v2614 = vpop.f32.mrb[0].mxu0
      %v2615 = vadd.f32 %v1557, %v2614
      %v2616 = vpop.f32.mrb[0].mxu0
      %v2617 = vadd.f32 %v1562, %v2616
      %v2618 = vpop.f32.mrb[0].mxu0
      %v2619 = vadd.f32 %v1562, %v2618
      %2620 = vmatprep.mubr.bf16.mxu0 0
      %2621 = vmatmul.mubr.bf16.gmra.mrb[0].mxu0 %v2298
      %v2622 = vpop.f32.mrb[0].mxu0
      %v2623 = vadd.f32 %v1567, %v2622
      %v2624 = vpop.f32.mrb[0].mxu0
      %v2625 = vadd.f32 %v1567, %v2624
      %v2626 = vpop.f32.mrb[0].mxu0
      %v2627 = vadd.f32 %v1572, %v2626
      %v2628 = vpop.f32.mrb[0].mxu0
      %v2629 = vadd.f32 %v1572, %v2628
      %2630 = vmatprep.mubr.bf16.mxu0 0
      %2631 = vmatmul.mubr.bf16.gmra.mrb[0].mxu0 %v2299
      %v2632 = vpop.f32.mrb[0].mxu0
      %v2633 = vadd.f32 %v1577, %v2632
      %v2634 = vpop.f32.mrb[0].mxu0
      %v2635 = vadd.f32 %v1577, %v2634
      %v2636 = vpop.f32.mrb[0].mxu0
      %v2637 = vadd.f32 %v1582, %v2636
      %v2638 = vpop.f32.mrb[0].mxu0
      %v2639 = vadd.f32 %v1582, %v2638
      %2640 = vmatprep.mubr.bf16.mxu0 0
      %2641 = vmatmul.mubr.bf16.gmra.mrb[0].mxu0 %v2300
      %v2642 = vpop.f32.mrb[0].mxu0
      %v2643 = vadd.f32 %v1587, %v2642
      %v2644 = vpop.f32.mrb[0].mxu0
      %v2645 = vadd.f32 %v1587, %v2644
      %v2646 = vpop.f32.mrb[0].mxu0
      %v2647 = vadd.f32 %v1592, %v2646
      %v2648 = vpop.f32.mrb[0].mxu0
      %v2649 = vadd.f32 %v1592, %v2648
      %2650 = vmatprep.mubr.bf16.mxu0 0
      %2651 = vmatmul.mubr.bf16.gmra.mrb[0].mxu0 %v2301
      %v2652 = vpop.f32.mrb[0].mxu0
      %v2653 = vadd.f32 %v1597, %v2652
      %v2654 = vpop.f32.mrb[0].mxu0
      %v2655 = vadd.f32 %v1597, %v2654
      %v2656 = vpop.f32.mrb[0].mxu0
      %v2657 = vadd.f32 %v1602, %v2656
      %v2658 = vpop.f32.mrb[0].mxu0
      %v2659 = vadd.f32 %v1602, %v2658
      %2660 = vmatprep.mubr.bf16.mxu0 0
      %2661 = vmatmul.mubr.bf16.gmra.mrb[0].mxu0 %v2302
      %v2662 = vpop.f32.mrb[0].mxu0
      %v2663 = vadd.f32 %v1607, %v2662
      %v2664 = vpop.f32.mrb[0].mxu0
      %v2665 = vadd.f32 %v1607, %v2664
      %v2666 = vpop.f32.mrb[0].mxu0
      %v2667 = vadd.f32 %v1612, %v2666
      %v2668 = vpop.f32.mrb[0].mxu0
      %v2669 = vadd.f32 %v1612, %v2668
      %2670 = vmatprep.mubr.bf16.mxu0 0
      %2671 = vmatmul.mubr.bf16.gmra.mrb[0].mxu0 %v2303
      %v2672 = vpop.f32.mrb[0].mxu0
      %v2673 = vadd.f32 %v1617, %v2672
      %v2674 = vpop.f32.mrb[0].mxu0
      %v2675 = vadd.f32 %v1617, %v2674
      %v2676 = vpop.f32.mrb[0].mxu0
      %v2677 = vadd.f32 %v1622, %v2676
      %v2678 = vpop.f32.mrb[0].mxu0
      %v2679 = vadd.f32 %v1622, %v2678
      %2680 = vmatprep.mubr.bf16.mxu0 0
      %2681 = vmatmul.mubr.bf16.gmra.mrb[0].mxu0 %v2304
      %v2682 = vpop.f32.mrb[0].mxu0
      %v2683 = vadd.f32 %v1627, %v2682
      %v2684 = vpop.f32.mrb[0].mxu0
      %v2685 = vadd.f32 %v1627, %v2684
      %v2686 = vpop.f32.mrb[0].mxu0
      %v2687 = vadd.f32 %v1632, %v2686
      %v2688 = vpop.f32.mrb[0].mxu0
      %v2689 = vadd.f32 %v1632, %v2688
      %2690 = vmatprep.mubr.bf16.mxu0 0
      %2691 = vmatmul.mubr.bf16.gmra.mrb[0].mxu0 %v2305
      %v2692 = vpop.f32.mrb[0].mxu0
      %v2693 = vadd.f32 %v1637, %v2692
      %v2694 = vpop.f32.mrb[0].mxu0
      %v2695 = vadd.f32 %v1637, %v2694
      %v2696 = vpop.f32.mrb[0].mxu0
      %v2697 = vadd.f32 %v1642, %v2696
      %v2698 = vpop.f32.mrb[0].mxu0
      %v2699 = vadd.f32 %v1642, %v2698
      %2700 = vmatprep.mubr.bf16.mxu0 0
      %2701 = vmatmul.mubr.bf16.gmra.mrb[0].mxu0 %v2306
      %v2702 = vpop.f32.mrb[0].mxu0
      %v2703 = vadd.f32 %v1647, %v2702
      %v2704 = vpop.f32.mrb[0].mxu0
      %v2705 = vadd.f32 %v1647, %v2704
      %v2706 = vpop.f32.mrb[0].mxu0
      %v2707 = vadd.f32 %v1652, %v2706
      %v2708 = vpop.f32.mrb[0].mxu0
      %v2709 = vadd.f32 %v1652, %v2708
      %2710 = vmatprep.mubr.bf16.mxu0 0
      %2711 = vmatmul.mubr.bf16.gmra.mrb[0].mxu0 %v2307
      %v2712 = vpop.f32.mrb[0].mxu0
      %v2713 = vadd.f32 %v1657, %v2712
      %v2714 = vpop.f32.mrb[0].mxu0
      %v2715 = vadd.f32 %v1657, %v2714
      %v2716 = vpop.f32.mrb[0].mxu0
      %v2717 = vadd.f32 %v1662, %v2716
      %v2718 = vpop.f32.mrb[0].mxu0
      %v2719 = vadd.f32 %v1662, %v2718
      %2720 = vmatprep.mubr.bf16.mxu0 0
      %2721 = vmatmul.mubr.bf16.gmra.mrb[0].mxu0 %v2308
      %v2722 = vpop.f32.mrb[0].mxu0
      %v2723 = vadd.f32 %v1667, %v2722
      %v2724 = vpop.f32.mrb[0].mxu0
      %v2725 = vadd.f32 %v1667, %v2724
      %v2726 = vpop.f32.mrb[0].mxu0
      %v2727 = vadd.f32 %v1672, %v2726
      %v2728 = vpop.f32.mrb[0].mxu0
      %v2729 = vadd.f32 %v1672, %v2728
      %2730 = vmatprep.mubr.bf16.mxu0 0
      %2731 = vmatmul.mubr.bf16.gmra.mrb[0].mxu0 %v2309
      %v2732 = vpop.f32.mrb[0].mxu0
      %v2733 = vadd.f32 %v1677, %v2732
      %v2734 = vpop.f32.mrb[0].mxu0
      %v2735 = vadd.f32 %v1677, %v2734
      %v2736 = vpop.f32.mrb[0].mxu0
      %v2737 = vadd.f32 %v1682, %v2736
      %v2738 = vpop.f32.mrb[0].mxu0
      %v2739 = vadd.f32 %v1682, %v2738
      %2740 = vmatprep.mubr.bf16.mxu0 0
      %2741 = vmatmul.mubr.bf16.gmra.mrb[0].mxu0 %v2310
      %v2742 = vpop.f32.mrb[0].mxu0
      %v2743 = vadd.f32 %v1687, %v2742
      %v2744 = vpop.f32.mrb[0].mxu0
      %v2745 = vadd.f32 %v1687, %v2744
      %v2746 = vpop.f32.mrb[0].mxu0
      %v2747 = vadd.f32 %v1692, %v2746
      %v2748 = vpop.f32.mrb[0].mxu0
      %v2749 = vadd.f32 %v1692, %v2748
      %2750 = vmatprep.mubr.bf16.mxu0 0
      %2751 = vmatmul.mubr.bf16.gmra.mrb[0].mxu0 %v2311
      %v2752 = vpop.f32.mrb[0].mxu0
      %v2753 = vadd.f32 %v1697, %v2752
      %v2754 = vpop.f32.mrb[0].mxu0
      %v2755 = vadd.f32 %v1697, %v2754
      %v2756 = vpop.f32.mrb[0].mxu0
      %v2757 = vadd.f32 %v1702, %v2756
      %v2758 = vpop.f32.mrb[0].mxu0
      %v2759 = vadd.f32 %v1702, %v2758
      %2760 = vmatprep.mubr.bf16.mxu0 0
      %2761 = vmatmul.mubr.bf16.gmra.mrb[0].mxu0 %v2312
      %v2762 = vpop.f32.mrb[0].mxu0
      %v2763 = vadd.f32 %v1707, %v2762
      %v2764 = vpop.f32.mrb[0].mxu0
      %v2765 = vadd.f32 %v1707, %v2764
      %v2766 = vpop.f32.mrb[0].mxu0
      %v2767 = vadd.f32 %v1712, %v2766
      %v2768 = vpop.f32.mrb[0].mxu0
      %v2769 = vadd.f32 %v1712, %v2768
      %2770 = vmatprep.mubr.bf16.mxu0 0
      %2771 = vmatmul.mubr.bf16.gmra.mrb[0].mxu0 %v2313
      %v2772 = vpop.f32.mrb[0].mxu0
      %v2773 = vadd.f32 %v1717, %v2772
      %v2774 = vpop.f32.mrb[0].mxu0
      %v2775 = vadd.f32 %v1717, %v2774
      %v2776 = vpop.f32.mrb[0].mxu0
      %v2777 = vadd.f32 %v1722, %v2776
      %v2778 = vpop.f32.mrb[0].mxu0
      %v2779 = vadd.f32 %v1722, %v2778
      %2780 = vmatprep.mubr.bf16.mxu0 0
      %2781 = vmatmul.mubr.bf16.gmra.mrb[0].mxu0 %v2314
      %v2782 = vpop.f32.mrb[0].mxu0
      %v2783 = vadd.f32 %v1727, %v2782
      %v2784 = vpop.f32.mrb[0].mxu0
      %v2785 = vadd.f32 %v1727, %v2784
      %v2786 = vpop.f32.mrb[0].mxu0
      %v2787 = vadd.f32 %v1732, %v2786
      %v2788 = vpop.f32.mrb[0].mxu0
      %v2789 = vadd.f32 %v1732, %v2788
      %2790 = vmatprep.mubr.bf16.mxu0 0
      %2791 = vmatmul.mubr.bf16.gmra.mrb[0].mxu0 %v2315
      %v2792 = vpop.f32.mrb[0].mxu0
      %v2793 = vadd.f32 %v1737, %v2792
      %v2794 = vpop.f32.mrb[0].mxu0
      %v2795 = vadd.f32 %v1737, %v2794
      %v2796 = vpop.f32.mrb[0].mxu0
      %v2797 = vadd.f32 %v1742, %v2796
      %v2798 = vpop.f32.mrb[0].mxu0
      %v2799 = vadd.f32 %v1742, %v2798
      %2800 = vmatprep.mubr.bf16.mxu0 0
      %2801 = vmatmul.mubr.bf16.gmra.mrb[0].mxu0 %v2316
      %v2802 = vpop.f32.mrb[0].mxu0
      %v2803 = vadd.f32 %v1747, %v2802
      %v2804 = vpop.f32.mrb[0].mxu0
      %v2805 = vadd.f32 %v1747, %v2804
      %v2806 = vpop.f32.mrb[0].mxu0
      %v2807 = vadd.f32 %v1752, %v2806
      %v2808 = vpop.f32.mrb[0].mxu0
      %v2809 = vadd.f32 %v1752, %v2808
      %2810 = vmatprep.mubr.bf16.mxu0 0
      %2811 = vmatmul.mubr.bf16.gmra.mrb[0].mxu0 %v2317
      %v2812 = vpop.f32.mrb[0].mxu0
      %v2813 = vadd.f32 %v1757, %v2812
      %v2814 = vpop.f32.mrb[0].mxu0
      %v2815 = vadd.f32 %v1757, %v2814
      %v2816 = vpop.f32.mrb[0].mxu0
      %v2817 = vadd.f32 %v1762, %v2816
      %v2818 = vpop.f32.mrb[0].mxu0
      %v2819 = vadd.f32 %v1762, %v2818
      %2820 = vmatprep.mubr.bf16.mxu0 0
      %2821 = vmatmul.mubr.bf16.gmra.mrb[0].mxu0 %v2318
      %v2822 = vpop.f32.mrb[0].mxu0
      %v2823 = vadd.f32 %v1767, %v2822
      %v2824 = vpop.f32.mrb[0].mxu0
      %v2825 = vadd.f32 %v1767, %v2824
      %v2826 = vpop.f32.mrb[0].mxu0
      %v2827 = vadd.f32 %v1772, %v2826
      %v2828 = vpop.f32.mrb[0].mxu0
      %v2829 = vadd.f32 %v1772, %v2828
      %2830 = vmatprep.mubr.bf16.mxu0 0
      %2831 = vmatmul.mubr.bf16.gmra.mrb[0].mxu0 %v2319
      %v2832 = vpop.f32.mrb[0].mxu0
      %v2833 = vadd.f32 %v1777, %v2832
      %v2834 = vpop.f32.mrb[0].mxu0
      %v2835 = vadd.f32 %v1777, %v2834
      %v2836 = vpop.f32.mrb[0].mxu0
      %v2837 = vadd.f32 %v1782, %v2836
      %v2838 = vpop.f32.mrb[0].mxu0
      %v2839 = vadd.f32 %v1782, %v2838
      %2840 = vmatprep.mubr.bf16.mxu0 0
      %2841 = vmatmul.mubr.bf16.gmra.mrb[0].mxu0 %v2320
      %v2842 = vpop.f32.mrb[0].mxu0
      %v2843 = vadd.f32 %v1787, %v2842
      %v2844 = vpop.f32.mrb[0].mxu0
      %v2845 = vadd.f32 %v1787, %v2844
      %v2846 = vpop.f32.mrb[0].mxu0
      %v2847 = vadd.f32 %v1792, %v2846
      %v2848 = vpop.f32.mrb[0].mxu0
      %v2849 = vadd.f32 %v1792, %v2848
      %2850 = vmatprep.mubr.bf16.mxu0 0
      %2851 = vmatmul.mubr.bf16.gmra.mrb[0].mxu0 %v2321
      %v2852 = vpop.f32.mrb[0].mxu0
      %v2853 = vadd.f32 %v1797, %v2852
      %v2854 = vpop.f32.mrb[0].mxu0
      %v2855 = vadd.f32 %v1797, %v2854
      %v2856 = vpop.f32.mrb[0].mxu0
      %v2857 = vadd.f32 %v1802, %v2856
      %v2858 = vpop.f32.mrb[0].mxu0
      %v2859 = vadd.f32 %v1802, %v2858
      %2860 = vmatprep.mubr.bf16.mxu0 0
      %2861 = vmatmul.mubr.bf16.gmra.mrb[0].mxu0 %v2322
      %v2862 = vpop.f32.mrb[0].mxu0
      %v2863 = vadd.f32 %v1807, %v2862
      %v2864 = vpop.f32.mrb[0].mxu0
      %v2865 = vadd.f32 %v1807, %v2864
      %v2866 = vpop.f32.mrb[0].mxu0
      %v2867 = vadd.f32 %v1812, %v2866
      %v2868 = vpop.f32.mrb[0].mxu0
      %v2869 = vadd.f32 %v1812, %v2868
      %2870 = vmatprep.mubr.bf16.mxu0 0
      %2871 = vmatmul.mubr.bf16.gmra.mrb[0].mxu0 %v2323
      %v2872 = vpop.f32.mrb[0].mxu0
      %v2873 = vadd.f32 %v1817, %v2872
      %v2874 = vpop.f32.mrb[0].mxu0
      %v2875 = vadd.f32 %v1817, %v2874
      %v2876 = vpop.f32.mrb[0].mxu0
      %v2877 = vadd.f32 %v1822, %v2876
      %v2878 = vpop.f32.mrb[0].mxu0
      %v2879 = vadd.f32 %v1822, %v2878
      %2880 = vmatprep.mubr.bf16.mxu0 0
      %2881 = vmatmul.mubr.bf16.gmra.mrb[0].mxu0 %v2324
      %v2882 = vpop.f32.mrb[0].mxu0
      %v2883 = vadd.f32 %v1827, %v2882
      %v2884 = vpop.f32.mrb[0].mxu0
      %v2885 = vadd.f32 %v1827, %v2884
      %v2886 = vpop.f32.mrb[0].mxu0
      %v2887 = vadd.f32 %v1832, %v2886
      %v2888 = vpop.f32.mrb[0].mxu0
      %v2889 = vadd.f32 %v1832, %v2888
      %2890 = vmatprep.mubr.bf16.mxu0 0
      %2891 = vmatmul.mubr.bf16.gmra.mrb[0].mxu0 %v2325
      %v2892 = vpop.f32.mrb[0].mxu0
      %v2893 = vadd.f32 %v1837, %v2892
      %v2894 = vpop.f32.mrb[0].mxu0
      %v2895 = vadd.f32 %v1837, %v2894
      %v2896 = vpop.f32.mrb[0].mxu0
      %v2897 = vadd.f32 %v1842, %v2896
      %v2898 = vpop.f32.mrb[0].mxu0
      %v2899 = vadd.f32 %v1842, %v2898
      %2900 = vmatprep.mubr.bf16.mxu0 0
      %2901 = vmatmul.mubr.bf16.gmra.mrb[0].mxu0 %v2326
      %v2902 = vpop.f32.mrb[0].mxu0
      %v2903 = vadd.f32 %v1847, %v2902
      %v2904 = vpop.f32.mrb[0].mxu0
      %v2905 = vadd.f32 %v1847, %v2904
      %v2906 = vpop.f32.mrb[0].mxu0
      %v2907 = vadd.f32 %v1852, %v2906
      %v2908 = vpop.f32.mrb[0].mxu0
      %v2909 = vadd.f32 %v1852, %v2908
      %2910 = vmatprep.mubr.bf16.mxu0 0
      %2911 = vmatmul.mubr.bf16.gmra.mrb[0].mxu0 %v2327
      %v2912 = vpop.f32.mrb[0].mxu0
      %v2913 = vadd.f32 %v1857, %v2912
      %v2914 = vpop.f32.mrb[0].mxu0
      %v2915 = vadd.f32 %v1857, %v2914
      %v2916 = vpop.f32.mrb[0].mxu0
      %v2917 = vadd.f32 %v1862, %v2916
      %v2918 = vpop.f32.mrb[0].mxu0
      %v2919 = vadd.f32 %v1862, %v2918
      %2920 = vmatprep.mubr.bf16.mxu0 0
      %2921 = vmatmul.mubr.bf16.gmra.mrb[0].mxu0 %v2328
      %v2922 = vpop.f32.mrb[0].mxu0
      %v2923 = vadd.f32 %v1867, %v2922
      %v2924 = vpop.f32.mrb[0].mxu0
      %v2925 = vadd.f32 %v1867, %v2924
      %v2926 = vpop.f32.mrb[0].mxu0
      %v2927 = vadd.f32 %v1872, %v2926
      %v2928 = vpop.f32.mrb[0].mxu0
      %v2929 = vadd.f32 %v1872, %v2928
      %2930 = vmatprep.mubr.bf16.mxu0 0
      %2931 = vmatmul.mubr.bf16.gmra.mrb[0].mxu0 %v2329
      %v2932 = vpop.f32.mrb[0].mxu0
      %v2933 = vadd.f32 %v1877, %v2932
      %v2934 = vpop.f32.mrb[0].mxu0
      %v2935 = vadd.f32 %v1877, %v2934
      %v2936 = vpop.f32.mrb[0].mxu0
      %v2937 = vadd.f32 %v1882, %v2936
      %v2938 = vpop.f32.mrb[0].mxu0
      %v2939 = vadd.f32 %v1882, %v2938
      %2940 = vmatprep.mubr.bf16.mxu0 0
      %2941 = vmatmul.mubr.bf16.gmra.mrb[0].mxu0 %v2330
      %v2942 = vpop.f32.mrb[0].mxu0
      %v2943 = vadd.f32 %v1887, %v2942
      %v2944 = vpop.f32.mrb[0].mxu0
      %v2945 = vadd.f32 %v1887, %v2944
      %v2946 = vpop.f32.mrb[0].mxu0
      %v2947 = vadd.f32 %v1892, %v2946
      %v2948 = vpop.f32.mrb[0].mxu0
      %v2949 = vadd.f32 %v1892, %v2948
      %2950 = vmatprep.mubr.bf16.mxu0 0
      %2951 = vmatmul.mubr.bf16.gmra.mrb[0].mxu0 %v2331
      %v2952 = vpop.f32.mrb[0].mxu0
      %v2953 = vadd.f32 %v1897, %v2952
      %v2954 = vpop.f32.mrb[0].mxu0
      %v2955 = vadd.f32 %v1897, %v2954
      %v2956 = vpop.f32.mrb[0].mxu0
      %v2957 = vadd.f32 %v1902, %v2956
      %v2958 = vpop.f32.mrb[0].mxu0
      %v2959 = vadd.f32 %v1902, %v2958
      %2960 = vmatprep.mubr.bf16.mxu0 0
      %2961 = vmatmul.mubr.bf16.gmra.mrb[0].mxu0 %v2332
      %v2962 = vpop.f32.mrb[0].mxu0
      %v2963 = vadd.f32 %v1907, %v2962
      %v2964 = vpop.f32.mrb[0].mxu0
      %v2965 = vadd.f32 %v1907, %v2964
      %v2966 = vpop.f32.mrb[0].mxu0
      %v2967 = vadd.f32 %v1912, %v2966
      %v2968 = vpop.f32.mrb[0].mxu0
      %v2969 = vadd.f32 %v1912, %v2968
      %2970 = vmatprep.mubr.bf16.mxu0 0
      %2971 = vmatmul.mubr.bf16.gmra.mrb[0].mxu0 %v2333
      %v2972 = vpop.f32.mrb[0].mxu0
      %v2973 = vadd.f32 %v1917, %v2972
      %v2974 = vpop.f32.mrb[0].mxu0
      %v2975 = vadd.f32 %v1917, %v2974
      %v2976 = vpop.f32.mrb[0].mxu0
      %v2977 = vadd.f32 %v1922, %v2976
      %v2978 = vpop.f32.mrb[0].mxu0
      %v2979 = vadd.f32 %v1922, %v2978
      %2980 = vmatprep.mubr.bf16.mxu0 0
      %2981 = vmatmul.mubr.bf16.gmra.mrb[0].mxu0 %v2334
      %v2982 = vpop.f32.mrb[0].mxu0
      %v2983 = vadd.f32 %v1927, %v2982
      %v2984 = vpop.f32.mrb[0].mxu0
      %v2985 = vadd.f32 %v1927, %v2984
      %v2986 = vpop.f32.mrb[0].mxu0
      %v2987 = vadd.f32 %v1932, %v2986
      %v2988 = vpop.f32.mrb[0].mxu0
      %v2989 = vadd.f32 %v1932, %v2988
      %2990 = vmatprep.mubr.bf16.mxu0 0
      %2991 = vmatmul.mubr.bf16.gmra.mrb[0].mxu0 %v2335
      %v2992 = vpop.f32.mrb[0].mxu0
      %v2993 = vadd.f32 %v1937, %v2992
      %v2994 = vpop.f32.mrb[0].mxu0
      %v2995 = vadd.f32 %v1937, %v2994
      %v2996 = vpop.f32.mrb[0].mxu0
      %v2997 = vadd.f32 %v1942, %v2996
      %v2998 = vpop.f32.mrb[0].mxu0
      %v2999 = vadd.f32 %v1942, %v2998
      %3000 = vmatprep.mubr.bf16.mxu0 0
      %3001 = vmatmul.mubr.bf16.gmra.mrb[0].mxu0 %v2336
      %v3002 = vpop.f32.mrb[0].mxu0
      %v3003 = vadd.f32 %v1947, %v3002
      %v3004 = vpop.f32.mrb[0].mxu0
      %v3005 = vadd.f32 %v1947, %v3004
      %v3006 = vpop.f32.mrb[0].mxu0
      %v3007 = vadd.f32 %v1952, %v3006
      %v3008 = vpop.f32.mrb[0].mxu0
      %v3009 = vadd.f32 %v1952, %v3008
      %3010 = vmatprep.mubr.bf16.mxu0 0
      %3011 = vmatmul.mubr.bf16.gmra.mrb[0].mxu0 %v2337
      %v3012 = vpop.f32.mrb[0].mxu0
      %v3013 = vadd.f32 %v1957, %v3012
      %v3014 = vpop.f32.mrb[0].mxu0
      %v3015 = vadd.f32 %v1957, %v3014
      %v3016 = vpop.f32.mrb[0].mxu0
      %v3017 = vadd.f32 %v1962, %v3016
      %v3018 = vpop.f32.mrb[0].mxu0
      %v3019 = vadd.f32 %v1962, %v3018
      %3020 = vmatprep.mubr.bf16.mxu0 0
      %3021 = vmatmul.mubr.bf16.gmra.mrb[0].mxu0 %v2338
      %v3022 = vpop.f32.mrb[0].mxu0
      %v3023 = vadd.f32 %v1967, %v3022
      %v3024 = vpop.f32.mrb[0].mxu0
      %v3025 = vadd.f32 %v1967, %v3024
      %v3026 = vpop.f32.mrb[0].mxu0
      %v3027 = vadd.f32 %v1972, %v3026
      %v3028 = vpop.f32.mrb[0].mxu0
      %v3029 = vadd.f32 %v1972, %v3028
      %3030 = vmatprep.mubr.bf16.mxu0 0
      %3031 = vmatmul.mubr.bf16.gmra.mrb[0].mxu0 %v2339
      %v3032 = vpop.f32.mrb[0].mxu0
      %v3033 = vadd.f32 %v1977, %v3032
      %v3034 = vpop.f32.mrb[0].mxu0
      %v3035 = vadd.f32 %v1977, %v3034
      %v3036 = vpop.f32.mrb[0].mxu0
      %v3037 = vadd.f32 %v1982, %v3036
      %v3038 = vpop.f32.mrb[0].mxu0
      %v3039 = vadd.f32 %v1982, %v3038
      %3040 = vmatprep.mubr.bf16.mxu0 0
      %3041 = vmatmul.mubr.bf16.gmra.mrb[0].mxu0 %v2340
      %v3042 = vpop.f32.mrb[0].mxu0
      %v3043 = vadd.f32 %v1987, %v3042
      %v3044 = vpop.f32.mrb[0].mxu0
      %v3045 = vadd.f32 %v1987, %v3044
      %v3046 = vpop.f32.mrb[0].mxu0
      %v3047 = vadd.f32 %v1992, %v3046
      %v3048 = vpop.f32.mrb[0].mxu0
      %v3049 = vadd.f32 %v1992, %v3048
      %3050 = vmatprep.mubr.bf16.mxu0 0
      %3051 = vmatmul.mubr.bf16.gmra.mrb[0].mxu0 %v2341
      %v3052 = vpop.f32.mrb[0].mxu0
      %v3053 = vadd.f32 %v1997, %v3052
      %v3054 = vpop.f32.mrb[0].mxu0
      %v3055 = vadd.f32 %v1997, %v3054
      %v3056 = vpop.f32.mrb[0].mxu0
      %v3057 = vadd.f32 %v2002, %v3056
      %v3058 = vpop.f32.mrb[0].mxu0
      %v3059 = vadd.f32 %v2002, %v3058
      %3060 = vmatprep.mubr.bf16.mxu0 0
      %3061 = vmatmul.mubr.bf16.gmra.mrb[0].mxu0 %v2342
      %v3062 = vpop.f32.mrb[0].mxu0
      %v3063 = vadd.f32 %v2007, %v3062
      %v3064 = vpop.f32.mrb[0].mxu0
      %v3065 = vadd.f32 %v2007, %v3064
      %v3066 = vpop.f32.mrb[0].mxu0
      %v3067 = vadd.f32 %v2012, %v3066
      %v3068 = vpop.f32.mrb[0].mxu0
      %v3069 = vadd.f32 %v2012, %v3068
      %3070 = vmatprep.mubr.bf16.mxu0 0
      %3071 = vmatmul.mubr.bf16.gmra.mrb[0].mxu0 %v2343
      %v3072 = vpop.f32.mrb[0].mxu0
      %v3073 = vadd.f32 %v2017, %v3072
      %v3074 = vpop.f32.mrb[0].mxu0
      %v3075 = vadd.f32 %v2017, %v3074
      %v3076 = vpop.f32.mrb[0].mxu0
      %v3077 = vadd.f32 %v2022, %v3076
      %v3078 = vpop.f32.mrb[0].mxu0
      %v3079 = vadd.f32 %v2022, %v3078
      %3080 = vdwg.mxu0
      %v3081 = vld [vmem:[#allocation2] sm:$0xff]
      %v3082 = vld [vmem:[#allocation2 + $0x8] sm:$0xff]
      %v3083 = vld [vmem:[#allocation2 + $0x10] sm:$0xff]
      %v3084 = vld [vmem:[#allocation2 + $0x18] sm:$0xff]
      %v3085 = vpack.c.bf16 %v3082, %v3081
      %v3086 = vpack.c.bf16 %v3084, %v3083
      %v3087 = vld [vmem:[%s632] sm:$0xff]
      %v3088 = vld [vmem:[%s632 + $0x8] sm:$0xff]
      %v3089 = vld [vmem:[%s632 + $0x10] sm:$0xff]
      %v3090 = vld [vmem:[%s632 + $0x18] sm:$0xff]
      %v3091 = vld [vmem:[%s632 + $0x20] sm:$0xff]
      %v3092 = vld [vmem:[%s632 + $0x28] sm:$0xff]
      %v3099 = vunpack.c.l.b16 %v3087
      %v3100 = vunpack.c.h.b16 %v3087
      %v3101 = vunpack.c.l.b16 %v3088
      %v3102 = vunpack.c.h.b16 %v3088
      %v3103 = vunpack.c.l.b16 %v3089
      %v3104 = vunpack.c.h.b16 %v3089
      %v3105 = vunpack.c.l.b16 %v3090
      %v3106 = vunpack.c.h.b16 %v3090
      %v3107 = vunpack.c.l.b16 %v3091
      %v3108 = vunpack.c.h.b16 %v3091
      %v3109 = vunpack.c.l.b16 %v3092
      %v3110 = vunpack.c.h.b16 %v3092
      %v3111 = vpack.c.b16 %v3101, %v3099
      %v3112 = vpack.c.b16 %v3102, %v3100
      %v3113 = vpack.c.b16 %v3105, %v3103
      %v3114 = vpack.c.b16 %v3106, %v3104
      %v3115 = vpack.c.b16 %v3109, %v3107
      %v3116 = vpack.c.b16 %v3110, %v3108
      %vm3123 = vcmask 392192
      %v3125 = vsel %vm3123, %v3085, 0
      %v3128 = vsel %vm3123, %v3086, 0
      %3130 = vmatprep.subr.bf16.mxu0 %v3112
      %3131 = vmatpush1.bf16.msra.mxu0 %v3111
      %3132 = vmatprep.subr.bf16.mxu0 %v3114
      %3133 = vmatpush1.bf16.msra.mxu0 %v3113
      %3134 = vmatprep.subr.bf16.mxu0 %v3116
      %3135 = vmatpush1.bf16.msra.mxu0 %v3115
      %3136 = vmatprep.subr.bf16.mxu0 0
      %3137 = vmatpush1.bf16.msra.mxu0 0
      %3138 = vmatprep.subr.bf16.mxu0 0
      %3139 = vmatpush1.bf16.msra.mxu0 0
      %3140 = vmatprep.subr.bf16.mxu0 0
      %3141 = vmatpush1.bf16.msra.mxu0 0
      %3142 = vmatprep.subr.bf16.mxu0 0
      %3143 = vmatpush1.bf16.msra.mxu0 0
      %3144 = vmatprep.subr.bf16.mxu0 0
      %3145 = vmatpush1.bf16.msra.mxu0 0
      %3146 = vmatprep.subr.bf16.mxu0 0
      %3147 = vmatpush1.bf16.msra.mxu0 0
      %3148 = vmatprep.subr.bf16.mxu0 0
      %3149 = vmatpush1.bf16.msra.mxu0 0
      %3150 = vmatprep.subr.bf16.mxu0 0
      %3151 = vmatpush1.bf16.msra.mxu0 0
      %3152 = vmatprep.subr.bf16.mxu0 0
      %3153 = vmatpush1.bf16.msra.mxu0 0
      %3154 = vmatprep.subr.bf16.mxu0 0
      %3155 = vmatpush1.bf16.msra.mxu0 0
      %3156 = vmatprep.subr.bf16.mxu0 0
      %3157 = vmatpush1.bf16.msra.mxu0 0
      %3158 = vmatprep.subr.bf16.mxu0 0
      %3159 = vmatpush1.bf16.msra.mxu0 0
      %3160 = vmatprep.subr.bf16.mxu0 0
      %3161 = vmatpush1.bf16.msra.mxu0 0
      %3162 = vmatprep.mubr.bf16.mxu0 0
      %3163 = vmatmul.mubr.bf16.gmra.mrb[0].mxu0 %v3125
      %v3164 = vpop.f32.mrb[0].mxu0
      %v3165 = vadd.f32 0.0, %v3164
      %v3166 = vpop.f32.mrb[0].mxu0
      %v3167 = vadd.f32 0.0, %v3166
      %v3168 = vpop.f32.mrb[0].mxu0
      %v3169 = vadd.f32 0.0, %v3168
      %v3170 = vpop.f32.mrb[0].mxu0
      %v3171 = vadd.f32 0.0, %v3170
      %3172 = vmatprep.mubr.bf16.mxu0 0
      %3173 = vmatmul.mubr.bf16.gmra.mrb[0].mxu0 %v3128
      %v3174 = vpop.f32.mrb[0].mxu0
      %v3175 = vadd.f32 0.0, %v3174
      %v3176 = vpop.f32.mrb[0].mxu0
      %v3177 = vadd.f32 0.0, %v3176
      %v3178 = vpop.f32.mrb[0].mxu0
      %v3179 = vadd.f32 0.0, %v3178
      %v3180 = vpop.f32.mrb[0].mxu0
      %v3181 = vadd.f32 0.0, %v3180
      %3182 = vdwg.mxu0
      %v3183 = vlaneseq
      %v3184 = vshrl.u32 %v3183, 7
      %v3185 = vsub.s32 0, %v3184
      %v3186 = vrot.slane %v3165, %v3185
      %v3187 = vlaneseq
      %v3188 = vshrl.u32 %v3187, 7
      %v3189 = vsub.s32 0, %v3188
      %v3190 = vrot.slane %v3167, %v3189
      %v3191 = vmul.f32 %v3186, %v2443
      %v3192 = vmul.f32 %v3190, %v2445
      %v3193 = vmul.f32 %v3186, %v2447
      %v3194 = vmul.f32 %v3190, %v2449
      %v3195 = vmul.f32 %v3186, %v2453
      %v3196 = vmul.f32 %v3190, %v2455
      %v3197 = vmul.f32 %v3186, %v2457
      %v3198 = vmul.f32 %v3190, %v2459
      %v3199 = vlaneseq
      %v3200 = vshrl.u32 %v3199, 7
      %v3201 = vsub.s32 1, %v3200
      %v3202 = vrot.slane %v3165, %v3201
      %v3203 = vlaneseq
      %v3204 = vshrl.u32 %v3203, 7
      %v3205 = vsub.s32 1, %v3204
      %v3206 = vrot.slane %v3167, %v3205
      %v3207 = vmul.f32 %v3202, %v2463
      %v3208 = vmul.f32 %v3206, %v2465
      %v3209 = vmul.f32 %v3202, %v2467
      %v3210 = vmul.f32 %v3206, %v2469
      %v3211 = vmul.f32 %v3202, %v2473
      %v3212 = vmul.f32 %v3206, %v2475
      %v3213 = vmul.f32 %v3202, %v2477
      %v3214 = vmul.f32 %v3206, %v2479
      %v3215 = vlaneseq
      %v3216 = vshrl.u32 %v3215, 7
      %v3217 = vsub.s32 2, %v3216
      %v3218 = vrot.slane %v3165, %v3217
      %v3219 = vlaneseq
      %v3220 = vshrl.u32 %v3219, 7
      %v3221 = vsub.s32 2, %v3220
      %v3222 = vrot.slane %v3167, %v3221
      %v3223 = vmul.f32 %v3218, %v2483
      %v3224 = vmul.f32 %v3222, %v2485
      %v3225 = vmul.f32 %v3218, %v2487
      %v3226 = vmul.f32 %v3222, %v2489
      %v3227 = vmul.f32 %v3218, %v2493
      %v3228 = vmul.f32 %v3222, %v2495
      %v3229 = vmul.f32 %v3218, %v2497
      %v3230 = vmul.f32 %v3222, %v2499
      %v3231 = vlaneseq
      %v3232 = vshrl.u32 %v3231, 7
      %v3233 = vsub.s32 3, %v3232
      %v3234 = vrot.slane %v3165, %v3233
      %v3235 = vlaneseq
      %v3236 = vshrl.u32 %v3235, 7
      %v3237 = vsub.s32 3, %v3236
      %v3238 = vrot.slane %v3167, %v3237
      %v3239 = vmul.f32 %v3234, %v2503
      %v3240 = vmul.f32 %v3238, %v2505
      %v3241 = vmul.f32 %v3234, %v2507
      %v3242 = vmul.f32 %v3238, %v2509
      %v3243 = vmul.f32 %v3234, %v2513
      %v3244 = vmul.f32 %v3238, %v2515
      %v3245 = vmul.f32 %v3234, %v2517
      %v3246 = vmul.f32 %v3238, %v2519
      %v3247 = vlaneseq
      %v3248 = vshrl.u32 %v3247, 7
      %v3249 = vsub.s32 4, %v3248
      %v3250 = vrot.slane %v3165, %v3249
      %v3251 = vlaneseq
      %v3252 = vshrl.u32 %v3251, 7
      %v3253 = vsub.s32 4, %v3252
      %v3254 = vrot.slane %v3167, %v3253
      %v3255 = vmul.f32 %v3250, %v2523
      %v3256 = vmul.f32 %v3254, %v2525
      %v3257 = vmul.f32 %v3250, %v2527
      %v3258 = vmul.f32 %v3254, %v2529
      %v3259 = vmul.f32 %v3250, %v2533
      %v3260 = vmul.f32 %v3254, %v2535
      %v3261 = vmul.f32 %v3250, %v2537
      %v3262 = vmul.f32 %v3254, %v2539
      %v3263 = vadd.f32 %v3191, %v3255
      %v3264 = vadd.f32 %v3192, %v3256
      %v3265 = vadd.f32 %v3193, %v3257
      %v3266 = vadd.f32 %v3194, %v3258
      %v3267 = vadd.f32 %v3195, %v3259
      %v3268 = vadd.f32 %v3196, %v3260
      %v3269 = vadd.f32 %v3197, %v3261
      %v3270 = vadd.f32 %v3198, %v3262
      %v3271 = vlaneseq
      %v3272 = vshrl.u32 %v3271, 7
      %v3273 = vsub.s32 5, %v3272
      %v3274 = vrot.slane %v3165, %v3273
      %v3275 = vlaneseq
      %v3276 = vshrl.u32 %v3275, 7
      %v3277 = vsub.s32 5, %v3276
      %v3278 = vrot.slane %v3167, %v3277
      %v3279 = vmul.f32 %v3274, %v2543
      %v3280 = vmul.f32 %v3278, %v2545
      %v3281 = vmul.f32 %v3274, %v2547
      %v3282 = vmul.f32 %v3278, %v2549
      %v3283 = vmul.f32 %v3274, %v2553
      %v3284 = vmul.f32 %v3278, %v2555
      %v3285 = vmul.f32 %v3274, %v2557
      %v3286 = vmul.f32 %v3278, %v2559
      %v3287 = vadd.f32 %v3207, %v3279
      %v3288 = vadd.f32 %v3208, %v3280
      %v3289 = vadd.f32 %v3209, %v3281
      %v3290 = vadd.f32 %v3210, %v3282
      %v3291 = vadd.f32 %v3211, %v3283
      %v3292 = vadd.f32 %v3212, %v3284
      %v3293 = vadd.f32 %v3213, %v3285
      %v3294 = vadd.f32 %v3214, %v3286
      %v3295 = vlaneseq
      %v3296 = vshrl.u32 %v3295, 7
      %v3297 = vsub.s32 6, %v3296
      %v3298 = vrot.slane %v3165, %v3297
      %v3299 = vlaneseq
      %v3300 = vshrl.u32 %v3299, 7
      %v3301 = vsub.s32 6, %v3300
      %v3302 = vrot.slane %v3167, %v3301
      %v3303 = vmul.f32 %v3298, %v2563
      %v3304 = vmul.f32 %v3302, %v2565
      %v3305 = vmul.f32 %v3298, %v2567
      %v3306 = vmul.f32 %v3302, %v2569
      %v3307 = vmul.f32 %v3298, %v2573
      %v3308 = vmul.f32 %v3302, %v2575
      %v3309 = vmul.f32 %v3298, %v2577
      %v3310 = vmul.f32 %v3302, %v2579
      %v3311 = vadd.f32 %v3223, %v3303
      %v3312 = vadd.f32 %v3224, %v3304
      %v3313 = vadd.f32 %v3225, %v3305
      %v3314 = vadd.f32 %v3226, %v3306
      %v3315 = vadd.f32 %v3227, %v3307
      %v3316 = vadd.f32 %v3228, %v3308
      %v3317 = vadd.f32 %v3229, %v3309
      %v3318 = vadd.f32 %v3230, %v3310
      %v3319 = vlaneseq
      %v3320 = vshrl.u32 %v3319, 7
      %v3321 = vsub.s32 7, %v3320
      %v3322 = vrot.slane %v3165, %v3321
      %v3323 = vlaneseq
      %v3324 = vshrl.u32 %v3323, 7
      %v3325 = vsub.s32 7, %v3324
      %v3326 = vrot.slane %v3167, %v3325
      %v3327 = vmul.f32 %v3322, %v2583
      %v3328 = vmul.f32 %v3326, %v2585
      %v3329 = vmul.f32 %v3322, %v2587
      %v3330 = vmul.f32 %v3326, %v2589
      %v3331 = vmul.f32 %v3322, %v2593
      %v3332 = vmul.f32 %v3326, %v2595
      %v3333 = vmul.f32 %v3322, %v2597
      %v3334 = vmul.f32 %v3326, %v2599
      %v3335 = vadd.f32 %v3239, %v3327
      %v3336 = vadd.f32 %v3240, %v3328
      %v3337 = vadd.f32 %v3241, %v3329
      %v3338 = vadd.f32 %v3242, %v3330
      %v3339 = vadd.f32 %v3243, %v3331
      %v3340 = vadd.f32 %v3244, %v3332
      %v3341 = vadd.f32 %v3245, %v3333
      %v3342 = vadd.f32 %v3246, %v3334
      %v3343 = vlaneseq
      %v3344 = vshrl.u32 %v3343, 7
      %v3345 = vsub.s32 0, %v3344
      %v3346 = vrot.slane %v3169, %v3345
      %v3347 = vlaneseq
      %v3348 = vshrl.u32 %v3347, 7
      %v3349 = vsub.s32 0, %v3348
      %v3350 = vrot.slane %v3171, %v3349
      %v3351 = vmul.f32 %v3346, %v2603
      %v3352 = vmul.f32 %v3350, %v2605
      %v3353 = vmul.f32 %v3346, %v2607
      %v3354 = vmul.f32 %v3350, %v2609
      %v3355 = vmul.f32 %v3346, %v2613
      %v3356 = vmul.f32 %v3350, %v2615
      %v3357 = vmul.f32 %v3346, %v2617
      %v3358 = vmul.f32 %v3350, %v2619
      %v3359 = vadd.f32 %v3263, %v3351
      %v3360 = vadd.f32 %v3264, %v3352
      %v3361 = vadd.f32 %v3265, %v3353
      %v3362 = vadd.f32 %v3266, %v3354
      %v3363 = vadd.f32 %v3267, %v3355
      %v3364 = vadd.f32 %v3268, %v3356
      %v3365 = vadd.f32 %v3269, %v3357
      %v3366 = vadd.f32 %v3270, %v3358
      %v3367 = vlaneseq
      %v3368 = vshrl.u32 %v3367, 7
      %v3369 = vsub.s32 1, %v3368
      %v3370 = vrot.slane %v3169, %v3369
      %v3371 = vlaneseq
      %v3372 = vshrl.u32 %v3371, 7
      %v3373 = vsub.s32 1, %v3372
      %v3374 = vrot.slane %v3171, %v3373
      %v3375 = vmul.f32 %v3370, %v2623
      %v3376 = vmul.f32 %v3374, %v2625
      %v3377 = vmul.f32 %v3370, %v2627
      %v3378 = vmul.f32 %v3374, %v2629
      %v3379 = vmul.f32 %v3370, %v2633
      %v3380 = vmul.f32 %v3374, %v2635
      %v3381 = vmul.f32 %v3370, %v2637
      %v3382 = vmul.f32 %v3374, %v2639
      %v3383 = vadd.f32 %v3287, %v3375
      %v3384 = vadd.f32 %v3288, %v3376
      %v3385 = vadd.f32 %v3289, %v3377
      %v3386 = vadd.f32 %v3290, %v3378
      %v3387 = vadd.f32 %v3291, %v3379
      %v3388 = vadd.f32 %v3292, %v3380
      %v3389 = vadd.f32 %v3293, %v3381
      %v3390 = vadd.f32 %v3294, %v3382
      %v3391 = vlaneseq
      %v3392 = vshrl.u32 %v3391, 7
      %v3393 = vsub.s32 2, %v3392
      %v3394 = vrot.slane %v3169, %v3393
      %v3395 = vlaneseq
      %v3396 = vshrl.u32 %v3395, 7
      %v3397 = vsub.s32 2, %v3396
      %v3398 = vrot.slane %v3171, %v3397
      %v3399 = vmul.f32 %v3394, %v2643
      %v3400 = vmul.f32 %v3398, %v2645
      %v3401 = vmul.f32 %v3394, %v2647
      %v3402 = vmul.f32 %v3398, %v2649
      %v3403 = vmul.f32 %v3394, %v2653
      %v3404 = vmul.f32 %v3398, %v2655
      %v3405 = vmul.f32 %v3394, %v2657
      %v3406 = vmul.f32 %v3398, %v2659
      %v3407 = vadd.f32 %v3311, %v3399
      %v3408 = vadd.f32 %v3312, %v3400
      %v3409 = vadd.f32 %v3313, %v3401
      %v3410 = vadd.f32 %v3314, %v3402
      %v3411 = vadd.f32 %v3315, %v3403
      %v3412 = vadd.f32 %v3316, %v3404
      %v3413 = vadd.f32 %v3317, %v3405
      %v3414 = vadd.f32 %v3318, %v3406
      %v3415 = vlaneseq
      %v3416 = vshrl.u32 %v3415, 7
      %v3417 = vsub.s32 3, %v3416
      %v3418 = vrot.slane %v3169, %v3417
      %v3419 = vlaneseq
      %v3420 = vshrl.u32 %v3419, 7
      %v3421 = vsub.s32 3, %v3420
      %v3422 = vrot.slane %v3171, %v3421
      %v3423 = vmul.f32 %v3418, %v2663
      %v3424 = vmul.f32 %v3422, %v2665
      %v3425 = vmul.f32 %v3418, %v2667
      %v3426 = vmul.f32 %v3422, %v2669
      %v3427 = vmul.f32 %v3418, %v2673
      %v3428 = vmul.f32 %v3422, %v2675
      %v3429 = vmul.f32 %v3418, %v2677
      %v3430 = vmul.f32 %v3422, %v2679
      %v3431 = vadd.f32 %v3335, %v3423
      %v3432 = vadd.f32 %v3336, %v3424
      %v3433 = vadd.f32 %v3337, %v3425
      %v3434 = vadd.f32 %v3338, %v3426
      %v3435 = vadd.f32 %v3339, %v3427
      %v3436 = vadd.f32 %v3340, %v3428
      %v3437 = vadd.f32 %v3341, %v3429
      %v3438 = vadd.f32 %v3342, %v3430
      %v3439 = vlaneseq
      %v3440 = vshrl.u32 %v3439, 7
      %v3441 = vsub.s32 4, %v3440
      %v3442 = vrot.slane %v3169, %v3441
      %v3443 = vlaneseq
      %v3444 = vshrl.u32 %v3443, 7
      %v3445 = vsub.s32 4, %v3444
      %v3446 = vrot.slane %v3171, %v3445
      %v3447 = vmul.f32 %v3442, %v2683
      %v3448 = vmul.f32 %v3446, %v2685
      %v3449 = vmul.f32 %v3442, %v2687
      %v3450 = vmul.f32 %v3446, %v2689
      %v3451 = vmul.f32 %v3442, %v2693
      %v3452 = vmul.f32 %v3446, %v2695
      %v3453 = vmul.f32 %v3442, %v2697
      %v3454 = vmul.f32 %v3446, %v2699
      %v3455 = vadd.f32 %v3359, %v3447
      %v3456 = vadd.f32 %v3360, %v3448
      %v3457 = vadd.f32 %v3361, %v3449
      %v3458 = vadd.f32 %v3362, %v3450
      %v3459 = vadd.f32 %v3363, %v3451
      %v3460 = vadd.f32 %v3364, %v3452
      %v3461 = vadd.f32 %v3365, %v3453
      %v3462 = vadd.f32 %v3366, %v3454
      %v3463 = vlaneseq
      %v3464 = vshrl.u32 %v3463, 7
      %v3465 = vsub.s32 5, %v3464
      %v3466 = vrot.slane %v3169, %v3465
      %v3467 = vlaneseq
      %v3468 = vshrl.u32 %v3467, 7
      %v3469 = vsub.s32 5, %v3468
      %v3470 = vrot.slane %v3171, %v3469
      %v3471 = vmul.f32 %v3466, %v2703
      %v3472 = vmul.f32 %v3470, %v2705
      %v3473 = vmul.f32 %v3466, %v2707
      %v3474 = vmul.f32 %v3470, %v2709
      %v3475 = vmul.f32 %v3466, %v2713
      %v3476 = vmul.f32 %v3470, %v2715
      %v3477 = vmul.f32 %v3466, %v2717
      %v3478 = vmul.f32 %v3470, %v2719
      %v3479 = vadd.f32 %v3383, %v3471
      %v3480 = vadd.f32 %v3384, %v3472
      %v3481 = vadd.f32 %v3385, %v3473
      %v3482 = vadd.f32 %v3386, %v3474
      %v3483 = vadd.f32 %v3387, %v3475
      %v3484 = vadd.f32 %v3388, %v3476
      %v3485 = vadd.f32 %v3389, %v3477
      %v3486 = vadd.f32 %v3390, %v3478
      %v3487 = vlaneseq
      %v3488 = vshrl.u32 %v3487, 7
      %v3489 = vsub.s32 6, %v3488
      %v3490 = vrot.slane %v3169, %v3489
      %v3491 = vlaneseq
      %v3492 = vshrl.u32 %v3491, 7
      %v3493 = vsub.s32 6, %v3492
      %v3494 = vrot.slane %v3171, %v3493
      %v3495 = vmul.f32 %v3490, %v2723
      %v3496 = vmul.f32 %v3494, %v2725
      %v3497 = vmul.f32 %v3490, %v2727
      %v3498 = vmul.f32 %v3494, %v2729
      %v3499 = vmul.f32 %v3490, %v2733
      %v3500 = vmul.f32 %v3494, %v2735
      %v3501 = vmul.f32 %v3490, %v2737
      %v3502 = vmul.f32 %v3494, %v2739
      %v3503 = vadd.f32 %v3407, %v3495
      %v3504 = vadd.f32 %v3408, %v3496
      %v3505 = vadd.f32 %v3409, %v3497
      %v3506 = vadd.f32 %v3410, %v3498
      %v3507 = vadd.f32 %v3411, %v3499
      %v3508 = vadd.f32 %v3412, %v3500
      %v3509 = vadd.f32 %v3413, %v3501
      %v3510 = vadd.f32 %v3414, %v3502
      %v3511 = vlaneseq
      %v3512 = vshrl.u32 %v3511, 7
      %v3513 = vsub.s32 7, %v3512
      %v3514 = vrot.slane %v3169, %v3513
      %v3515 = vlaneseq
      %v3516 = vshrl.u32 %v3515, 7
      %v3517 = vsub.s32 7, %v3516
      %v3518 = vrot.slane %v3171, %v3517
      %v3519 = vmul.f32 %v3514, %v2743
      %v3520 = vmul.f32 %v3518, %v2745
      %v3521 = vmul.f32 %v3514, %v2747
      %v3522 = vmul.f32 %v3518, %v2749
      %v3523 = vmul.f32 %v3514, %v2753
      %v3524 = vmul.f32 %v3518, %v2755
      %v3525 = vmul.f32 %v3514, %v2757
      %v3526 = vmul.f32 %v3518, %v2759
      %v3527 = vadd.f32 %v3431, %v3519
      %v3528 = vadd.f32 %v3432, %v3520
      %v3529 = vadd.f32 %v3433, %v3521
      %v3530 = vadd.f32 %v3434, %v3522
      %v3531 = vadd.f32 %v3435, %v3523
      %v3532 = vadd.f32 %v3436, %v3524
      %v3533 = vadd.f32 %v3437, %v3525
      %v3534 = vadd.f32 %v3438, %v3526
      %v3535 = vlaneseq
      %v3536 = vshrl.u32 %v3535, 7
      %v3537 = vsub.s32 0, %v3536
      %v3538 = vrot.slane %v3175, %v3537
      %v3539 = vlaneseq
      %v3540 = vshrl.u32 %v3539, 7
      %v3541 = vsub.s32 0, %v3540
      %v3542 = vrot.slane %v3177, %v3541
      %v3543 = vmul.f32 %v3538, %v2763
      %v3544 = vmul.f32 %v3542, %v2765
      %v3545 = vmul.f32 %v3538, %v2767
      %v3546 = vmul.f32 %v3542, %v2769
      %v3547 = vmul.f32 %v3538, %v2773
      %v3548 = vmul.f32 %v3542, %v2775
      %v3549 = vmul.f32 %v3538, %v2777
      %v3550 = vmul.f32 %v3542, %v2779
      %v3551 = vadd.f32 %v3455, %v3543
      %v3552 = vadd.f32 %v3456, %v3544
      %v3553 = vadd.f32 %v3457, %v3545
      %v3554 = vadd.f32 %v3458, %v3546
      %v3555 = vadd.f32 %v3459, %v3547
      %v3556 = vadd.f32 %v3460, %v3548
      %v3557 = vadd.f32 %v3461, %v3549
      %v3558 = vadd.f32 %v3462, %v3550
      %v3559 = vlaneseq
      %v3560 = vshrl.u32 %v3559, 7
      %v3561 = vsub.s32 1, %v3560
      %v3562 = vrot.slane %v3175, %v3561
      %v3563 = vlaneseq
      %v3564 = vshrl.u32 %v3563, 7
      %v3565 = vsub.s32 1, %v3564
      %v3566 = vrot.slane %v3177, %v3565
      %v3567 = vmul.f32 %v3562, %v2783
      %v3568 = vmul.f32 %v3566, %v2785
      %v3569 = vmul.f32 %v3562, %v2787
      %v3570 = vmul.f32 %v3566, %v2789
      %v3571 = vmul.f32 %v3562, %v2793
      %v3572 = vmul.f32 %v3566, %v2795
      %v3573 = vmul.f32 %v3562, %v2797
      %v3574 = vmul.f32 %v3566, %v2799
      %v3575 = vadd.f32 %v3479, %v3567
      %v3576 = vadd.f32 %v3480, %v3568
      %v3577 = vadd.f32 %v3481, %v3569
      %v3578 = vadd.f32 %v3482, %v3570
      %v3579 = vadd.f32 %v3483, %v3571
      %v3580 = vadd.f32 %v3484, %v3572
      %v3581 = vadd.f32 %v3485, %v3573
      %v3582 = vadd.f32 %v3486, %v3574
      %v3583 = vlaneseq
      %v3584 = vshrl.u32 %v3583, 7
      %v3585 = vsub.s32 2, %v3584
      %v3586 = vrot.slane %v3175, %v3585
      %v3587 = vlaneseq
      %v3588 = vshrl.u32 %v3587, 7
      %v3589 = vsub.s32 2, %v3588
      %v3590 = vrot.slane %v3177, %v3589
      %v3591 = vmul.f32 %v3586, %v2803
      %v3592 = vmul.f32 %v3590, %v2805
      %v3593 = vmul.f32 %v3586, %v2807
      %v3594 = vmul.f32 %v3590, %v2809
      %v3595 = vmul.f32 %v3586, %v2813
      %v3596 = vmul.f32 %v3590, %v2815
      %v3597 = vmul.f32 %v3586, %v2817
      %v3598 = vmul.f32 %v3590, %v2819
      %v3599 = vadd.f32 %v3503, %v3591
      %v3600 = vadd.f32 %v3504, %v3592
      %v3601 = vadd.f32 %v3505, %v3593
      %v3602 = vadd.f32 %v3506, %v3594
      %v3603 = vadd.f32 %v3507, %v3595
      %v3604 = vadd.f32 %v3508, %v3596
      %v3605 = vadd.f32 %v3509, %v3597
      %v3606 = vadd.f32 %v3510, %v3598
      %v3607 = vlaneseq
      %v3608 = vshrl.u32 %v3607, 7
      %v3609 = vsub.s32 3, %v3608
      %v3610 = vrot.slane %v3175, %v3609
      %v3611 = vlaneseq
      %v3612 = vshrl.u32 %v3611, 7
      %v3613 = vsub.s32 3, %v3612
      %v3614 = vrot.slane %v3177, %v3613
      %v3615 = vmul.f32 %v3610, %v2823
      %v3616 = vmul.f32 %v3614, %v2825
      %v3617 = vmul.f32 %v3610, %v2827
      %v3618 = vmul.f32 %v3614, %v2829
      %v3619 = vmul.f32 %v3610, %v2833
      %v3620 = vmul.f32 %v3614, %v2835
      %v3621 = vmul.f32 %v3610, %v2837
      %v3622 = vmul.f32 %v3614, %v2839
      %v3623 = vadd.f32 %v3527, %v3615
      %v3624 = vadd.f32 %v3528, %v3616
      %v3625 = vadd.f32 %v3529, %v3617
      %v3626 = vadd.f32 %v3530, %v3618
      %v3627 = vadd.f32 %v3531, %v3619
      %v3628 = vadd.f32 %v3532, %v3620
      %v3629 = vadd.f32 %v3533, %v3621
      %v3630 = vadd.f32 %v3534, %v3622
      %v3631 = vlaneseq
      %v3632 = vshrl.u32 %v3631, 7
      %v3633 = vsub.s32 4, %v3632
      %v3634 = vrot.slane %v3175, %v3633
      %v3635 = vlaneseq
      %v3636 = vshrl.u32 %v3635, 7
      %v3637 = vsub.s32 4, %v3636
      %v3638 = vrot.slane %v3177, %v3637
      %v3639 = vmul.f32 %v3634, %v2843
      %v3640 = vmul.f32 %v3638, %v2845
      %v3641 = vmul.f32 %v3634, %v2847
      %v3642 = vmul.f32 %v3638, %v2849
      %v3643 = vmul.f32 %v3634, %v2853
      %v3644 = vmul.f32 %v3638, %v2855
      %v3645 = vmul.f32 %v3634, %v2857
      %v3646 = vmul.f32 %v3638, %v2859
      %v3647 = vadd.f32 %v3551, %v3639
      %v3648 = vadd.f32 %v3552, %v3640
      %v3649 = vadd.f32 %v3553, %v3641
      %v3650 = vadd.f32 %v3554, %v3642
      %v3651 = vadd.f32 %v3555, %v3643
      %v3652 = vadd.f32 %v3556, %v3644
      %v3653 = vadd.f32 %v3557, %v3645
      %v3654 = vadd.f32 %v3558, %v3646
      %v3655 = vlaneseq
      %v3656 = vshrl.u32 %v3655, 7
      %v3657 = vsub.s32 5, %v3656
      %v3658 = vrot.slane %v3175, %v3657
      %v3659 = vlaneseq
      %v3660 = vshrl.u32 %v3659, 7
      %v3661 = vsub.s32 5, %v3660
      %v3662 = vrot.slane %v3177, %v3661
      %v3663 = vmul.f32 %v3658, %v2863
      %v3664 = vmul.f32 %v3662, %v2865
      %v3665 = vmul.f32 %v3658, %v2867
      %v3666 = vmul.f32 %v3662, %v2869
      %v3667 = vmul.f32 %v3658, %v2873
      %v3668 = vmul.f32 %v3662, %v2875
      %v3669 = vmul.f32 %v3658, %v2877
      %v3670 = vmul.f32 %v3662, %v2879
      %v3671 = vadd.f32 %v3575, %v3663
      %v3672 = vadd.f32 %v3576, %v3664
      %v3673 = vadd.f32 %v3577, %v3665
      %v3674 = vadd.f32 %v3578, %v3666
      %v3675 = vadd.f32 %v3579, %v3667
      %v3676 = vadd.f32 %v3580, %v3668
      %v3677 = vadd.f32 %v3581, %v3669
      %v3678 = vadd.f32 %v3582, %v3670
      %v3679 = vlaneseq
      %v3680 = vshrl.u32 %v3679, 7
      %v3681 = vsub.s32 6, %v3680
      %v3682 = vrot.slane %v3175, %v3681
      %v3683 = vlaneseq
      %v3684 = vshrl.u32 %v3683, 7
      %v3685 = vsub.s32 6, %v3684
      %v3686 = vrot.slane %v3177, %v3685
      %v3687 = vmul.f32 %v3682, %v2883
      %v3688 = vmul.f32 %v3686, %v2885
      %v3689 = vmul.f32 %v3682, %v2887
      %v3690 = vmul.f32 %v3686, %v2889
      %v3691 = vmul.f32 %v3682, %v2893
      %v3692 = vmul.f32 %v3686, %v2895
      %v3693 = vmul.f32 %v3682, %v2897
      %v3694 = vmul.f32 %v3686, %v2899
      %v3695 = vadd.f32 %v3599, %v3687
      %v3696 = vadd.f32 %v3600, %v3688
      %v3697 = vadd.f32 %v3601, %v3689
      %v3698 = vadd.f32 %v3602, %v3690
      %v3699 = vadd.f32 %v3603, %v3691
      %v3700 = vadd.f32 %v3604, %v3692
      %v3701 = vadd.f32 %v3605, %v3693
      %v3702 = vadd.f32 %v3606, %v3694
      %v3703 = vlaneseq
      %v3704 = vshrl.u32 %v3703, 7
      %v3705 = vsub.s32 7, %v3704
      %v3706 = vrot.slane %v3175, %v3705
      %v3707 = vlaneseq
      %v3708 = vshrl.u32 %v3707, 7
      %v3709 = vsub.s32 7, %v3708
      %v3710 = vrot.slane %v3177, %v3709
      %v3711 = vmul.f32 %v3706, %v2903
      %v3712 = vmul.f32 %v3710, %v2905
      %v3713 = vmul.f32 %v3706, %v2907
      %v3714 = vmul.f32 %v3710, %v2909
      %v3715 = vmul.f32 %v3706, %v2913
      %v3716 = vmul.f32 %v3710, %v2915
      %v3717 = vmul.f32 %v3706, %v2917
      %v3718 = vmul.f32 %v3710, %v2919
      %v3719 = vadd.f32 %v3623, %v3711
      %v3720 = vadd.f32 %v3624, %v3712
      %v3721 = vadd.f32 %v3625, %v3713
      %v3722 = vadd.f32 %v3626, %v3714
      %v3723 = vadd.f32 %v3627, %v3715
      %v3724 = vadd.f32 %v3628, %v3716
      %v3725 = vadd.f32 %v3629, %v3717
      %v3726 = vadd.f32 %v3630, %v3718
      %v3727 = vlaneseq
      %v3728 = vshrl.u32 %v3727, 7
      %v3729 = vsub.s32 0, %v3728
      %v3730 = vrot.slane %v3179, %v3729
      %v3731 = vlaneseq
      %v3732 = vshrl.u32 %v3731, 7
      %v3733 = vsub.s32 0, %v3732
      %v3734 = vrot.slane %v3181, %v3733
      %v3735 = vmul.f32 %v3730, %v2923
      %v3736 = vmul.f32 %v3734, %v2925
      %v3737 = vmul.f32 %v3730, %v2927
      %v3738 = vmul.f32 %v3734, %v2929
      %v3739 = vmul.f32 %v3730, %v2933
      %v3740 = vmul.f32 %v3734, %v2935
      %v3741 = vmul.f32 %v3730, %v2937
      %v3742 = vmul.f32 %v3734, %v2939
      %v3743 = vadd.f32 %v3647, %v3735
      %v3744 = vadd.f32 %v3648, %v3736
      %v3745 = vadd.f32 %v3649, %v3737
      %v3746 = vadd.f32 %v3650, %v3738
      %v3747 = vadd.f32 %v3651, %v3739
      %v3748 = vadd.f32 %v3652, %v3740
      %v3749 = vadd.f32 %v3653, %v3741
      %v3750 = vadd.f32 %v3654, %v3742
      %v3751 = vlaneseq
      %v3752 = vshrl.u32 %v3751, 7
      %v3753 = vsub.s32 1, %v3752
      %v3754 = vrot.slane %v3179, %v3753
      %v3755 = vlaneseq
      %v3756 = vshrl.u32 %v3755, 7
      %v3757 = vsub.s32 1, %v3756
      %v3758 = vrot.slane %v3181, %v3757
      %v3759 = vmul.f32 %v3754, %v2943
      %v3760 = vmul.f32 %v3758, %v2945
      %v3761 = vmul.f32 %v3754, %v2947
      %v3762 = vmul.f32 %v3758, %v2949
      %v3763 = vmul.f32 %v3754, %v2953
      %v3764 = vmul.f32 %v3758, %v2955
      %v3765 = vmul.f32 %v3754, %v2957
      %v3766 = vmul.f32 %v3758, %v2959
      %v3767 = vadd.f32 %v3671, %v3759
      %v3768 = vadd.f32 %v3672, %v3760
      %v3769 = vadd.f32 %v3673, %v3761
      %v3770 = vadd.f32 %v3674, %v3762
      %v3771 = vadd.f32 %v3675, %v3763
      %v3772 = vadd.f32 %v3676, %v3764
      %v3773 = vadd.f32 %v3677, %v3765
      %v3774 = vadd.f32 %v3678, %v3766
      %v3775 = vlaneseq
      %v3776 = vshrl.u32 %v3775, 7
      %v3777 = vsub.s32 2, %v3776
      %v3778 = vrot.slane %v3179, %v3777
      %v3779 = vlaneseq
      %v3780 = vshrl.u32 %v3779, 7
      %v3781 = vsub.s32 2, %v3780
      %v3782 = vrot.slane %v3181, %v3781
      %v3783 = vmul.f32 %v3778, %v2963
      %v3784 = vmul.f32 %v3782, %v2965
      %v3785 = vmul.f32 %v3778, %v2967
      %v3786 = vmul.f32 %v3782, %v2969
      %v3787 = vmul.f32 %v3778, %v2973
      %v3788 = vmul.f32 %v3782, %v2975
      %v3789 = vmul.f32 %v3778, %v2977
      %v3790 = vmul.f32 %v3782, %v2979
      %v3791 = vadd.f32 %v3695, %v3783
      %v3792 = vadd.f32 %v3696, %v3784
      %v3793 = vadd.f32 %v3697, %v3785
      %v3794 = vadd.f32 %v3698, %v3786
      %v3795 = vadd.f32 %v3699, %v3787
      %v3796 = vadd.f32 %v3700, %v3788
      %v3797 = vadd.f32 %v3701, %v3789
      %v3798 = vadd.f32 %v3702, %v3790
      %v3799 = vlaneseq
      %v3800 = vshrl.u32 %v3799, 7
      %v3801 = vsub.s32 3, %v3800
      %v3802 = vrot.slane %v3179, %v3801
      %v3803 = vlaneseq
      %v3804 = vshrl.u32 %v3803, 7
      %v3805 = vsub.s32 3, %v3804
      %v3806 = vrot.slane %v3181, %v3805
      %v3807 = vmul.f32 %v3802, %v2983
      %v3808 = vmul.f32 %v3806, %v2985
      %v3809 = vmul.f32 %v3802, %v2987
      %v3810 = vmul.f32 %v3806, %v2989
      %v3811 = vmul.f32 %v3802, %v2993
      %v3812 = vmul.f32 %v3806, %v2995
      %v3813 = vmul.f32 %v3802, %v2997
      %v3814 = vmul.f32 %v3806, %v2999
      %v3815 = vadd.f32 %v3719, %v3807
      %v3816 = vadd.f32 %v3720, %v3808
      %v3817 = vadd.f32 %v3721, %v3809
      %v3818 = vadd.f32 %v3722, %v3810
      %v3819 = vadd.f32 %v3723, %v3811
      %v3820 = vadd.f32 %v3724, %v3812
      %v3821 = vadd.f32 %v3725, %v3813
      %v3822 = vadd.f32 %v3726, %v3814
      %v3823 = vlaneseq
      %v3824 = vshrl.u32 %v3823, 7
      %v3825 = vsub.s32 4, %v3824
      %v3826 = vrot.slane %v3179, %v3825
      %v3827 = vlaneseq
      %v3828 = vshrl.u32 %v3827, 7
      %v3829 = vsub.s32 4, %v3828
      %v3830 = vrot.slane %v3181, %v3829
      %v3831 = vmul.f32 %v3826, %v3003
      %v3832 = vmul.f32 %v3830, %v3005
      %v3833 = vmul.f32 %v3826, %v3007
      %v3834 = vmul.f32 %v3830, %v3009
      %v3835 = vmul.f32 %v3826, %v3013
      %v3836 = vmul.f32 %v3830, %v3015
      %v3837 = vmul.f32 %v3826, %v3017
      %v3838 = vmul.f32 %v3830, %v3019
      %v3839 = vadd.f32 %v3743, %v3831
      %v3840 = vadd.f32 %v3744, %v3832
      %v3841 = vadd.f32 %v3745, %v3833
      %v3842 = vadd.f32 %v3746, %v3834
      %v3843 = vadd.f32 %v3747, %v3835
      %v3844 = vadd.f32 %v3748, %v3836
      %v3845 = vadd.f32 %v3749, %v3837
      %v3846 = vadd.f32 %v3750, %v3838
      %v3847 = vlaneseq
      %v3848 = vshrl.u32 %v3847, 7
      %v3849 = vsub.s32 5, %v3848
      %v3850 = vrot.slane %v3179, %v3849
      %v3851 = vlaneseq
      %v3852 = vshrl.u32 %v3851, 7
      %v3853 = vsub.s32 5, %v3852
      %v3854 = vrot.slane %v3181, %v3853
      %v3855 = vmul.f32 %v3850, %v3023
      %v3856 = vmul.f32 %v3854, %v3025
      %v3857 = vmul.f32 %v3850, %v3027
      %v3858 = vmul.f32 %v3854, %v3029
      %v3859 = vmul.f32 %v3850, %v3033
      %v3860 = vmul.f32 %v3854, %v3035
      %v3861 = vmul.f32 %v3850, %v3037
      %v3862 = vmul.f32 %v3854, %v3039
      %v3863 = vadd.f32 %v3767, %v3855
      %v3864 = vadd.f32 %v3768, %v3856
      %v3865 = vadd.f32 %v3769, %v3857
      %v3866 = vadd.f32 %v3770, %v3858
      %v3867 = vadd.f32 %v3771, %v3859
      %v3868 = vadd.f32 %v3772, %v3860
      %v3869 = vadd.f32 %v3773, %v3861
      %v3870 = vadd.f32 %v3774, %v3862
      %v3871 = vlaneseq
      %v3872 = vshrl.u32 %v3871, 7
      %v3873 = vsub.s32 6, %v3872
      %v3874 = vrot.slane %v3179, %v3873
      %v3875 = vlaneseq
      %v3876 = vshrl.u32 %v3875, 7
      %v3877 = vsub.s32 6, %v3876
      %v3878 = vrot.slane %v3181, %v3877
      %v3879 = vmul.f32 %v3874, %v3043
      %v3880 = vmul.f32 %v3878, %v3045
      %v3881 = vmul.f32 %v3874, %v3047
      %v3882 = vmul.f32 %v3878, %v3049
      %v3883 = vmul.f32 %v3874, %v3053
      %v3884 = vmul.f32 %v3878, %v3055
      %v3885 = vmul.f32 %v3874, %v3057
      %v3886 = vmul.f32 %v3878, %v3059
      %v3887 = vadd.f32 %v3791, %v3879
      %v3888 = vadd.f32 %v3792, %v3880
      %v3889 = vadd.f32 %v3793, %v3881
      %v3890 = vadd.f32 %v3794, %v3882
      %v3891 = vadd.f32 %v3795, %v3883
      %v3892 = vadd.f32 %v3796, %v3884
      %v3893 = vadd.f32 %v3797, %v3885
      %v3894 = vadd.f32 %v3798, %v3886
      %v3895 = vlaneseq
      %v3896 = vshrl.u32 %v3895, 7
      %v3897 = vsub.s32 7, %v3896
      %v3898 = vrot.slane %v3179, %v3897
      %v3899 = vlaneseq
      %v3900 = vshrl.u32 %v3899, 7
      %v3901 = vsub.s32 7, %v3900
      %v3902 = vrot.slane %v3181, %v3901
      %v3903 = vmul.f32 %v3898, %v3063
      %v3904 = vmul.f32 %v3902, %v3065
      %v3905 = vmul.f32 %v3898, %v3067
      %v3906 = vmul.f32 %v3902, %v3069
      %v3907 = vmul.f32 %v3898, %v3073
      %v3908 = vmul.f32 %v3902, %v3075
      %v3909 = vmul.f32 %v3898, %v3077
      %v3910 = vmul.f32 %v3902, %v3079
      %v3911 = vadd.f32 %v3815, %v3903
      %v3912 = vadd.f32 %v3816, %v3904
      %v3913 = vadd.f32 %v3817, %v3905
      %v3914 = vadd.f32 %v3818, %v3906
      %v3915 = vadd.f32 %v3819, %v3907
      %v3916 = vadd.f32 %v3820, %v3908
      %v3917 = vadd.f32 %v3821, %v3909
      %v3918 = vadd.f32 %v3822, %v3910
      %v3919 = vadd.f32 %v3839, %v3863
      %v3920 = vadd.f32 %v3840, %v3864
      %v3921 = vadd.f32 %v3841, %v3865
      %v3922 = vadd.f32 %v3842, %v3866
      %v3923 = vadd.f32 %v3843, %v3867
      %v3924 = vadd.f32 %v3844, %v3868
      %v3925 = vadd.f32 %v3845, %v3869
      %v3926 = vadd.f32 %v3846, %v3870
      %v3927 = vadd.f32 %v3887, %v3911
      %v3928 = vadd.f32 %v3888, %v3912
      %v3929 = vadd.f32 %v3889, %v3913
      %v3930 = vadd.f32 %v3890, %v3914
      %v3931 = vadd.f32 %v3891, %v3915
      %v3932 = vadd.f32 %v3892, %v3916
      %v3933 = vadd.f32 %v3893, %v3917
      %v3934 = vadd.f32 %v3894, %v3918
      %v3935 = vadd.f32 %v3919, %v3927
      %v3936 = vadd.f32 %v3920, %v3928
      %v3937 = vadd.f32 %v3921, %v3929
      %v3938 = vadd.f32 %v3922, %v3930
      %v3939 = vadd.f32 %v3923, %v3931
      %v3940 = vadd.f32 %v3924, %v3932
      %v3941 = vadd.f32 %v3925, %v3933
      %v3942 = vadd.f32 %v3926, %v3934
      %v3943 = vld [vmem:[#allocation4] sm:$0xff]
      %v3944 = vld [vmem:[#allocation4 + $0x8] sm:$0xff]
      %v3945 = vld [vmem:[#allocation4 + $0x10] sm:$0xff]
      %v3946 = vld [vmem:[#allocation4 + $0x18] sm:$0xff]
      %v3947 = vpack.c.bf16 %v3937, %v3935
      %v3948 = vpack.c.bf16 %v3938, %v3936
      %v3949 = vpack.c.bf16 %v3941, %v3939
      %v3950 = vpack.c.bf16 %v3942, %v3940
      %v3951 = vld [vmem:[%s638] sm:$0xff]
      %v3952 = vld [vmem:[%s638 + $0x8] sm:$0xff]
      %v3953 = vld [vmem:[%s638 + $0x10] sm:$0xff]
      %v3954 = vld [vmem:[%s638 + $0x18] sm:$0xff]
      %v3955 = vld [vmem:[%s638 + $0x20] sm:$0xff]
      %v3956 = vld [vmem:[%s638 + $0x28] sm:$0xff]
      %v3963 = vunpack.c.l.b16 %v3951
      %v3964 = vunpack.c.h.b16 %v3951
      %v3965 = vunpack.c.l.b16 %v3952
      %v3966 = vunpack.c.h.b16 %v3952
      %v3967 = vunpack.c.l.b16 %v3953
      %v3968 = vunpack.c.h.b16 %v3953
      %v3969 = vunpack.c.l.b16 %v3954
      %v3970 = vunpack.c.h.b16 %v3954
      %v3971 = vunpack.c.l.b16 %v3955
      %v3972 = vunpack.c.h.b16 %v3955
      %v3973 = vunpack.c.l.b16 %v3956
      %v3974 = vunpack.c.h.b16 %v3956
      %v3975 = vpack.c.b16 %v3965, %v3963
      %v3976 = vpack.c.b16 %v3966, %v3964
      %v3977 = vpack.c.b16 %v3969, %v3967
      %v3978 = vpack.c.b16 %v3970, %v3968
      %v3979 = vpack.c.b16 %v3973, %v3971
      %v3980 = vpack.c.b16 %v3974, %v3972
      %3987 = vmatprep.subr.bf16.mxu0 %v3976
      %3988 = vmatpush1.bf16.xpose.msra.mxu0 %v3975
      %3989 = vmatprep.subr.bf16.mxu0 %v3978
      %3990 = vmatpush1.bf16.xpose.msra.mxu0 %v3977
      %3991 = vmatprep.subr.bf16.mxu0 %v3980
      %3992 = vmatpush1.bf16.xpose.msra.mxu0 %v3979
      %3993 = vmatprep.subr.bf16.mxu0 0
      %3994 = vmatpush1.bf16.xpose.msra.mxu0 0
      %3995 = vmatprep.subr.bf16.mxu0 0
      %3996 = vmatpush1.bf16.xpose.msra.mxu0 0
      %3997 = vmatprep.subr.bf16.mxu0 0
      %3998 = vmatpush1.bf16.xpose.msra.mxu0 0
      %3999 = vmatprep.subr.bf16.mxu0 0
      %4000 = vmatpush1.bf16.xpose.msra.mxu0 0
      %4001 = vmatprep.subr.bf16.mxu0 0
      %4002 = vmatpush1.bf16.xpose.msra.mxu0 0
      %4003 = vmatprep.subr.bf16.mxu0 0
      %4004 = vmatpush1.bf16.xpose.msra.mxu0 0
      %4005 = vmatprep.subr.bf16.mxu0 0
      %4006 = vmatpush1.bf16.xpose.msra.mxu0 0
      %4007 = vmatprep.subr.bf16.mxu0 0
      %4008 = vmatpush1.bf16.xpose.msra.mxu0 0
      %4009 = vmatprep.subr.bf16.mxu0 0
      %4010 = vmatpush1.bf16.xpose.msra.mxu0 0
      %4011 = vmatprep.subr.bf16.mxu0 0
      %4012 = vmatpush1.bf16.xpose.msra.mxu0 0
      %4013 = vmatprep.subr.bf16.mxu0 0
      %4014 = vmatpush1.bf16.xpose.msra.mxu0 0
      %4015 = vmatprep.subr.bf16.mxu0 0
      %4016 = vmatpush1.bf16.xpose.msra.mxu0 0
      %4017 = vmatprep.subr.bf16.mxu0 0
      %4018 = vmatpush1.bf16.xpose.msra.mxu0 0
      %4019 = vmatprep.mubr.bf16.mxu0 %v3948
      %4020 = vmatmul.mubr.bf16.gmra.mrb[0].mxu0 %v3947
      %v4021 = vpop.f32.mrb[0].mxu0
      %v4022 = vadd.f32 0.0, %v4021
      %v4023 = vpop.f32.mrb[0].mxu0
      %v4024 = vpop.f32.mrb[0].mxu0
      %v4025 = vadd.f32 0.0, %v4024
      %v4026 = vpop.f32.mrb[0].mxu0
      %4027 = vmatprep.mubr.bf16.mxu0 %v3950
      %4028 = vmatmul.mubr.bf16.gmra.mrb[0].mxu0 %v3949
      %v4029 = vpop.f32.mrb[0].mxu0
      %v4030 = vadd.f32 0.0, %v4029
      %v4031 = vpop.f32.mrb[0].mxu0
      %v4032 = vpop.f32.mrb[0].mxu0
      %v4033 = vadd.f32 0.0, %v4032
      %v4034 = vpop.f32.mrb[0].mxu0
      %4035 = vdwg.mxu0
      %v4036 = vadd.f32 %v3943, %v4022
      %v4037 = vadd.f32 %v3944, %v4025
      %v4038 = vadd.f32 %v3945, %v4030
      %v4039 = vadd.f32 %v3946, %v4033
      %4040 = vst.msk [vmem:[#allocation4] sm:$0xff] %vm3123, %v4036
      %4041 = vst.msk [vmem:[#allocation4 + $0x8] sm:$0xff] %vm3123, %v4037
      %4042 = vst.msk [vmem:[#allocation4 + $0x10] sm:$0xff] %vm3123, %v4038
      %4043 = vst.msk [vmem:[#allocation4 + $0x18] sm:$0xff] %vm3123, %v4039
      // Predicated region
      $region105: #{gilmer_forward.2} parent=95 // pred_check
        %p4044 = pneg %p648
      $region106: #{gilmer_forward.2} parent=95 // pred_check_branch
        %4046 = sbr.rel (%p4044) target = $region108
      $region107: #{gilmer_forward.2} parent=95 // pred_region
        %v4047 = vld [vmem:[#allocation2] sm:$0xff]
        %v4048 = vld [vmem:[#allocation2 + $0x8] sm:$0xff]
        %v4049 = vld [vmem:[#allocation2 + $0x10] sm:$0xff]
        %v4050 = vld [vmem:[#allocation2 + $0x18] sm:$0xff]
        %v4051 = vld [vmem:[#allocation3] sm:$0xff]
        %v4052 = vld [vmem:[#allocation3 + $0x8] sm:$0xff]
        %v4053 = vld [vmem:[#allocation3 + $0x10] sm:$0xff]
        %v4054 = vld [vmem:[#allocation3 + $0x18] sm:$0xff]
        %v4055 = vld [vmem:[#allocation4] sm:$0xff]
        %v4056 = vld [vmem:[#allocation4 + $0x8] sm:$0xff]
        %v4057 = vld [vmem:[#allocation4 + $0x10] sm:$0xff]
        %v4058 = vld [vmem:[#allocation4 + $0x18] sm:$0xff]
        %v4059 = vld [vmem:[%s6] sm:$0x1]
        %v4061 = vlaneseq
        %v4062 = vshrl.u32 %v4061, 7
        %v4063 = vsub.s32 0, %v4062
        %v4064 = vrot.slane %v4059, %v4063
        %v4066 = vmul.f32 %v4055, %v4064
        %v4067 = vmul.f32 %v4056, %v4064
        %v4068 = vmul.f32 %v4057, %v4064
        %v4069 = vmul.f32 %v4058, %v4064
        %v4070 = vld [vmem:[%s11] sm:$0xf]
        %v4071 = vld [vmem:[%s11 + $0x4] sm:$0xf]
        %v4072 = vld [vmem:[%s11 + $0x8] sm:$0xf]
        %v4073 = vld [vmem:[%s11 + $0xc] sm:$0xf]
        %v4074 = vpack.c.bf16 %v4048, %v4047
        %v4075 = vpack.c.bf16 %v4050, %v4049
        %v4080 = vunpack.c.l.b16 %v4070
        %v4081 = vunpack.c.l.b16 %v4071
        %v4082 = vunpack.c.l.b16 %v4072
        %v4083 = vunpack.c.l.b16 %v4073
        %v4084 = vpack.c.b16 %v4081, %v4080
        %v4085 = vpack.c.b16 %v4083, %v4082
        %vm4086 = vcmask 261120
        %v4088 = vsel %vm4086, %v4084, 0
        %v4091 = vsel %vm4086, %v4085, 0
        %4093 = vmatprep.subr.bf16.mxu0 0
        %4094 = vmatpush1.bf16.msra.mxu0 %v4074
        %4095 = vmatprep.subr.bf16.mxu0 0
        %4096 = vmatpush1.bf16.msra.mxu0 %v4075
        %4097 = vmatprep.subr.bf16.mxu0 0
        %4098 = vmatpush1.bf16.msra.mxu0 0
        %4099 = vmatprep.subr.bf16.mxu0 0
        %4100 = vmatpush1.bf16.msra.mxu0 0
        %4101 = vmatprep.subr.bf16.mxu0 0
        %4102 = vmatpush1.bf16.msra.mxu0 0
        %4103 = vmatprep.subr.bf16.mxu0 0
        %4104 = vmatpush1.bf16.msra.mxu0 0
        %4105 = vmatprep.subr.bf16.mxu0 0
        %4106 = vmatpush1.bf16.msra.mxu0 0
        %4107 = vmatprep.subr.bf16.mxu0 0
        %4108 = vmatpush1.bf16.msra.mxu0 0
        %4109 = vmatprep.subr.bf16.mxu0 0
        %4110 = vmatpush1.bf16.msra.mxu0 0
        %4111 = vmatprep.subr.bf16.mxu0 0
        %4112 = vmatpush1.bf16.msra.mxu0 0
        %4113 = vmatprep.subr.bf16.mxu0 0
        %4114 = vmatpush1.bf16.msra.mxu0 0
        %4115 = vmatprep.subr.bf16.mxu0 0
        %4116 = vmatpush1.bf16.msra.mxu0 0
        %4117 = vmatprep.subr.bf16.mxu0 0
        %4118 = vmatpush1.bf16.msra.mxu0 0
        %4119 = vmatprep.subr.bf16.mxu0 0
        %4120 = vmatpush1.bf16.msra.mxu0 0
        %4121 = vmatprep.subr.bf16.mxu0 0
        %4122 = vmatpush1.bf16.msra.mxu0 0
        %4123 = vmatprep.subr.bf16.mxu0 0
        %4124 = vmatpush1.bf16.msra.mxu0 0
        %4125 = vmatprep.mubr.bf16.mxu0 0
        %4126 = vmatmul.mubr.bf16.gmra.mrb[0].mxu0 %v4088
        %v4127 = vpop.f32.mrb[0].mxu0
        %v4128 = vadd.f32 0.0, %v4127
        %v4129 = vpop.f32.mrb[0].mxu0
        %v4130 = vpop.f32.mrb[0].mxu0
        %v4131 = vadd.f32 0.0, %v4130
        %v4132 = vpop.f32.mrb[0].mxu0
        %4133 = vmatprep.mubr.bf16.mxu0 0
        %4134 = vmatmul.mubr.bf16.gmra.mrb[0].mxu0 %v4091
        %v4135 = vpop.f32.mrb[0].mxu0
        %v4136 = vadd.f32 0.0, %v4135
        %v4137 = vpop.f32.mrb[0].mxu0
        %v4138 = vpop.f32.mrb[0].mxu0
        %v4139 = vadd.f32 0.0, %v4138
        %v4140 = vpop.f32.mrb[0].mxu0
        %4141 = vdwg.mxu0
        %v4142 = vadd.f32 %v4066, %v4128
        %v4143 = vadd.f32 %v4067, %v4131
        %v4144 = vadd.f32 %v4068, %v4136
        %v4145 = vadd.f32 %v4069, %v4139
        %v4146 = vld [vmem:[%s12] sm:$0xff]
        %v4147 = vld [vmem:[%s12 + $0x8] sm:$0xff]
        %v4148 = vld [vmem:[%s12 + $0x10] sm:$0xff]
        %v4149 = vld [vmem:[%s12 + $0x18] sm:$0xff]
        %4151 = vset.pattern.permute.xlu0 0
        %4152 = vperm.xlu0 %4151, %v4146
        %v4153 = vpop.permute.xlu0 %4152
        %4156 = vset.pattern.permute.xlu0 0
        %4157 = vperm.xlu0 %4156, %v4147
        %v4158 = vpop.permute.xlu0 %4157
        %4161 = vset.pattern.permute.xlu0 0
        %4162 = vperm.xlu0 %4161, %v4148
        %v4163 = vpop.permute.xlu0 %4162
        %4166 = vset.pattern.permute.xlu0 0
        %4167 = vperm.xlu0 %4166, %v4149
        %v4168 = vpop.permute.xlu0 %4167
        %v4170 = vadd.f32 %v4142, %v4153
        %v4171 = vadd.f32 %v4143, %v4158
        %v4172 = vadd.f32 %v4144, %v4163
        %v4173 = vadd.f32 %v4145, %v4168
        %v4174 = vmax.f32 %v4170, 0.0
        %v4175 = vmax.f32 %v4171, 0.0
        %v4176 = vmax.f32 %v4172, 0.0
        %v4177 = vmax.f32 %v4173, 0.0
        %v4178 = vld [vmem:[%s13] sm:$0xf]
        %v4179 = vld [vmem:[%s13 + $0x4] sm:$0xf]
        %v4180 = vld [vmem:[%s13 + $0x8] sm:$0xf]
        %v4181 = vld [vmem:[%s13 + $0xc] sm:$0xf]
        %v4182 = vld [vmem:[%s13 + $0x10] sm:$0xf]
        %v4183 = vld [vmem:[%s13 + $0x14] sm:$0xf]
        %v4184 = vld [vmem:[%s13 + $0x18] sm:$0xf]
        %v4185 = vld [vmem:[%s13 + $0x1c] sm:$0xf]
        %v4186 = vld [vmem:[%s13 + $0x20] sm:$0xf]
        %v4187 = vld [vmem:[%s13 + $0x24] sm:$0xf]
        %v4188 = vld [vmem:[%s13 + $0x28] sm:$0xf]
        %v4189 = vld [vmem:[%s13 + $0x2c] sm:$0xf]
        %v4190 = vpack.c.bf16 %v4175, %v4174
        %v4191 = vpack.c.bf16 %v4177, %v4176
        %v4192 = vld [vmem:[%s15] sm:$0xff]
        %v4193 = vld [vmem:[%s15 + $0x8] sm:$0xff]
        %v4194 = vld [vmem:[%s15 + $0x10] sm:$0xff]
        %v4195 = vld [vmem:[%s15 + $0x18] sm:$0xff]
        %v4196 = vld [vmem:[%s15 + $0x20] sm:$0xff]
        %v4197 = vld [vmem:[%s15 + $0x28] sm:$0xff]
        %v4198 = vld [vmem:[%s15 + $0x30] sm:$0xff]
        %v4199 = vld [vmem:[%s15 + $0x38] sm:$0xff]
        %v4200 = vld [vmem:[%s15 + $0x40] sm:$0xff]
        %v4201 = vld [vmem:[%s15 + $0x48] sm:$0xff]
        %v4202 = vld [vmem:[%s15 + $0x50] sm:$0xff]
        %v4203 = vld [vmem:[%s15 + $0x58] sm:$0xff]
        %4205 = vset.pattern.permute.xlu0 0
        %4206 = vperm.xlu0 %4205, %v4192
        %v4207 = vpop.permute.xlu0 %4206
        %4210 = vset.pattern.permute.xlu0 0
        %4211 = vperm.xlu0 %4210, %v4193
        %v4212 = vpop.permute.xlu0 %4211
        %4215 = vset.pattern.permute.xlu0 0
        %4216 = vperm.xlu0 %4215, %v4194
        %v4217 = vpop.permute.xlu0 %4216
        %4220 = vset.pattern.permute.xlu0 0
        %4221 = vperm.xlu0 %4220, %v4195
        %v4222 = vpop.permute.xlu0 %4221
        %4225 = vset.pattern.permute.xlu0 0
        %4226 = vperm.xlu0 %4225, %v4196
        %v4227 = vpop.permute.xlu0 %4226
        %4230 = vset.pattern.permute.xlu0 0
        %4231 = vperm.xlu0 %4230, %v4197
        %v4232 = vpop.permute.xlu0 %4231
        %4235 = vset.pattern.permute.xlu0 0
        %4236 = vperm.xlu0 %4235, %v4198
        %v4237 = vpop.permute.xlu0 %4236
        %4240 = vset.pattern.permute.xlu0 0
        %4241 = vperm.xlu0 %4240, %v4199
        %v4242 = vpop.permute.xlu0 %4241
        %4245 = vset.pattern.permute.xlu0 0
        %4246 = vperm.xlu0 %4245, %v4200
        %v4247 = vpop.permute.xlu0 %4246
        %4250 = vset.pattern.permute.xlu0 0
        %4251 = vperm.xlu0 %4250, %v4201
        %v4252 = vpop.permute.xlu0 %4251
        %4255 = vset.pattern.permute.xlu0 0
        %4256 = vperm.xlu0 %4255, %v4202
        %v4257 = vpop.permute.xlu0 %4256
        %4260 = vset.pattern.permute.xlu0 0
        %4261 = vperm.xlu0 %4260, %v4203
        %v4262 = vpop.permute.xlu0 %4261
        %v4276 = vunpack.c.l.b16 %v4178
        %v4277 = vunpack.c.l.b16 %v4179
        %v4278 = vunpack.c.l.b16 %v4180
        %v4279 = vunpack.c.l.b16 %v4181
        %v4280 = vunpack.c.l.b16 %v4182
        %v4281 = vunpack.c.l.b16 %v4183
        %v4282 = vunpack.c.l.b16 %v4184
        %v4283 = vunpack.c.l.b16 %v4185
        %v4284 = vunpack.c.l.b16 %v4186
        %v4285 = vunpack.c.l.b16 %v4187
        %v4286 = vunpack.c.l.b16 %v4188
        %v4287 = vunpack.c.l.b16 %v4189
        %v4288 = vpack.c.b16 %v4277, %v4276
        %v4289 = vpack.c.b16 %v4279, %v4278
        %v4290 = vpack.c.b16 %v4281, %v4280
        %v4291 = vpack.c.b16 %v4283, %v4282
        %v4292 = vpack.c.b16 %v4285, %v4284
        %v4293 = vpack.c.b16 %v4287, %v4286
        %v4295 = vsel %vm4086, %v4288, 0
        %v4298 = vsel %vm4086, %v4289, 0
        %v4301 = vsel %vm4086, %v4290, 0
        %v4304 = vsel %vm4086, %v4291, 0
        %v4307 = vsel %vm4086, %v4292, 0
        %v4310 = vsel %vm4086, %v4293, 0
        %4312 = vmatprep.subr.bf16.mxu0 0
        %4313 = vmatpush1.bf16.msra.mxu0 %v4190
        %4314 = vmatprep.subr.bf16.mxu0 0
        %4315 = vmatpush1.bf16.msra.mxu0 %v4191
        %4316 = vmatprep.subr.bf16.mxu0 0
        %4317 = vmatpush1.bf16.msra.mxu0 0
        %4318 = vmatprep.subr.bf16.mxu0 0
        %4319 = vmatpush1.bf16.msra.mxu0 0
        %4320 = vmatprep.subr.bf16.mxu0 0
        %4321 = vmatpush1.bf16.msra.mxu0 0
        %4322 = vmatprep.subr.bf16.mxu0 0
        %4323 = vmatpush1.bf16.msra.mxu0 0
        %4324 = vmatprep.subr.bf16.mxu0 0
        %4325 = vmatpush1.bf16.msra.mxu0 0
        %4326 = vmatprep.subr.bf16.mxu0 0
        %4327 = vmatpush1.bf16.msra.mxu0 0
        %4328 = vmatprep.subr.bf16.mxu0 0
        %4329 = vmatpush1.bf16.msra.mxu0 0
        %4330 = vmatprep.subr.bf16.mxu0 0
        %4331 = vmatpush1.bf16.msra.mxu0 0
        %4332 = vmatprep.subr.bf16.mxu0 0
        %4333 = vmatpush1.bf16.msra.mxu0 0
        %4334 = vmatprep.subr.bf16.mxu0 0
        %4335 = vmatpush1.bf16.msra.mxu0 0
        %4336 = vmatprep.subr.bf16.mxu0 0
        %4337 = vmatpush1.bf16.msra.mxu0 0
        %4338 = vmatprep.subr.bf16.mxu0 0
        %4339 = vmatpush1.bf16.msra.mxu0 0
        %4340 = vmatprep.subr.bf16.mxu0 0
        %4341 = vmatpush1.bf16.msra.mxu0 0
        %4342 = vmatprep.subr.bf16.mxu0 0
        %4343 = vmatpush1.bf16.msra.mxu0 0
        %4344 = vmatprep.mubr.bf16.mxu0 0
        %4345 = vmatmul.mubr.bf16.gmra.mrb[0].mxu0 %v4295
        %v4346 = vpop.f32.mrb[0].mxu0
        %v4347 = vadd.f32 %v4207, %v4346
        %v4348 = vpop.f32.mrb[0].mxu0
        %v4349 = vpop.f32.mrb[0].mxu0
        %v4350 = vadd.f32 %v4212, %v4349
        %v4351 = vpop.f32.mrb[0].mxu0
        %4352 = vmatprep.mubr.bf16.mxu0 0
        %4353 = vmatmul.mubr.bf16.gmra.mrb[0].mxu0 %v4298
        %v4354 = vpop.f32.mrb[0].mxu0
        %v4355 = vadd.f32 %v4217, %v4354
        %v4356 = vpop.f32.mrb[0].mxu0
        %v4357 = vpop.f32.mrb[0].mxu0
        %v4358 = vadd.f32 %v4222, %v4357
        %v4359 = vpop.f32.mrb[0].mxu0
        %4360 = vmatprep.mubr.bf16.mxu0 0
        %4361 = vmatmul.mubr.bf16.gmra.mrb[0].mxu0 %v4301
        %v4362 = vpop.f32.mrb[0].mxu0
        %v4363 = vadd.f32 %v4227, %v4362
        %v4364 = vpop.f32.mrb[0].mxu0
        %v4365 = vpop.f32.mrb[0].mxu0
        %v4366 = vadd.f32 %v4232, %v4365
        %v4367 = vpop.f32.mrb[0].mxu0
        %4368 = vmatprep.mubr.bf16.mxu0 0
        %4369 = vmatmul.mubr.bf16.gmra.mrb[0].mxu0 %v4304
        %v4370 = vpop.f32.mrb[0].mxu0
        %v4371 = vadd.f32 %v4237, %v4370
        %v4372 = vpop.f32.mrb[0].mxu0
        %v4373 = vpop.f32.mrb[0].mxu0
        %v4374 = vadd.f32 %v4242, %v4373
        %v4375 = vpop.f32.mrb[0].mxu0
        %4376 = vmatprep.mubr.bf16.mxu0 0
        %4377 = vmatmul.mubr.bf16.gmra.mrb[0].mxu0 %v4307
        %v4378 = vpop.f32.mrb[0].mxu0
        %v4379 = vadd.f32 %v4247, %v4378
        %v4380 = vpop.f32.mrb[0].mxu0
        %v4381 = vpop.f32.mrb[0].mxu0
        %v4382 = vadd.f32 %v4252, %v4381
        %v4383 = vpop.f32.mrb[0].mxu0
        %4384 = vmatprep.mubr.bf16.mxu0 0
        %4385 = vmatmul.mubr.bf16.gmra.mrb[0].mxu0 %v4310
        %v4386 = vpop.f32.mrb[0].mxu0
        %v4387 = vadd.f32 %v4257, %v4386
        %v4388 = vpop.f32.mrb[0].mxu0
        %v4389 = vpop.f32.mrb[0].mxu0
        %v4390 = vadd.f32 %v4262, %v4389
        %v4391 = vpop.f32.mrb[0].mxu0
        %4392 = vdwg.mxu0
        %v4393 = vld [vmem:[%s14] sm:$0xf]
        %v4394 = vld [vmem:[%s14 + $0x4] sm:$0xf]
        %v4395 = vld [vmem:[%s14 + $0x8] sm:$0xf]
        %v4396 = vld [vmem:[%s14 + $0xc] sm:$0xf]
        %v4397 = vld [vmem:[%s14 + $0x10] sm:$0xf]
        %v4398 = vld [vmem:[%s14 + $0x14] sm:$0xf]
        %v4399 = vld [vmem:[%s14 + $0x18] sm:$0xf]
        %v4400 = vld [vmem:[%s14 + $0x1c] sm:$0xf]
        %v4401 = vld [vmem:[%s14 + $0x20] sm:$0xf]
        %v4402 = vld [vmem:[%s14 + $0x24] sm:$0xf]
        %v4403 = vld [vmem:[%s14 + $0x28] sm:$0xf]
        %v4404 = vld [vmem:[%s14 + $0x2c] sm:$0xf]
        %v4405 = vpack.c.bf16 %v4052, %v4051
        %v4406 = vpack.c.bf16 %v4054, %v4053
        %v4407 = vld [vmem:[%s16] sm:$0xff]
        %v4408 = vld [vmem:[%s16 + $0x8] sm:$0xff]
        %v4409 = vld [vmem:[%s16 + $0x10] sm:$0xff]
        %v4410 = vld [vmem:[%s16 + $0x18] sm:$0xff]
        %v4411 = vld [vmem:[%s16 + $0x20] sm:$0xff]
        %v4412 = vld [vmem:[%s16 + $0x28] sm:$0xff]
        %v4413 = vld [vmem:[%s16 + $0x30] sm:$0xff]
        %v4414 = vld [vmem:[%s16 + $0x38] sm:$0xff]
        %v4415 = vld [vmem:[%s16 + $0x40] sm:$0xff]
        %v4416 = vld [vmem:[%s16 + $0x48] sm:$0xff]
        %v4417 = vld [vmem:[%s16 + $0x50] sm:$0xff]
        %v4418 = vld [vmem:[%s16 + $0x58] sm:$0xff]
        %4420 = vset.pattern.permute.xlu0 0
        %4421 = vperm.xlu0 %4420, %v4407
        %v4422 = vpop.permute.xlu0 %4421
        %4425 = vset.pattern.permute.xlu0 0
        %4426 = vperm.xlu0 %4425, %v4408
        %v4427 = vpop.permute.xlu0 %4426
        %4430 = vset.pattern.permute.xlu0 0
        %4431 = vperm.xlu0 %4430, %v4409
        %v4432 = vpop.permute.xlu0 %4431
        %4435 = vset.pattern.permute.xlu0 0
        %4436 = vperm.xlu0 %4435, %v4410
        %v4437 = vpop.permute.xlu0 %4436
        %4440 = vset.pattern.permute.xlu0 0
        %4441 = vperm.xlu0 %4440, %v4411
        %v4442 = vpop.permute.xlu0 %4441
        %4445 = vset.pattern.permute.xlu0 0
        %4446 = vperm.xlu0 %4445, %v4412
        %v4447 = vpop.permute.xlu0 %4446
        %4450 = vset.pattern.permute.xlu0 0
        %4451 = vperm.xlu0 %4450, %v4413
        %v4452 = vpop.permute.xlu0 %4451
        %4455 = vset.pattern.permute.xlu0 0
        %4456 = vperm.xlu0 %4455, %v4414
        %v4457 = vpop.permute.xlu0 %4456
        %4460 = vset.pattern.permute.xlu0 0
        %4461 = vperm.xlu0 %4460, %v4415
        %v4462 = vpop.permute.xlu0 %4461
        %4465 = vset.pattern.permute.xlu0 0
        %4466 = vperm.xlu0 %4465, %v4416
        %v4467 = vpop.permute.xlu0 %4466
        %4470 = vset.pattern.permute.xlu0 0
        %4471 = vperm.xlu0 %4470, %v4417
        %v4472 = vpop.permute.xlu0 %4471
        %4475 = vset.pattern.permute.xlu0 0
        %4476 = vperm.xlu0 %4475, %v4418
        %v4477 = vpop.permute.xlu0 %4476
        %v4491 = vunpack.c.l.b16 %v4393
        %v4492 = vunpack.c.l.b16 %v4394
        %v4493 = vunpack.c.l.b16 %v4395
        %v4494 = vunpack.c.l.b16 %v4396
        %v4495 = vunpack.c.l.b16 %v4397
        %v4496 = vunpack.c.l.b16 %v4398
        %v4497 = vunpack.c.l.b16 %v4399
        %v4498 = vunpack.c.l.b16 %v4400
        %v4499 = vunpack.c.l.b16 %v4401
        %v4500 = vunpack.c.l.b16 %v4402
        %v4501 = vunpack.c.l.b16 %v4403
        %v4502 = vunpack.c.l.b16 %v4404
        %v4503 = vpack.c.b16 %v4492, %v4491
        %v4504 = vpack.c.b16 %v4494, %v4493
        %v4505 = vpack.c.b16 %v4496, %v4495
        %v4506 = vpack.c.b16 %v4498, %v4497
        %v4507 = vpack.c.b16 %v4500, %v4499
        %v4508 = vpack.c.b16 %v4502, %v4501
        %v4510 = vsel %vm4086, %v4503, 0
        %v4513 = vsel %vm4086, %v4504, 0
        %v4516 = vsel %vm4086, %v4505, 0
        %v4519 = vsel %vm4086, %v4506, 0
        %v4522 = vsel %vm4086, %v4507, 0
        %v4525 = vsel %vm4086, %v4508, 0
        %4527 = vmatprep.subr.bf16.mxu0 0
        %4528 = vmatpush1.bf16.msra.mxu0 %v4405
        %4529 = vmatprep.subr.bf16.mxu0 0
        %4530 = vmatpush1.bf16.msra.mxu0 %v4406
        %4531 = vmatprep.subr.bf16.mxu0 0
        %4532 = vmatpush1.bf16.msra.mxu0 0
        %4533 = vmatprep.subr.bf16.mxu0 0
        %4534 = vmatpush1.bf16.msra.mxu0 0
        %4535 = vmatprep.subr.bf16.mxu0 0
        %4536 = vmatpush1.bf16.msra.mxu0 0
        %4537 = vmatprep.subr.bf16.mxu0 0
        %4538 = vmatpush1.bf16.msra.mxu0 0
        %4539 = vmatprep.subr.bf16.mxu0 0
        %4540 = vmatpush1.bf16.msra.mxu0 0
        %4541 = vmatprep.subr.bf16.mxu0 0
        %4542 = vmatpush1.bf16.msra.mxu0 0
        %4543 = vmatprep.subr.bf16.mxu0 0
        %4544 = vmatpush1.bf16.msra.mxu0 0
        %4545 = vmatprep.subr.bf16.mxu0 0
        %4546 = vmatpush1.bf16.msra.mxu0 0
        %4547 = vmatprep.subr.bf16.mxu0 0
        %4548 = vmatpush1.bf16.msra.mxu0 0
        %4549 = vmatprep.subr.bf16.mxu0 0
        %4550 = vmatpush1.bf16.msra.mxu0 0
        %4551 = vmatprep.subr.bf16.mxu0 0
        %4552 = vmatpush1.bf16.msra.mxu0 0
        %4553 = vmatprep.subr.bf16.mxu0 0
        %4554 = vmatpush1.bf16.msra.mxu0 0
        %4555 = vmatprep.subr.bf16.mxu0 0
        %4556 = vmatpush1.bf16.msra.mxu0 0
        %4557 = vmatprep.subr.bf16.mxu0 0
        %4558 = vmatpush1.bf16.msra.mxu0 0
        %4559 = vmatprep.mubr.bf16.mxu0 0
        %4560 = vmatmul.mubr.bf16.gmra.mrb[0].mxu0 %v4510
        %v4561 = vpop.f32.mrb[0].mxu0
        %v4562 = vadd.f32 %v4422, %v4561
        %v4563 = vpop.f32.mrb[0].mxu0
        %v4564 = vpop.f32.mrb[0].mxu0
        %v4565 = vadd.f32 %v4427, %v4564
        %v4566 = vpop.f32.mrb[0].mxu0
        %4567 = vmatprep.mubr.bf16.mxu0 0
        %4568 = vmatmul.mubr.bf16.gmra.mrb[0].mxu0 %v4513
        %v4569 = vpop.f32.mrb[0].mxu0
        %v4570 = vadd.f32 %v4432, %v4569
        %v4571 = vpop.f32.mrb[0].mxu0
        %v4572 = vpop.f32.mrb[0].mxu0
        %v4573 = vadd.f32 %v4437, %v4572
        %v4574 = vpop.f32.mrb[0].mxu0
        %4575 = vmatprep.mubr.bf16.mxu0 0
        %4576 = vmatmul.mubr.bf16.gmra.mrb[0].mxu0 %v4516
        %v4577 = vpop.f32.mrb[0].mxu0
        %v4578 = vadd.f32 %v4442, %v4577
        %v4579 = vpop.f32.mrb[0].mxu0
        %v4580 = vpop.f32.mrb[0].mxu0
        %v4581 = vadd.f32 %v4447, %v4580
        %v4582 = vpop.f32.mrb[0].mxu0
        %4583 = vmatprep.mubr.bf16.mxu0 0
        %4584 = vmatmul.mubr.bf16.gmra.mrb[0].mxu0 %v4519
        %v4585 = vpop.f32.mrb[0].mxu0
        %v4586 = vadd.f32 %v4452, %v4585
        %v4587 = vpop.f32.mrb[0].mxu0
        %v4588 = vpop.f32.mrb[0].mxu0
        %v4589 = vadd.f32 %v4457, %v4588
        %v4590 = vpop.f32.mrb[0].mxu0
        %4591 = vmatprep.mubr.bf16.mxu0 0
        %4592 = vmatmul.mubr.bf16.gmra.mrb[0].mxu0 %v4522
        %v4593 = vpop.f32.mrb[0].mxu0
        %v4594 = vadd.f32 %v4462, %v4593
        %v4595 = vpop.f32.mrb[0].mxu0
        %v4596 = vpop.f32.mrb[0].mxu0
        %v4597 = vadd.f32 %v4467, %v4596
        %v4598 = vpop.f32.mrb[0].mxu0
        %4599 = vmatprep.mubr.bf16.mxu0 0
        %4600 = vmatmul.mubr.bf16.gmra.mrb[0].mxu0 %v4525
        %v4601 = vpop.f32.mrb[0].mxu0
        %v4602 = vadd.f32 %v4472, %v4601
        %v4603 = vpop.f32.mrb[0].mxu0
        %v4604 = vpop.f32.mrb[0].mxu0
        %v4605 = vadd.f32 %v4477, %v4604
        %v4606 = vpop.f32.mrb[0].mxu0
        %4607 = vdwg.mxu0
        %v4608 = vadd.f32 %v4347, %v4562
        %v4609 = vadd.f32 %v4350, %v4565
        %v4610 = vadd.f32 %v4355, %v4570
        %v4611 = vadd.f32 %v4358, %v4573
        %v4612 = vadd.f32 %v4363, %v4578
        %v4613 = vadd.f32 %v4366, %v4581
        %v4614 = vadd.f32 %v4371, %v4586
        %v4615 = vadd.f32 %v4374, %v4589
        %v4616 = vxor.u32 %v4608, 2147483648
        %v4617 = vxor.u32 %v4609, 2147483648
        %v4618 = vxor.u32 %v4610, 2147483648
        %v4619 = vxor.u32 %v4611, 2147483648
        %v4620 = vxor.u32 %v4612, 2147483648
        %v4621 = vxor.u32 %v4613, 2147483648
        %v4622 = vxor.u32 %v4614, 2147483648
        %v4623 = vxor.u32 %v4615, 2147483648
        %v4624 = vmul.f32 %v4616, 1.442695
        %v4625 = vpow.pop %v4624
        %v4626 = vmul.f32 %v4617, 1.442695
        %v4627 = vpow.pop %v4626
        %v4628 = vmul.f32 %v4618, 1.442695
        %v4629 = vpow.pop %v4628
        %v4630 = vmul.f32 %v4619, 1.442695
        %v4631 = vpow.pop %v4630
        %v4632 = vmul.f32 %v4620, 1.442695
        %v4633 = vpow.pop %v4632
        %v4634 = vmul.f32 %v4621, 1.442695
        %v4635 = vpow.pop %v4634
        %v4636 = vmul.f32 %v4622, 1.442695
        %v4637 = vpow.pop %v4636
        %v4638 = vmul.f32 %v4623, 1.442695
        %v4639 = vpow.pop %v4638
        %v4640 = vadd.f32 %v4625, 1.0
        %v4641 = vadd.f32 %v4627, 1.0
        %v4642 = vadd.f32 %v4629, 1.0
        %v4643 = vadd.f32 %v4631, 1.0
        %v4644 = vadd.f32 %v4633, 1.0
        %v4645 = vadd.f32 %v4635, 1.0
        %v4646 = vadd.f32 %v4637, 1.0
        %v4647 = vadd.f32 %v4639, 1.0
        %v4648 = vrcp.pop %v4640
        %v4649 = vmul.f32 1.0, %v4648
        %v4650 = vrcp.pop %v4641
        %v4651 = vmul.f32 1.0, %v4650
        %v4652 = vrcp.pop %v4642
        %v4653 = vmul.f32 1.0, %v4652
        %v4654 = vrcp.pop %v4643
        %v4655 = vmul.f32 1.0, %v4654
        %v4656 = vrcp.pop %v4644
        %v4657 = vmul.f32 1.0, %v4656
        %v4658 = vrcp.pop %v4645
        %v4659 = vmul.f32 1.0, %v4658
        %v4660 = vrcp.pop %v4646
        %v4661 = vmul.f32 1.0, %v4660
        %v4662 = vrcp.pop %v4647
        %v4663 = vmul.f32 1.0, %v4662
        %v4664 = vmul.f32 %v4649, %v4594
        %v4665 = vmul.f32 %v4651, %v4597
        %v4666 = vmul.f32 %v4653, %v4602
        %v4667 = vmul.f32 %v4655, %v4605
        %v4668 = vadd.f32 %v4379, %v4664
        %v4669 = vadd.f32 %v4382, %v4665
        %v4670 = vadd.f32 %v4387, %v4666
        %v4671 = vadd.f32 %v4390, %v4667
        %v4672 = vtanh.pop %v4668
        %v4673 = vtanh.pop %v4669
        %v4674 = vtanh.pop %v4670
        %v4675 = vtanh.pop %v4671
        %v4676 = vsub.f32 1.0, %v4657
        %v4677 = vsub.f32 1.0, %v4659
        %v4678 = vsub.f32 1.0, %v4661
        %v4679 = vsub.f32 1.0, %v4663
        %v4680 = vmul.f32 %v4676, %v4672
        %v4681 = vmul.f32 %v4677, %v4673
        %v4682 = vmul.f32 %v4678, %v4674
        %v4683 = vmul.f32 %v4679, %v4675
        %v4684 = vmul.f32 %v4657, %v4051
        %v4685 = vmul.f32 %v4659, %v4052
        %v4686 = vmul.f32 %v4661, %v4053
        %v4687 = vmul.f32 %v4663, %v4054
        %v4688 = vadd.f32 %v4680, %v4684
        %v4689 = vadd.f32 %v4681, %v4685
        %v4690 = vadd.f32 %v4682, %v4686
        %v4691 = vadd.f32 %v4683, %v4687
        %4692 = vst.msk [vmem:[#allocation3] sm:$0xff] %vm3123, %v4688
        %4693 = vst.msk [vmem:[#allocation3 + $0x8] sm:$0xff] %vm3123, %v4689
        %4694 = vst.msk [vmem:[#allocation3 + $0x10] sm:$0xff] %vm3123, %v4690
        %4695 = vst.msk [vmem:[#allocation3 + $0x18] sm:$0xff] %vm3123, %v4691
        %v4696 = vsel %vm3123, %v4688, 0.0
        %v4697 = vsel %vm3123, %v4689, 0.0
        %v4698 = vadd.f32 %v4696, %v4697
        %v4699 = vsel %vm3123, %v4690, 0.0
        %v4700 = vadd.f32 %v4698, %v4699
        %v4701 = vsel %vm3123, %v4691, 0.0
        %v4702 = vadd.f32 %v4700, %v4701
        %v4703 = vrot.slane %v4702, 4
        %v4704 = vadd.f32 %v4702, %v4703
        %v4705 = vrot.slane %v4704, 2
        %v4706 = vadd.f32 %v4704, %v4705
        %v4707 = vrot.slane %v4706, 1
        %v4708 = vadd.f32 %v4706, %v4707
        %v4709 = vrcp.pop 32.0
        %v4710 = vmul.f32 %v4708, %v4709
        %v4711 = vsub.f32 %v4688, %v4710
        %v4712 = vsub.f32 %v4689, %v4710
        %v4713 = vsub.f32 %v4690, %v4710
        %v4714 = vsub.f32 %v4691, %v4710
        %v4715 = vmul.f32 %v4711, %v4711
        %v4716 = vmul.f32 %v4712, %v4712
        %v4717 = vmul.f32 %v4713, %v4713
        %v4718 = vmul.f32 %v4714, %v4714
        %v4719 = vsel %vm3123, %v4715, 0.0
        %v4720 = vsel %vm3123, %v4716, 0.0
        %v4721 = vadd.f32 %v4719, %v4720
        %v4722 = vsel %vm3123, %v4717, 0.0
        %v4723 = vadd.f32 %v4721, %v4722
        %v4724 = vsel %vm3123, %v4718, 0.0
        %v4725 = vadd.f32 %v4723, %v4724
        %v4726 = vrot.slane %v4725, 4
        %v4727 = vadd.f32 %v4725, %v4726
        %v4728 = vrot.slane %v4727, 2
        %v4729 = vadd.f32 %v4727, %v4728
        %v4730 = vrot.slane %v4729, 1
        %v4731 = vadd.f32 %v4729, %v4730
        %v4732 = vmul.f32 %v4731, %v4709
        %v4733 = vadd.f32 %v4732, 1e-05
        %v4734 = vrsqrt.pop %v4733
        %v4735 = vmul.f32 %v4711, %v4734
        %v4736 = vmul.f32 %v4712, %v4734
        %v4737 = vmul.f32 %v4713, %v4734
        %v4738 = vmul.f32 %v4714, %v4734
        %v4739 = vld [vmem:[%s17] sm:$0xff]
        %v4740 = vld [vmem:[%s17 + $0x8] sm:$0xff]
        %v4741 = vld [vmem:[%s17 + $0x10] sm:$0xff]
        %v4742 = vld [vmem:[%s17 + $0x18] sm:$0xff]
        %4744 = vset.pattern.permute.xlu0 0
        %4745 = vperm.xlu0 %4744, %v4739
        %v4746 = vpop.permute.xlu0 %4745
        %4749 = vset.pattern.permute.xlu0 0
        %4750 = vperm.xlu0 %4749, %v4740
        %v4751 = vpop.permute.xlu0 %4750
        %4754 = vset.pattern.permute.xlu0 0
        %4755 = vperm.xlu0 %4754, %v4741
        %v4756 = vpop.permute.xlu0 %4755
        %4759 = vset.pattern.permute.xlu0 0
        %4760 = vperm.xlu0 %4759, %v4742
        %v4761 = vpop.permute.xlu0 %4760
        %v4763 = vmul.f32 %v4735, %v4746
        %v4764 = vmul.f32 %v4736, %v4751
        %v4765 = vmul.f32 %v4737, %v4756
        %v4766 = vmul.f32 %v4738, %v4761
        %v4767 = vld [vmem:[%s18] sm:$0xff]
        %v4768 = vld [vmem:[%s18 + $0x8] sm:$0xff]
        %v4769 = vld [vmem:[%s18 + $0x10] sm:$0xff]
        %v4770 = vld [vmem:[%s18 + $0x18] sm:$0xff]
        %4772 = vset.pattern.permute.xlu0 0
        %4773 = vperm.xlu0 %4772, %v4767
        %v4774 = vpop.permute.xlu0 %4773
        %4777 = vset.pattern.permute.xlu0 0
        %4778 = vperm.xlu0 %4777, %v4768
        %v4779 = vpop.permute.xlu0 %4778
        %4782 = vset.pattern.permute.xlu0 0
        %4783 = vperm.xlu0 %4782, %v4769
        %v4784 = vpop.permute.xlu0 %4783
        %4787 = vset.pattern.permute.xlu0 0
        %4788 = vperm.xlu0 %4787, %v4770
        %v4789 = vpop.permute.xlu0 %4788
        %v4791 = vadd.f32 %v4763, %v4774
        %v4792 = vadd.f32 %v4764, %v4779
        %v4793 = vadd.f32 %v4765, %v4784
        %v4794 = vadd.f32 %v4766, %v4789
        %4795 = vst.msk [vmem:[#allocation2] sm:$0xff] %vm3123, %v4791
        %4796 = vst.msk [vmem:[#allocation2 + $0x8] sm:$0xff] %vm3123, %v4792
        %4797 = vst.msk [vmem:[#allocation2 + $0x10] sm:$0xff] %vm3123, %v4793
        %4798 = vst.msk [vmem:[#allocation2 + $0x18] sm:$0xff] %vm3123, %v4794
      $region108: #{gilmer_forward.2} parent=95 // pred_fallthru
        _
      %p4799 = scmp.eq.s32.totalorder %s34, 2
      %p4800 = pnand %p4799, %p648
      %p4801 = pneg %p4800
      // Predicated region
      $region109: #{gilmer_forward.2} parent=95 // pred_check
        _
      $region110: #{gilmer_forward.2} parent=95 // pred_check_branch
        %4803 = sbr.rel (%p4800) target = $region112
      $region111: #{gilmer_forward.2} parent=95 // pred_region
        %v4804 = vld [vmem:[#allocation2] sm:$0xff]
        %v4805 = vld [vmem:[#allocation2 + $0x8] sm:$0xff]
        %v4806 = vld [vmem:[#allocation2 + $0x10] sm:$0xff]
        %v4807 = vld [vmem:[#allocation2 + $0x18] sm:$0xff]
        %4808 = vst.msk [vmem:[%s19] sm:$0xff] %vm3123, %v4804
        %4809 = vst.msk [vmem:[%s19 + $0x8] sm:$0xff] %vm3123, %v4805
        %4810 = vst.msk [vmem:[%s19 + $0x10] sm:$0xff] %vm3123, %v4806
        %4811 = vst.msk [vmem:[%s19 + $0x18] sm:$0xff] %vm3123, %v4807
      $region112: #{gilmer_forward.2} parent=95 // pred_fallthru
        _
      // Predicated region
      $region113: #{gilmer_forward.2} parent=95 // pred_check
        %p4812 = pneg %p469
      $region114: #{gilmer_forward.2} parent=95 // pred_check_branch
        %4814 = sbr.rel (%p4812) target = $region116
      $region115: #{gilmer_forward.2} parent=95 // pred_region
        _
      $region116: #{gilmer_forward.2} parent=95 // pred_fallthru
        _
      // Predicated region
      $region117: #{gilmer_forward.2} parent=95 // pred_check
        %p4815 = pneg %p469
      $region118: #{gilmer_forward.2} parent=95 // pred_check_branch
        %4817 = sbr.rel (%p4815) target = $region120
      $region119: #{gilmer_forward.2} parent=95 // pred_region
        _
      $region120: #{gilmer_forward.2} parent=95 // pred_fallthru
        _
    $region96: #{gilmer_forward.2} parent=5 // pred_fallthru
      _
    %p4818 = scmp.le.s32.totalorder 2, %s25
    // Predicated region
    $region121: #{gilmer_forward.2} parent=5 // pred_check
      %p4819 = pneg %p4818
    $region122: #{gilmer_forward.2} parent=5 // pred_check_branch
      %4821 = sbr.rel (%p4819) target = $region124
    $region123: #{gilmer_forward.2} parent=5 // pred_region
      %s4822 = ssub.s32 %s25, 2
    $region124: #{gilmer_forward.2} parent=5 // pred_fallthru
      _
  $region6: #{gilmer_forward.2} parent=0 // loop_footer
    %s29 = sadd.s32 1, %s25
  $region7: #{gilmer_forward.2} parent=0 // loop_footer_branch
    %24 = sbr.rel target = $region3
  $region8: #{gilmer_forward.2} parent=0 // loop_exit
    _

</llo_original>
